<compile_context>
chip_gen: v7x
topology: tpu7x:2x2x1
jax: 0.10.0
libtpu: 0.0.40
codegen_flags: <defaults>
</compile_context>

<pallas_src>
import numpy as np
import jax
import jax.numpy as jnp
from jax import lax
from jax.experimental import pallas as pl
from jax.experimental.pallas import tpu as pltpu

# ---- model dimensions (small, synthetic CLIP text tower) --------------------
B = 2            # batch (number of prompts)
L = 8            # context length
D = 32           # transformer width
H = 4            # attention heads
HD = D // H      # head dim
FF = 4 * D       # MLP hidden
N_LAYERS = 2     # transformer depth
E = 16           # text embedding dim (text_projection output)
E_PAD = 128      # lane-dense padded projection width (sliced back to E)
BHL = B * H * L  # rows of the head-major fused-attention layout
EPS = 1e-5       # LayerNorm eps (PyTorch default)
NEG = -1e30      # mask fill (kept in f32; not representable in bf16)


def _layernorm(x, w, b):
    mu = jnp.mean(x, axis=-1, keepdims=True)
    var = jnp.mean((x - mu) ** 2, axis=-1, keepdims=True)
    return (x - mu) * lax.rsqrt(var + EPS) * w + b


def text_encoder_kernel(eot_ref,                       # SMEM (B,) int32 (scalar prefetch)
                        x_ref, pos_ref, mask_ref,
                        ln1w_ref, ln1b_ref,
                        wq_ref, wk_ref, wv_ref, bq_ref, bk_ref, bv_ref,
                        wo_ref, bo_ref,
                        ln2w_ref, ln2b_ref,
                        w1_ref, b1_ref, w2_ref, b2_ref,
                        lnfw_ref, lnfb_ref, tproj_ref,
                        o_ref, xf_scratch):
    f32 = jnp.float32
    bf16 = jnp.bfloat16
    scale = 1.0 / float(HD) ** 0.5

    x = x_ref[...] + pos_ref[...]                      # (B*L, D) f32
    mask = mask_ref[...]                               # (BHL, BHL) f32, block-diag causal

    def mm(a_bf, w_bf, bias_f32):                      # bf16 x bf16 -> f32 accumulate
        return jnp.dot(a_bf, w_bf, preferred_element_type=f32) + bias_f32

    def to_heads(t):   # (B*L, D) -> (B*H*L, HD), rows ordered (b, h, l)
        return jnp.concatenate(
            [t[b * L:(b + 1) * L, h * HD:(h + 1) * HD]
             for b in range(B) for h in range(H)], axis=0)

    def from_heads(t):  # (B*H*L, HD) -> (B*L, D)
        return jnp.concatenate(
            [jnp.concatenate([t[(b * H + h) * L:(b * H + h + 1) * L, :]
                              for h in range(H)], axis=-1)
             for b in range(B)], axis=0)

    for l in range(N_LAYERS):
        # ---------------- attention block (pre-norm, causal) ----------------
        xn = _layernorm(x, ln1w_ref[pl.ds(l, 1)], ln1b_ref[pl.ds(l, 1)])
        xn_bf = xn.astype(bf16)
        q = mm(xn_bf, wq_ref[l], bq_ref[pl.ds(l, 1)]) * scale
        k = mm(xn_bf, wk_ref[l], bk_ref[pl.ds(l, 1)])
        v = mm(xn_bf, wv_ref[l], bv_ref[pl.ds(l, 1)])

        qh = to_heads(q).astype(bf16)                  # (BHL, HD)
        kh = to_heads(k).astype(bf16)
        vh = to_heads(v).astype(bf16)

        # all (batch, head) attention blocks as ONE matmul + ONE softmax + ONE PV
        s = jnp.einsum('qd,kd->qk', qh, kh,
                       preferred_element_type=f32) + mask          # (BHL, BHL) f32
        s = s - jnp.max(s, axis=-1, keepdims=True)
        p = jnp.exp(s)
        p = p * pl.reciprocal(jnp.sum(p, axis=-1, keepdims=True), approx=True)
        oh = jnp.dot(p.astype(bf16), vh, preferred_element_type=f32)  # (BHL, HD)

        attn = from_heads(oh)                                         # (B*L, D)
        x = x + mm(attn.astype(bf16), wo_ref[l], bo_ref[pl.ds(l, 1)])

        # ---------------- MLP block (pre-norm, QuickGELU) ----------------
        xn = _layernorm(x, ln2w_ref[pl.ds(l, 1)], ln2b_ref[pl.ds(l, 1)])
        h1 = mm(xn.astype(bf16), w1_ref[l], b1_ref[pl.ds(l, 1)])
        h1 = h1 * jax.nn.sigmoid(1.702 * h1)                          # QuickGELU (f32)
        x = x + mm(h1.astype(bf16), w2_ref[l], b2_ref[pl.ds(l, 1)])

    # ---------------- ln_final + EOT gather + projection ----------------
    xf_scratch[...] = _layernorm(x, lnfw_ref[...], lnfb_ref[...])     # (B*L, D)
    sel = jnp.concatenate(
        [xf_scratch[pl.ds(b * L + eot_ref[b], 1), :] for b in range(B)], axis=0)  # (B, D)
    o_ref[...] = jnp.dot(sel.astype(bf16), tproj_ref[...],
                         preferred_element_type=f32)                  # (B, E_PAD)


def _build_attention_mask():
    """(BHL, BHL) f32: 0 where (same batch*head block) & causal, else -1e30."""
    idx = np.arange(BHL)
    blk = idx // L
    pos = idx % L
    allowed = (blk[:, None] == blk[None, :]) & (pos[None, :] <= pos[:, None])
    return jnp.asarray(np.where(allowed, 0.0, NEG).astype(np.float32))


def text_encoder(prompts, tokenized_prompts, p):
    """prompts: (B, L, D) f32; tokenized_prompts: (B, L) int32 -> (B, E) f32."""
    bf16 = jnp.bfloat16
    f32 = jnp.float32

    x2 = prompts.reshape(B * L, D).astype(f32)                 # fold batch into sublanes
    pos2 = jnp.tile(p["pos"], (B, 1))                          # (B*L, D)
    mask = _build_attention_mask()                             # (BHL, BHL)
    eot = jnp.argmax(tokenized_prompts, axis=-1).astype(jnp.int32)   # (B,)

    # pre-split QKV and pre-transpose all matmul weights to (in, out); bf16 operands
    in_w = p["in_w"]                                           # (N, 3D, D)
    wq = jnp.transpose(in_w[:, 0 * D:1 * D, :], (0, 2, 1)).astype(bf16)   # (N, D, D)
    wk = jnp.transpose(in_w[:, 1 * D:2 * D, :], (0, 2, 1)).astype(bf16)
    wv = jnp.transpose(in_w[:, 2 * D:3 * D, :], (0, 2, 1)).astype(bf16)
    bq = p["in_b"][:, 0 * D:1 * D]
    bk = p["in_b"][:, 1 * D:2 * D]
    bv = p["in_b"][:, 2 * D:3 * D]
    wo = jnp.transpose(p["out_w"], (0, 2, 1)).astype(bf16)     # (N, D, D)
    w1 = jnp.transpose(p["fc1_w"], (0, 2, 1)).astype(bf16)     # (N, D, FF)
    w2 = jnp.transpose(p["fc2_w"], (0, 2, 1)).astype(bf16)     # (N, FF, D)
    tproj = jnp.zeros((D, E_PAD), bf16).at[:, :E].set(p["tproj"].astype(bf16))

    args = [x2, pos2, mask,
            p["ln1_w"], p["ln1_b"],
            wq, wk, wv, bq, bk, bv,
            wo, p["out_b"],
            p["ln2_w"], p["ln2_b"],
            w1, p["fc1_b"], w2, p["fc2_b"],
            p["lnf_w"], p["lnf_b"], tproj]

    def full_spec(a):
        nd = a.ndim
        return pl.BlockSpec(a.shape, lambda *_: (0,) * nd)

    # TODO(synk): for real CLIP sizes (D=512, L=77, 12 layers) stream per-layer
    # weights via a grid axis instead of keeping all weights VMEM-resident.
    out = pl.pallas_call(
        text_encoder_kernel,
        out_shape=jax.ShapeDtypeStruct((B, E_PAD), jnp.float32),
        grid_spec=pltpu.PrefetchScalarGridSpec(
            num_scalar_prefetch=1,
            grid=(1,),
            in_specs=[full_spec(a) for a in args],
            out_specs=pl.BlockSpec((B, E_PAD), lambda *_: (0, 0)),
            scratch_shapes=[pltpu.VMEM((B * L, D), jnp.float32)]),
        compiler_params=pltpu.CompilerParams(
            dimension_semantics=("arbitrary",)),
    )(eot, *args)
    return out[:, :E]


# ---------------- deterministic synthetic parameters -------------------------
def init_params(key):
    ks = jax.random.split(key, 16)
    s = 0.02
    f32 = jnp.float32
    return {
        "pos":   0.01 * jax.random.normal(ks[0], (L, D), f32),
        "ln1_w": 1.0 + 0.1 * jax.random.normal(ks[1], (N_LAYERS, D), f32),
        "ln1_b": 0.1 * jax.random.normal(ks[2], (N_LAYERS, D), f32),
        "in_w":  s * jax.random.normal(ks[3], (N_LAYERS, 3 * D, D), f32),
        "in_b":  s * jax.random.normal(ks[4], (N_LAYERS, 3 * D), f32),
        "out_w": s * jax.random.normal(ks[5], (N_LAYERS, D, D), f32),
        "out_b": s * jax.random.normal(ks[6], (N_LAYERS, D), f32),
        "ln2_w": 1.0 + 0.1 * jax.random.normal(ks[7], (N_LAYERS, D), f32),
        "ln2_b": 0.1 * jax.random.normal(ks[8], (N_LAYERS, D), f32),
        "fc1_w": s * jax.random.normal(ks[9], (N_LAYERS, FF, D), f32),
        "fc1_b": s * jax.random.normal(ks[10], (N_LAYERS, FF), f32),
        "fc2_w": s * jax.random.normal(ks[11], (N_LAYERS, D, FF), f32),
        "fc2_b": s * jax.random.normal(ks[12], (N_LAYERS, D), f32),
        "lnf_w": 1.0 + 0.1 * jax.random.normal(ks[13], (1, D), f32),
        "lnf_b": 0.1 * jax.random.normal(ks[14], (1, D), f32),
        "tproj": s * jax.random.normal(ks[15], (D, E), f32),
    }


# ---------------- pure-JAX reference (mirrors the PyTorch forward) -----------
def reference_forward(prompts, tokens, p):
    def ln(x, w, b):
        mu = x.mean(-1, keepdims=True)
        var = ((x - mu) ** 2).mean(-1, keepdims=True)
        return (x - mu) / jnp.sqrt(var + EPS) * w + b

    x = prompts + p["pos"][None]
    row = np.arange(L)[:, None]
    col = np.arange(L)[None, :]
    mask = jnp.where(col <= row, 0.0, NEG).astype(jnp.float32)

    for l in range(N_LAYERS):
        xn = ln(x, p["ln1_w"][l], p["ln1_b"][l])
        qkv = jnp.einsum('bld,od->blo', xn, p["in_w"][l]) + p["in_b"][l]
        q, k, v = jnp.split(qkv, 3, axis=-1)
        sh = lambda t: t.reshape(B, L, H, HD).transpose(0, 2, 1, 3)
        qh, kh, vh = sh(q) * (HD ** -0.5), sh(k), sh(v)
        s = jnp.einsum('bhqd,bhkd->bhqk', qh, kh) + mask
        a = jax.nn.softmax(s, axis=-1)
        o = jnp.einsum('bhqk,bhkd->bhqd', a, vh).transpose(0, 2, 1, 3).reshape(B, L, D)
        x = x + jnp.einsum('bld,od->blo', o, p["out_w"][l]) + p["out_b"][l]

        xn = ln(x, p["ln2_w"][l], p["ln2_b"][l])
        h1 = jnp.einsum('bld,od->blo', xn, p["fc1_w"][l]) + p["fc1_b"][l]
        h1 = h1 * jax.nn.sigmoid(1.702 * h1)
        x = x + jnp.einsum('bld,od->blo', h1, p["fc2_w"][l]) + p["fc2_b"][l]

    xf = ln(x, p["lnf_w"][0], p["lnf_b"][0])
    eot = jnp.argmax(tokens, axis=-1)
    return xf[jnp.arange(B), eot] @ p["tproj"]


if __name__ == "__main__":
    key = jax.random.PRNGKey(0)
    k_prompt, k_tok, k_param = jax.random.split(key, 3)

    prompts = jax.random.normal(k_prompt, (B, L, D), jnp.float32)             # learned prompt embeddings
    tokenized_prompts = jax.random.randint(k_tok, (B, L), 1, 100, jnp.int32)  # token ids; argmax = EOT pos
    params = init_params(k_param)

    out = text_encoder(prompts, tokenized_prompts, params)
    out = jax.block_until_ready(out)

    ref = reference_forward(prompts, tokenized_prompts, params)
    np.testing.assert_allclose(np.asarray(out), np.asarray(ref), rtol=5e-2, atol=1e-2)

    print("KERNEL_OK")
</pallas_src>

<mosaic_0001>
module attributes {stable_mosaic.version = 11 : i64} {
  func.func @text_encoder_kernel(%arg0: i32, %arg1: memref<2xi32, #tpu.memory_space<smem>>, %arg2: memref<16x32xf32, #tpu.memory_space<vmem>>, %arg3: memref<16x32xf32, #tpu.memory_space<vmem>>, %arg4: memref<64x64xf32, #tpu.memory_space<vmem>>, %arg5: memref<2x32xf32, #tpu.memory_space<vmem>>, %arg6: memref<2x32xf32, #tpu.memory_space<vmem>>, %arg7: memref<2x32x32xbf16, #tpu.memory_space<vmem>>, %arg8: memref<2x32x32xbf16, #tpu.memory_space<vmem>>, %arg9: memref<2x32x32xbf16, #tpu.memory_space<vmem>>, %arg10: memref<2x32xf32, #tpu.memory_space<vmem>>, %arg11: memref<2x32xf32, #tpu.memory_space<vmem>>, %arg12: memref<2x32xf32, #tpu.memory_space<vmem>>, %arg13: memref<2x32x32xbf16, #tpu.memory_space<vmem>>, %arg14: memref<2x32xf32, #tpu.memory_space<vmem>>, %arg15: memref<2x32xf32, #tpu.memory_space<vmem>>, %arg16: memref<2x32xf32, #tpu.memory_space<vmem>>, %arg17: memref<2x32x128xbf16, #tpu.memory_space<vmem>>, %arg18: memref<2x128xf32, #tpu.memory_space<vmem>>, %arg19: memref<2x128x32xbf16, #tpu.memory_space<vmem>>, %arg20: memref<2x32xf32, #tpu.memory_space<vmem>>, %arg21: memref<1x32xf32, #tpu.memory_space<vmem>>, %arg22: memref<1x32xf32, #tpu.memory_space<vmem>>, %arg23: memref<32x128xbf16, #tpu.memory_space<vmem>>, %arg24: memref<2x128xf32, #tpu.memory_space<vmem>>, %arg25: memref<16x32xf32, #tpu.memory_space<vmem>>) attributes {dimension_semantics = [#tpu.dimension_semantics<arbitrary>], iteration_bounds = array<i64: 1>, scalar_prefetch = 1 : i64, scratch_operands = 1 : i64, tpu.core_type = #tpu.core_type<tc>, window_params = [{pipeline_mode = #tpu.pipeline_mode<synchronous>, transform_indices = @transform_0, window_bounds = array<i64: 16, 32>}, {pipeline_mode = #tpu.pipeline_mode<synchronous>, transform_indices = @transform_1, window_bounds = array<i64: 16, 32>}, {pipeline_mode = #tpu.pipeline_mode<synchronous>, transform_indices = @transform_2, window_bounds = array<i64: 64, 64>}, {pipeline_mode = #tpu.pipeline_mode<synchronous>, transform_indices = @transform_3, window_bounds = array<i64: 2, 32>}, {pipeline_mode = #tpu.pipeline_mode<synchronous>, transform_indices = @transform_4, window_bounds = array<i64: 2, 32>}, {pipeline_mode = #tpu.pipeline_mode<synchronous>, transform_indices = @transform_5, window_bounds = array<i64: 2, 32, 32>}, {pipeline_mode = #tpu.pipeline_mode<synchronous>, transform_indices = @transform_6, window_bounds = array<i64: 2, 32, 32>}, {pipeline_mode = #tpu.pipeline_mode<synchronous>, transform_indices = @transform_7, window_bounds = array<i64: 2, 32, 32>}, {pipeline_mode = #tpu.pipeline_mode<synchronous>, transform_indices = @transform_8, window_bounds = array<i64: 2, 32>}, {pipeline_mode = #tpu.pipeline_mode<synchronous>, transform_indices = @transform_9, window_bounds = array<i64: 2, 32>}, {pipeline_mode = #tpu.pipeline_mode<synchronous>, transform_indices = @transform_10, window_bounds = array<i64: 2, 32>}, {pipeline_mode = #tpu.pipeline_mode<synchronous>, transform_indices = @transform_11, window_bounds = array<i64: 2, 32, 32>}, {pipeline_mode = #tpu.pipeline_mode<synchronous>, transform_indices = @transform_12, window_bounds = array<i64: 2, 32>}, {pipeline_mode = #tpu.pipeline_mode<synchronous>, transform_indices = @transform_13, window_bounds = array<i64: 2, 32>}, {pipeline_mode = #tpu.pipeline_mode<synchronous>, transform_indices = @transform_14, window_bounds = array<i64: 2, 32>}, {pipeline_mode = #tpu.pipeline_mode<synchronous>, transform_indices = @transform_15, window_bounds = array<i64: 2, 32, 128>}, {pipeline_mode = #tpu.pipeline_mode<synchronous>, transform_indices = @transform_16, window_bounds = array<i64: 2, 128>}, {pipeline_mode = #tpu.pipeline_mode<synchronous>, transform_indices = @transform_17, window_bounds = array<i64: 2, 128, 32>}, {pipeline_mode = #tpu.pipeline_mode<synchronous>, transform_indices = @transform_18, window_bounds = array<i64: 2, 32>}, {pipeline_mode = #tpu.pipeline_mode<synchronous>, transform_indices = @transform_19, window_bounds = array<i64: 1, 32>}, {pipeline_mode = #tpu.pipeline_mode<synchronous>, transform_indices = @transform_20, window_bounds = array<i64: 1, 32>}, {pipeline_mode = #tpu.pipeline_mode<synchronous>, transform_indices = @transform_21, window_bounds = array<i64: 32, 128>}, {pipeline_mode = #tpu.pipeline_mode<synchronous>, transform_indices = @transform_22, window_bounds = array<i64: 2, 128>}]} {
    %c0 = arith.constant 0 : index
    %c0_0 = arith.constant 0 : index
    %0 = vector.load %arg2[%c0, %c0_0] : memref<16x32xf32, #tpu.memory_space<vmem>>, vector<16x32xf32>
    %c0_1 = arith.constant 0 : index
    %c0_2 = arith.constant 0 : index
    %1 = vector.load %arg3[%c0_1, %c0_2] : memref<16x32xf32, #tpu.memory_space<vmem>>, vector<16x32xf32>
    %2 = arith.addf %0, %1 : vector<16x32xf32>
    %c0_3 = arith.constant 0 : index
    %c0_4 = arith.constant 0 : index
    %3 = vector.load %arg4[%c0_3, %c0_4] : memref<64x64xf32, #tpu.memory_space<vmem>>, vector<64x64xf32>
    %c0_5 = arith.constant 0 : index
    %c0_6 = arith.constant 0 : index
    %4 = vector.load %arg5[%c0_5, %c0_6] : memref<2x32xf32, #tpu.memory_space<vmem>>, vector<1x32xf32>
    %c0_7 = arith.constant 0 : index
    %c0_8 = arith.constant 0 : index
    %5 = vector.load %arg6[%c0_7, %c0_8] : memref<2x32xf32, #tpu.memory_space<vmem>>, vector<1x32xf32>
    %cst = arith.constant dense<0.000000e+00> : vector<16xf32>
    %6 = vector.multi_reduction <add>, %2, %cst [1] : vector<16x32xf32> to vector<16xf32>
    %7 = vector.shape_cast %6 : vector<16xf32> to vector<16x1xf32>
    %cst_9 = arith.constant 3.200000e+01 : f32
    %8 = vector.broadcast %cst_9 : f32 to vector<16x1xf32>
    %9 = arith.divf %7, %8 : vector<16x1xf32>
    %10 = vector.broadcast %9 : vector<16x1xf32> to vector<16x32xf32>
    %11 = arith.subf %2, %10 : vector<16x32xf32>
    %12 = arith.mulf %11, %11 : vector<16x32xf32>
    %cst_10 = arith.constant dense<0.000000e+00> : vector<16xf32>
    %13 = vector.multi_reduction <add>, %12, %cst_10 [1] : vector<16x32xf32> to vector<16xf32>
    %14 = vector.shape_cast %13 : vector<16xf32> to vector<16x1xf32>
    %cst_11 = arith.constant 3.200000e+01 : f32
    %15 = vector.broadcast %cst_11 : f32 to vector<16x1xf32>
    %16 = arith.divf %14, %15 : vector<16x1xf32>
    %17 = vector.broadcast %9 : vector<16x1xf32> to vector<16x32xf32>
    %18 = arith.subf %2, %17 : vector<16x32xf32>
    %cst_12 = arith.constant 9.99999974E-6 : f32
    %19 = vector.broadcast %cst_12 : f32 to vector<16x1xf32>
    %20 = arith.addf %16, %19 : vector<16x1xf32>
    %21 = math.rsqrt %20 : vector<16x1xf32>
    %22 = vector.broadcast %21 : vector<16x1xf32> to vector<16x32xf32>
    %23 = arith.mulf %18, %22 : vector<16x32xf32>
    %24 = vector.broadcast %4 : vector<1x32xf32> to vector<16x32xf32>
    %25 = arith.mulf %23, %24 : vector<16x32xf32>
    %26 = vector.broadcast %5 : vector<1x32xf32> to vector<16x32xf32>
    %27 = arith.addf %25, %26 : vector<16x32xf32>
    %28 = arith.truncf %27 : vector<16x32xf32> to vector<16x32xbf16>
    %c0_13 = arith.constant 0 : index
    %c0_14 = arith.constant 0 : index
    %c0_15 = arith.constant 0 : index
    %29 = vector.load %arg7[%c0_13, %c0_14, %c0_15] : memref<2x32x32xbf16, #tpu.memory_space<vmem>>, vector<1x32x32xbf16>
    %30 = vector.shape_cast %29 : vector<1x32x32xbf16> to vector<32x32xbf16>
    %c0_16 = arith.constant 0 : index
    %c0_17 = arith.constant 0 : index
    %31 = vector.load %arg10[%c0_16, %c0_17] : memref<2x32xf32, #tpu.memory_space<vmem>>, vector<1x32xf32>
    %cst_18 = arith.constant dense<0.000000e+00> : vector<16x32xf32>
    %32 = tpu.matmul %28, %30, %cst_18 {dimension_numbers = #tpu.dot_dimension_numbers<[1], [0], [0], [1], [0, 0, 1, 1], [], []>} : vector<16x32xbf16>, vector<32x32xbf16>, vector<16x32xf32> -> vector<16x32xf32>
    %33 = vector.broadcast %31 : vector<1x32xf32> to vector<16x32xf32>
    %34 = arith.addf %32, %33 : vector<16x32xf32>
    %cst_19 = arith.constant 0.353553385 : f32
    %35 = vector.broadcast %cst_19 : f32 to vector<16x32xf32>
    %36 = arith.mulf %34, %35 : vector<16x32xf32>
    %c0_20 = arith.constant 0 : index
    %c0_21 = arith.constant 0 : index
    %c0_22 = arith.constant 0 : index
    %37 = vector.load %arg8[%c0_20, %c0_21, %c0_22] : memref<2x32x32xbf16, #tpu.memory_space<vmem>>, vector<1x32x32xbf16>
    %38 = vector.shape_cast %37 : vector<1x32x32xbf16> to vector<32x32xbf16>
    %c0_23 = arith.constant 0 : index
    %c0_24 = arith.constant 0 : index
    %39 = vector.load %arg11[%c0_23, %c0_24] : memref<2x32xf32, #tpu.memory_space<vmem>>, vector<1x32xf32>
    %cst_25 = arith.constant dense<0.000000e+00> : vector<16x32xf32>
    %40 = tpu.matmul %28, %38, %cst_25 {dimension_numbers = #tpu.dot_dimension_numbers<[1], [0], [0], [1], [0, 0, 1, 1], [], []>} : vector<16x32xbf16>, vector<32x32xbf16>, vector<16x32xf32> -> vector<16x32xf32>
    %41 = vector.broadcast %39 : vector<1x32xf32> to vector<16x32xf32>
    %42 = arith.addf %40, %41 : vector<16x32xf32>
    %c0_26 = arith.constant 0 : index
    %c0_27 = arith.constant 0 : index
    %c0_28 = arith.constant 0 : index
    %43 = vector.load %arg9[%c0_26, %c0_27, %c0_28] : memref<2x32x32xbf16, #tpu.memory_space<vmem>>, vector<1x32x32xbf16>
    %44 = vector.shape_cast %43 : vector<1x32x32xbf16> to vector<32x32xbf16>
    %c0_29 = arith.constant 0 : index
    %c0_30 = arith.constant 0 : index
    %45 = vector.load %arg12[%c0_29, %c0_30] : memref<2x32xf32, #tpu.memory_space<vmem>>, vector<1x32xf32>
    %cst_31 = arith.constant dense<0.000000e+00> : vector<16x32xf32>
    %46 = tpu.matmul %28, %44, %cst_31 {dimension_numbers = #tpu.dot_dimension_numbers<[1], [0], [0], [1], [0, 0, 1, 1], [], []>} : vector<16x32xbf16>, vector<32x32xbf16>, vector<16x32xf32> -> vector<16x32xf32>
    %47 = vector.broadcast %45 : vector<1x32xf32> to vector<16x32xf32>
    %48 = arith.addf %46, %47 : vector<16x32xf32>
    %49 = vector.extract_strided_slice %36 {offsets = [0, 0], sizes = [8, 8], strides = [1, 1]} : vector<16x32xf32> to vector<8x8xf32>
    %50 = vector.extract_strided_slice %36 {offsets = [0, 8], sizes = [8, 8], strides = [1, 1]} : vector<16x32xf32> to vector<8x8xf32>
    %51 = vector.extract_strided_slice %36 {offsets = [0, 16], sizes = [8, 8], strides = [1, 1]} : vector<16x32xf32> to vector<8x8xf32>
    %52 = vector.extract_strided_slice %36 {offsets = [0, 24], sizes = [8, 8], strides = [1, 1]} : vector<16x32xf32> to vector<8x8xf32>
    %53 = vector.extract_strided_slice %36 {offsets = [8, 0], sizes = [8, 8], strides = [1, 1]} : vector<16x32xf32> to vector<8x8xf32>
    %54 = vector.extract_strided_slice %36 {offsets = [8, 8], sizes = [8, 8], strides = [1, 1]} : vector<16x32xf32> to vector<8x8xf32>
    %55 = vector.extract_strided_slice %36 {offsets = [8, 16], sizes = [8, 8], strides = [1, 1]} : vector<16x32xf32> to vector<8x8xf32>
    %56 = vector.extract_strided_slice %36 {offsets = [8, 24], sizes = [8, 8], strides = [1, 1]} : vector<16x32xf32> to vector<8x8xf32>
    %57 = tpu.concatenate %49, %50, %51, %52, %53, %54, %55, %56 in 0 : vector<8x8xf32>, vector<8x8xf32>, vector<8x8xf32>, vector<8x8xf32>, vector<8x8xf32>, vector<8x8xf32>, vector<8x8xf32>, vector<8x8xf32> -> vector<64x8xf32>
    %58 = arith.truncf %57 : vector<64x8xf32> to vector<64x8xbf16>
    %59 = vector.extract_strided_slice %42 {offsets = [0, 0], sizes = [8, 8], strides = [1, 1]} : vector<16x32xf32> to vector<8x8xf32>
    %60 = vector.extract_strided_slice %42 {offsets = [0, 8], sizes = [8, 8], strides = [1, 1]} : vector<16x32xf32> to vector<8x8xf32>
    %61 = vector.extract_strided_slice %42 {offsets = [0, 16], sizes = [8, 8], strides = [1, 1]} : vector<16x32xf32> to vector<8x8xf32>
    %62 = vector.extract_strided_slice %42 {offsets = [0, 24], sizes = [8, 8], strides = [1, 1]} : vector<16x32xf32> to vector<8x8xf32>
    %63 = vector.extract_strided_slice %42 {offsets = [8, 0], sizes = [8, 8], strides = [1, 1]} : vector<16x32xf32> to vector<8x8xf32>
    %64 = vector.extract_strided_slice %42 {offsets = [8, 8], sizes = [8, 8], strides = [1, 1]} : vector<16x32xf32> to vector<8x8xf32>
    %65 = vector.extract_strided_slice %42 {offsets = [8, 16], sizes = [8, 8], strides = [1, 1]} : vector<16x32xf32> to vector<8x8xf32>
    %66 = vector.extract_strided_slice %42 {offsets = [8, 24], sizes = [8, 8], strides = [1, 1]} : vector<16x32xf32> to vector<8x8xf32>
    %67 = tpu.concatenate %59, %60, %61, %62, %63, %64, %65, %66 in 0 : vector<8x8xf32>, vector<8x8xf32>, vector<8x8xf32>, vector<8x8xf32>, vector<8x8xf32>, vector<8x8xf32>, vector<8x8xf32>, vector<8x8xf32> -> vector<64x8xf32>
    %68 = arith.truncf %67 : vector<64x8xf32> to vector<64x8xbf16>
    %69 = vector.extract_strided_slice %48 {offsets = [0, 0], sizes = [8, 8], strides = [1, 1]} : vector<16x32xf32> to vector<8x8xf32>
    %70 = vector.extract_strided_slice %48 {offsets = [0, 8], sizes = [8, 8], strides = [1, 1]} : vector<16x32xf32> to vector<8x8xf32>
    %71 = vector.extract_strided_slice %48 {offsets = [0, 16], sizes = [8, 8], strides = [1, 1]} : vector<16x32xf32> to vector<8x8xf32>
    %72 = vector.extract_strided_slice %48 {offsets = [0, 24], sizes = [8, 8], strides = [1, 1]} : vector<16x32xf32> to vector<8x8xf32>
    %73 = vector.extract_strided_slice %48 {offsets = [8, 0], sizes = [8, 8], strides = [1, 1]} : vector<16x32xf32> to vector<8x8xf32>
    %74 = vector.extract_strided_slice %48 {offsets = [8, 8], sizes = [8, 8], strides = [1, 1]} : vector<16x32xf32> to vector<8x8xf32>
    %75 = vector.extract_strided_slice %48 {offsets = [8, 16], sizes = [8, 8], strides = [1, 1]} : vector<16x32xf32> to vector<8x8xf32>
    %76 = vector.extract_strided_slice %48 {offsets = [8, 24], sizes = [8, 8], strides = [1, 1]} : vector<16x32xf32> to vector<8x8xf32>
    %77 = tpu.concatenate %69, %70, %71, %72, %73, %74, %75, %76 in 0 : vector<8x8xf32>, vector<8x8xf32>, vector<8x8xf32>, vector<8x8xf32>, vector<8x8xf32>, vector<8x8xf32>, vector<8x8xf32>, vector<8x8xf32> -> vector<64x8xf32>
    %78 = arith.truncf %77 : vector<64x8xf32> to vector<64x8xbf16>
    "tpu.trace_start"() <{level = 10 : i32, message = "qd,kd->qk"}> : () -> ()
    %cst_32 = arith.constant dense<0.000000e+00> : vector<64x64xf32>
    %79 = tpu.matmul %58, %68, %cst_32 {dimension_numbers = #tpu.dot_dimension_numbers<[1], [1], [0], [0], [0, 0, 1, 0], [], []>} : vector<64x8xbf16>, vector<64x8xbf16>, vector<64x64xf32> -> vector<64x64xf32>
    "tpu.trace_stop"() : () -> ()
    %80 = arith.addf %79, %3 : vector<64x64xf32>
    %cst_33 = arith.constant dense<0xFF800000> : vector<64xf32>
    %81 = vector.multi_reduction <maximumf>, %80, %cst_33 [1] : vector<64x64xf32> to vector<64xf32>
    %82 = vector.shape_cast %81 : vector<64xf32> to vector<64x1xf32>
    %83 = vector.broadcast %82 : vector<64x1xf32> to vector<64x64xf32>
    %84 = arith.subf %80, %83 : vector<64x64xf32>
    %85 = math.exp %84 : vector<64x64xf32>
    %cst_34 = arith.constant dense<0.000000e+00> : vector<64xf32>
    %86 = vector.multi_reduction <add>, %85, %cst_34 [1] : vector<64x64xf32> to vector<64xf32>
    %87 = vector.shape_cast %86 : vector<64xf32> to vector<64x1xf32>
    %88 = tpu.reciprocal %87 {approx = true} : vector<64x1xf32> -> vector<64x1xf32>
    %89 = vector.broadcast %88 : vector<64x1xf32> to vector<64x64xf32>
    %90 = arith.mulf %85, %89 : vector<64x64xf32>
    %91 = arith.truncf %90 : vector<64x64xf32> to vector<64x64xbf16>
    %cst_35 = arith.constant dense<0.000000e+00> : vector<64x8xf32>
    %92 = tpu.matmul %91, %78, %cst_35 {dimension_numbers = #tpu.dot_dimension_numbers<[1], [0], [0], [1], [0, 0, 1, 1], [], []>} : vector<64x64xbf16>, vector<64x8xbf16>, vector<64x8xf32> -> vector<64x8xf32>
    %93 = vector.extract_strided_slice %92 {offsets = [0, 0], sizes = [8, 8], strides = [1, 1]} : vector<64x8xf32> to vector<8x8xf32>
    %94 = vector.extract_strided_slice %92 {offsets = [8, 0], sizes = [8, 8], strides = [1, 1]} : vector<64x8xf32> to vector<8x8xf32>
    %95 = vector.extract_strided_slice %92 {offsets = [16, 0], sizes = [8, 8], strides = [1, 1]} : vector<64x8xf32> to vector<8x8xf32>
    %96 = vector.extract_strided_slice %92 {offsets = [24, 0], sizes = [8, 8], strides = [1, 1]} : vector<64x8xf32> to vector<8x8xf32>
    %97 = tpu.concatenate %93, %94, %95, %96 in 1 : vector<8x8xf32>, vector<8x8xf32>, vector<8x8xf32>, vector<8x8xf32> -> vector<8x32xf32>
    %98 = vector.extract_strided_slice %92 {offsets = [32, 0], sizes = [8, 8], strides = [1, 1]} : vector<64x8xf32> to vector<8x8xf32>
    %99 = vector.extract_strided_slice %92 {offsets = [40, 0], sizes = [8, 8], strides = [1, 1]} : vector<64x8xf32> to vector<8x8xf32>
    %100 = vector.extract_strided_slice %92 {offsets = [48, 0], sizes = [8, 8], strides = [1, 1]} : vector<64x8xf32> to vector<8x8xf32>
    %101 = vector.extract_strided_slice %92 {offsets = [56, 0], sizes = [8, 8], strides = [1, 1]} : vector<64x8xf32> to vector<8x8xf32>
    %102 = tpu.concatenate %98, %99, %100, %101 in 1 : vector<8x8xf32>, vector<8x8xf32>, vector<8x8xf32>, vector<8x8xf32> -> vector<8x32xf32>
    %103 = tpu.concatenate %97, %102 in 0 : vector<8x32xf32>, vector<8x32xf32> -> vector<16x32xf32>
    %104 = arith.truncf %103 : vector<16x32xf32> to vector<16x32xbf16>
    %c0_36 = arith.constant 0 : index
    %c0_37 = arith.constant 0 : index
    %c0_38 = arith.constant 0 : index
    %105 = vector.load %arg13[%c0_36, %c0_37, %c0_38] : memref<2x32x32xbf16, #tpu.memory_space<vmem>>, vector<1x32x32xbf16>
    %106 = vector.shape_cast %105 : vector<1x32x32xbf16> to vector<32x32xbf16>
    %c0_39 = arith.constant 0 : index
    %c0_40 = arith.constant 0 : index
    %107 = vector.load %arg14[%c0_39, %c0_40] : memref<2x32xf32, #tpu.memory_space<vmem>>, vector<1x32xf32>
    %cst_41 = arith.constant dense<0.000000e+00> : vector<16x32xf32>
    %108 = tpu.matmul %104, %106, %cst_41 {dimension_numbers = #tpu.dot_dimension_numbers<[1], [0], [0], [1], [0, 0, 1, 1], [], []>} : vector<16x32xbf16>, vector<32x32xbf16>, vector<16x32xf32> -> vector<16x32xf32>
    %109 = vector.broadcast %107 : vector<1x32xf32> to vector<16x32xf32>
    %110 = arith.addf %108, %109 : vector<16x32xf32>
    %111 = arith.addf %2, %110 : vector<16x32xf32>
    %c0_42 = arith.constant 0 : index
    %c0_43 = arith.constant 0 : index
    %112 = vector.load %arg15[%c0_42, %c0_43] : memref<2x32xf32, #tpu.memory_space<vmem>>, vector<1x32xf32>
    %c0_44 = arith.constant 0 : index
    %c0_45 = arith.constant 0 : index
    %113 = vector.load %arg16[%c0_44, %c0_45] : memref<2x32xf32, #tpu.memory_space<vmem>>, vector<1x32xf32>
    %cst_46 = arith.constant dense<0.000000e+00> : vector<16xf32>
    %114 = vector.multi_reduction <add>, %111, %cst_46 [1] : vector<16x32xf32> to vector<16xf32>
    %115 = vector.shape_cast %114 : vector<16xf32> to vector<16x1xf32>
    %cst_47 = arith.constant 3.200000e+01 : f32
    %116 = vector.broadcast %cst_47 : f32 to vector<16x1xf32>
    %117 = arith.divf %115, %116 : vector<16x1xf32>
    %118 = vector.broadcast %117 : vector<16x1xf32> to vector<16x32xf32>
    %119 = arith.subf %111, %118 : vector<16x32xf32>
    %120 = arith.mulf %119, %119 : vector<16x32xf32>
    %cst_48 = arith.constant dense<0.000000e+00> : vector<16xf32>
    %121 = vector.multi_reduction <add>, %120, %cst_48 [1] : vector<16x32xf32> to vector<16xf32>
    %122 = vector.shape_cast %121 : vector<16xf32> to vector<16x1xf32>
    %cst_49 = arith.constant 3.200000e+01 : f32
    %123 = vector.broadcast %cst_49 : f32 to vector<16x1xf32>
    %124 = arith.divf %122, %123 : vector<16x1xf32>
    %125 = vector.broadcast %117 : vector<16x1xf32> to vector<16x32xf32>
    %126 = arith.subf %111, %125 : vector<16x32xf32>
    %cst_50 = arith.constant 9.99999974E-6 : f32
    %127 = vector.broadcast %cst_50 : f32 to vector<16x1xf32>
    %128 = arith.addf %124, %127 : vector<16x1xf32>
    %129 = math.rsqrt %128 : vector<16x1xf32>
    %130 = vector.broadcast %129 : vector<16x1xf32> to vector<16x32xf32>
    %131 = arith.mulf %126, %130 : vector<16x32xf32>
    %132 = vector.broadcast %112 : vector<1x32xf32> to vector<16x32xf32>
    %133 = arith.mulf %131, %132 : vector<16x32xf32>
    %134 = vector.broadcast %113 : vector<1x32xf32> to vector<16x32xf32>
    %135 = arith.addf %133, %134 : vector<16x32xf32>
    %136 = arith.truncf %135 : vector<16x32xf32> to vector<16x32xbf16>
    %c0_51 = arith.constant 0 : index
    %c0_52 = arith.constant 0 : index
    %c0_53 = arith.constant 0 : index
    %137 = vector.load %arg17[%c0_51, %c0_52, %c0_53] : memref<2x32x128xbf16, #tpu.memory_space<vmem>>, vector<1x32x128xbf16>
    %138 = vector.shape_cast %137 : vector<1x32x128xbf16> to vector<32x128xbf16>
    %c0_54 = arith.constant 0 : index
    %c0_55 = arith.constant 0 : index
    %139 = vector.load %arg18[%c0_54, %c0_55] : memref<2x128xf32, #tpu.memory_space<vmem>>, vector<1x128xf32>
    %cst_56 = arith.constant dense<0.000000e+00> : vector<16x128xf32>
    %140 = tpu.matmul %136, %138, %cst_56 {dimension_numbers = #tpu.dot_dimension_numbers<[1], [0], [0], [1], [0, 0, 1, 1], [], []>} : vector<16x32xbf16>, vector<32x128xbf16>, vector<16x128xf32> -> vector<16x128xf32>
    %141 = vector.broadcast %139 : vector<1x128xf32> to vector<16x128xf32>
    %142 = arith.addf %140, %141 : vector<16x128xf32>
    %cst_57 = arith.constant 1.702000e+00 : f32
    %143 = vector.broadcast %cst_57 : f32 to vector<16x128xf32>
    %144 = arith.mulf %143, %142 : vector<16x128xf32>
    %145 = arith.negf %144 : vector<16x128xf32>
    %146 = math.exp %145 : vector<16x128xf32>
    %cst_58 = arith.constant 1.000000e+00 : f32
    %147 = vector.broadcast %cst_58 : f32 to vector<16x128xf32>
    %148 = arith.addf %147, %146 : vector<16x128xf32>
    %149 = arith.divf %147, %148 : vector<16x128xf32>
    %150 = arith.mulf %142, %149 : vector<16x128xf32>
    %151 = arith.truncf %150 : vector<16x128xf32> to vector<16x128xbf16>
    %c0_59 = arith.constant 0 : index
    %c0_60 = arith.constant 0 : index
    %c0_61 = arith.constant 0 : index
    %152 = vector.load %arg19[%c0_59, %c0_60, %c0_61] : memref<2x128x32xbf16, #tpu.memory_space<vmem>>, vector<1x128x32xbf16>
    %153 = vector.shape_cast %152 : vector<1x128x32xbf16> to vector<128x32xbf16>
    %c0_62 = arith.constant 0 : index
    %c0_63 = arith.constant 0 : index
    %154 = vector.load %arg20[%c0_62, %c0_63] : memref<2x32xf32, #tpu.memory_space<vmem>>, vector<1x32xf32>
    %cst_64 = arith.constant dense<0.000000e+00> : vector<16x32xf32>
    %155 = tpu.matmul %151, %153, %cst_64 {dimension_numbers = #tpu.dot_dimension_numbers<[1], [0], [0], [1], [0, 0, 1, 1], [], []>} : vector<16x128xbf16>, vector<128x32xbf16>, vector<16x32xf32> -> vector<16x32xf32>
    %156 = vector.broadcast %154 : vector<1x32xf32> to vector<16x32xf32>
    %157 = arith.addf %155, %156 : vector<16x32xf32>
    %158 = arith.addf %111, %157 : vector<16x32xf32>
    %c1 = arith.constant 1 : index
    %c0_65 = arith.constant 0 : index
    %159 = vector.load %arg5[%c1, %c0_65] : memref<2x32xf32, #tpu.memory_space<vmem>>, vector<1x32xf32>
    %c1_66 = arith.constant 1 : index
    %c0_67 = arith.constant 0 : index
    %160 = vector.load %arg6[%c1_66, %c0_67] : memref<2x32xf32, #tpu.memory_space<vmem>>, vector<1x32xf32>
    %cst_68 = arith.constant dense<0.000000e+00> : vector<16xf32>
    %161 = vector.multi_reduction <add>, %158, %cst_68 [1] : vector<16x32xf32> to vector<16xf32>
    %162 = vector.shape_cast %161 : vector<16xf32> to vector<16x1xf32>
    %cst_69 = arith.constant 3.200000e+01 : f32
    %163 = vector.broadcast %cst_69 : f32 to vector<16x1xf32>
    %164 = arith.divf %162, %163 : vector<16x1xf32>
    %165 = vector.broadcast %164 : vector<16x1xf32> to vector<16x32xf32>
    %166 = arith.subf %158, %165 : vector<16x32xf32>
    %167 = arith.mulf %166, %166 : vector<16x32xf32>
    %cst_70 = arith.constant dense<0.000000e+00> : vector<16xf32>
    %168 = vector.multi_reduction <add>, %167, %cst_70 [1] : vector<16x32xf32> to vector<16xf32>
    %169 = vector.shape_cast %168 : vector<16xf32> to vector<16x1xf32>
    %cst_71 = arith.constant 3.200000e+01 : f32
    %170 = vector.broadcast %cst_71 : f32 to vector<16x1xf32>
    %171 = arith.divf %169, %170 : vector<16x1xf32>
    %172 = vector.broadcast %164 : vector<16x1xf32> to vector<16x32xf32>
    %173 = arith.subf %158, %172 : vector<16x32xf32>
    %cst_72 = arith.constant 9.99999974E-6 : f32
    %174 = vector.broadcast %cst_72 : f32 to vector<16x1xf32>
    %175 = arith.addf %171, %174 : vector<16x1xf32>
    %176 = math.rsqrt %175 : vector<16x1xf32>
    %177 = vector.broadcast %176 : vector<16x1xf32> to vector<16x32xf32>
    %178 = arith.mulf %173, %177 : vector<16x32xf32>
    %179 = vector.broadcast %159 : vector<1x32xf32> to vector<16x32xf32>
    %180 = arith.mulf %178, %179 : vector<16x32xf32>
    %181 = vector.broadcast %160 : vector<1x32xf32> to vector<16x32xf32>
    %182 = arith.addf %180, %181 : vector<16x32xf32>
    %183 = arith.truncf %182 : vector<16x32xf32> to vector<16x32xbf16>
    %c1_73 = arith.constant 1 : index
    %c0_74 = arith.constant 0 : index
    %c0_75 = arith.constant 0 : index
    %184 = vector.load %arg7[%c1_73, %c0_74, %c0_75] : memref<2x32x32xbf16, #tpu.memory_space<vmem>>, vector<1x32x32xbf16>
    %185 = vector.shape_cast %184 : vector<1x32x32xbf16> to vector<32x32xbf16>
    %c1_76 = arith.constant 1 : index
    %c0_77 = arith.constant 0 : index
    %186 = vector.load %arg10[%c1_76, %c0_77] : memref<2x32xf32, #tpu.memory_space<vmem>>, vector<1x32xf32>
    %cst_78 = arith.constant dense<0.000000e+00> : vector<16x32xf32>
    %187 = tpu.matmul %183, %185, %cst_78 {dimension_numbers = #tpu.dot_dimension_numbers<[1], [0], [0], [1], [0, 0, 1, 1], [], []>} : vector<16x32xbf16>, vector<32x32xbf16>, vector<16x32xf32> -> vector<16x32xf32>
    %188 = vector.broadcast %186 : vector<1x32xf32> to vector<16x32xf32>
    %189 = arith.addf %187, %188 : vector<16x32xf32>
    %cst_79 = arith.constant 0.353553385 : f32
    %190 = vector.broadcast %cst_79 : f32 to vector<16x32xf32>
    %191 = arith.mulf %189, %190 : vector<16x32xf32>
    %c1_80 = arith.constant 1 : index
    %c0_81 = arith.constant 0 : index
    %c0_82 = arith.constant 0 : index
    %192 = vector.load %arg8[%c1_80, %c0_81, %c0_82] : memref<2x32x32xbf16, #tpu.memory_space<vmem>>, vector<1x32x32xbf16>
    %193 = vector.shape_cast %192 : vector<1x32x32xbf16> to vector<32x32xbf16>
    %c1_83 = arith.constant 1 : index
    %c0_84 = arith.constant 0 : index
    %194 = vector.load %arg11[%c1_83, %c0_84] : memref<2x32xf32, #tpu.memory_space<vmem>>, vector<1x32xf32>
    %cst_85 = arith.constant dense<0.000000e+00> : vector<16x32xf32>
    %195 = tpu.matmul %183, %193, %cst_85 {dimension_numbers = #tpu.dot_dimension_numbers<[1], [0], [0], [1], [0, 0, 1, 1], [], []>} : vector<16x32xbf16>, vector<32x32xbf16>, vector<16x32xf32> -> vector<16x32xf32>
    %196 = vector.broadcast %194 : vector<1x32xf32> to vector<16x32xf32>
    %197 = arith.addf %195, %196 : vector<16x32xf32>
    %c1_86 = arith.constant 1 : index
    %c0_87 = arith.constant 0 : index
    %c0_88 = arith.constant 0 : index
    %198 = vector.load %arg9[%c1_86, %c0_87, %c0_88] : memref<2x32x32xbf16, #tpu.memory_space<vmem>>, vector<1x32x32xbf16>
    %199 = vector.shape_cast %198 : vector<1x32x32xbf16> to vector<32x32xbf16>
    %c1_89 = arith.constant 1 : index
    %c0_90 = arith.constant 0 : index
    %200 = vector.load %arg12[%c1_89, %c0_90] : memref<2x32xf32, #tpu.memory_space<vmem>>, vector<1x32xf32>
    %cst_91 = arith.constant dense<0.000000e+00> : vector<16x32xf32>
    %201 = tpu.matmul %183, %199, %cst_91 {dimension_numbers = #tpu.dot_dimension_numbers<[1], [0], [0], [1], [0, 0, 1, 1], [], []>} : vector<16x32xbf16>, vector<32x32xbf16>, vector<16x32xf32> -> vector<16x32xf32>
    %202 = vector.broadcast %200 : vector<1x32xf32> to vector<16x32xf32>
    %203 = arith.addf %201, %202 : vector<16x32xf32>
    %204 = vector.extract_strided_slice %191 {offsets = [0, 0], sizes = [8, 8], strides = [1, 1]} : vector<16x32xf32> to vector<8x8xf32>
    %205 = vector.extract_strided_slice %191 {offsets = [0, 8], sizes = [8, 8], strides = [1, 1]} : vector<16x32xf32> to vector<8x8xf32>
    %206 = vector.extract_strided_slice %191 {offsets = [0, 16], sizes = [8, 8], strides = [1, 1]} : vector<16x32xf32> to vector<8x8xf32>
    %207 = vector.extract_strided_slice %191 {offsets = [0, 24], sizes = [8, 8], strides = [1, 1]} : vector<16x32xf32> to vector<8x8xf32>
    %208 = vector.extract_strided_slice %191 {offsets = [8, 0], sizes = [8, 8], strides = [1, 1]} : vector<16x32xf32> to vector<8x8xf32>
    %209 = vector.extract_strided_slice %191 {offsets = [8, 8], sizes = [8, 8], strides = [1, 1]} : vector<16x32xf32> to vector<8x8xf32>
    %210 = vector.extract_strided_slice %191 {offsets = [8, 16], sizes = [8, 8], strides = [1, 1]} : vector<16x32xf32> to vector<8x8xf32>
    %211 = vector.extract_strided_slice %191 {offsets = [8, 24], sizes = [8, 8], strides = [1, 1]} : vector<16x32xf32> to vector<8x8xf32>
    %212 = tpu.concatenate %204, %205, %206, %207, %208, %209, %210, %211 in 0 : vector<8x8xf32>, vector<8x8xf32>, vector<8x8xf32>, vector<8x8xf32>, vector<8x8xf32>, vector<8x8xf32>, vector<8x8xf32>, vector<8x8xf32> -> vector<64x8xf32>
    %213 = arith.truncf %212 : vector<64x8xf32> to vector<64x8xbf16>
    %214 = vector.extract_strided_slice %197 {offsets = [0, 0], sizes = [8, 8], strides = [1, 1]} : vector<16x32xf32> to vector<8x8xf32>
    %215 = vector.extract_strided_slice %197 {offsets = [0, 8], sizes = [8, 8], strides = [1, 1]} : vector<16x32xf32> to vector<8x8xf32>
    %216 = vector.extract_strided_slice %197 {offsets = [0, 16], sizes = [8, 8], strides = [1, 1]} : vector<16x32xf32> to vector<8x8xf32>
    %217 = vector.extract_strided_slice %197 {offsets = [0, 24], sizes = [8, 8], strides = [1, 1]} : vector<16x32xf32> to vector<8x8xf32>
    %218 = vector.extract_strided_slice %197 {offsets = [8, 0], sizes = [8, 8], strides = [1, 1]} : vector<16x32xf32> to vector<8x8xf32>
    %219 = vector.extract_strided_slice %197 {offsets = [8, 8], sizes = [8, 8], strides = [1, 1]} : vector<16x32xf32> to vector<8x8xf32>
    %220 = vector.extract_strided_slice %197 {offsets = [8, 16], sizes = [8, 8], strides = [1, 1]} : vector<16x32xf32> to vector<8x8xf32>
    %221 = vector.extract_strided_slice %197 {offsets = [8, 24], sizes = [8, 8], strides = [1, 1]} : vector<16x32xf32> to vector<8x8xf32>
    %222 = tpu.concatenate %214, %215, %216, %217, %218, %219, %220, %221 in 0 : vector<8x8xf32>, vector<8x8xf32>, vector<8x8xf32>, vector<8x8xf32>, vector<8x8xf32>, vector<8x8xf32>, vector<8x8xf32>, vector<8x8xf32> -> vector<64x8xf32>
    %223 = arith.truncf %222 : vector<64x8xf32> to vector<64x8xbf16>
    %224 = vector.extract_strided_slice %203 {offsets = [0, 0], sizes = [8, 8], strides = [1, 1]} : vector<16x32xf32> to vector<8x8xf32>
    %225 = vector.extract_strided_slice %203 {offsets = [0, 8], sizes = [8, 8], strides = [1, 1]} : vector<16x32xf32> to vector<8x8xf32>
    %226 = vector.extract_strided_slice %203 {offsets = [0, 16], sizes = [8, 8], strides = [1, 1]} : vector<16x32xf32> to vector<8x8xf32>
    %227 = vector.extract_strided_slice %203 {offsets = [0, 24], sizes = [8, 8], strides = [1, 1]} : vector<16x32xf32> to vector<8x8xf32>
    %228 = vector.extract_strided_slice %203 {offsets = [8, 0], sizes = [8, 8], strides = [1, 1]} : vector<16x32xf32> to vector<8x8xf32>
    %229 = vector.extract_strided_slice %203 {offsets = [8, 8], sizes = [8, 8], strides = [1, 1]} : vector<16x32xf32> to vector<8x8xf32>
    %230 = vector.extract_strided_slice %203 {offsets = [8, 16], sizes = [8, 8], strides = [1, 1]} : vector<16x32xf32> to vector<8x8xf32>
    %231 = vector.extract_strided_slice %203 {offsets = [8, 24], sizes = [8, 8], strides = [1, 1]} : vector<16x32xf32> to vector<8x8xf32>
    %232 = tpu.concatenate %224, %225, %226, %227, %228, %229, %230, %231 in 0 : vector<8x8xf32>, vector<8x8xf32>, vector<8x8xf32>, vector<8x8xf32>, vector<8x8xf32>, vector<8x8xf32>, vector<8x8xf32>, vector<8x8xf32> -> vector<64x8xf32>
    %233 = arith.truncf %232 : vector<64x8xf32> to vector<64x8xbf16>
    "tpu.trace_start"() <{level = 10 : i32, message = "qd,kd->qk"}> : () -> ()
    %cst_92 = arith.constant dense<0.000000e+00> : vector<64x64xf32>
    %234 = tpu.matmul %213, %223, %cst_92 {dimension_numbers = #tpu.dot_dimension_numbers<[1], [1], [0], [0], [0, 0, 1, 0], [], []>} : vector<64x8xbf16>, vector<64x8xbf16>, vector<64x64xf32> -> vector<64x64xf32>
    "tpu.trace_stop"() : () -> ()
    %235 = arith.addf %234, %3 : vector<64x64xf32>
    %cst_93 = arith.constant dense<0xFF800000> : vector<64xf32>
    %236 = vector.multi_reduction <maximumf>, %235, %cst_93 [1] : vector<64x64xf32> to vector<64xf32>
    %237 = vector.shape_cast %236 : vector<64xf32> to vector<64x1xf32>
    %238 = vector.broadcast %237 : vector<64x1xf32> to vector<64x64xf32>
    %239 = arith.subf %235, %238 : vector<64x64xf32>
    %240 = math.exp %239 : vector<64x64xf32>
    %cst_94 = arith.constant dense<0.000000e+00> : vector<64xf32>
    %241 = vector.multi_reduction <add>, %240, %cst_94 [1] : vector<64x64xf32> to vector<64xf32>
    %242 = vector.shape_cast %241 : vector<64xf32> to vector<64x1xf32>
    %243 = tpu.reciprocal %242 {approx = true} : vector<64x1xf32> -> vector<64x1xf32>
    %244 = vector.broadcast %243 : vector<64x1xf32> to vector<64x64xf32>
    %245 = arith.mulf %240, %244 : vector<64x64xf32>
    %246 = arith.truncf %245 : vector<64x64xf32> to vector<64x64xbf16>
    %cst_95 = arith.constant dense<0.000000e+00> : vector<64x8xf32>
    %247 = tpu.matmul %246, %233, %cst_95 {dimension_numbers = #tpu.dot_dimension_numbers<[1], [0], [0], [1], [0, 0, 1, 1], [], []>} : vector<64x64xbf16>, vector<64x8xbf16>, vector<64x8xf32> -> vector<64x8xf32>
    %248 = vector.extract_strided_slice %247 {offsets = [0, 0], sizes = [8, 8], strides = [1, 1]} : vector<64x8xf32> to vector<8x8xf32>
    %249 = vector.extract_strided_slice %247 {offsets = [8, 0], sizes = [8, 8], strides = [1, 1]} : vector<64x8xf32> to vector<8x8xf32>
    %250 = vector.extract_strided_slice %247 {offsets = [16, 0], sizes = [8, 8], strides = [1, 1]} : vector<64x8xf32> to vector<8x8xf32>
    %251 = vector.extract_strided_slice %247 {offsets = [24, 0], sizes = [8, 8], strides = [1, 1]} : vector<64x8xf32> to vector<8x8xf32>
    %252 = tpu.concatenate %248, %249, %250, %251 in 1 : vector<8x8xf32>, vector<8x8xf32>, vector<8x8xf32>, vector<8x8xf32> -> vector<8x32xf32>
    %253 = vector.extract_strided_slice %247 {offsets = [32, 0], sizes = [8, 8], strides = [1, 1]} : vector<64x8xf32> to vector<8x8xf32>
    %254 = vector.extract_strided_slice %247 {offsets = [40, 0], sizes = [8, 8], strides = [1, 1]} : vector<64x8xf32> to vector<8x8xf32>
    %255 = vector.extract_strided_slice %247 {offsets = [48, 0], sizes = [8, 8], strides = [1, 1]} : vector<64x8xf32> to vector<8x8xf32>
    %256 = vector.extract_strided_slice %247 {offsets = [56, 0], sizes = [8, 8], strides = [1, 1]} : vector<64x8xf32> to vector<8x8xf32>
    %257 = tpu.concatenate %253, %254, %255, %256 in 1 : vector<8x8xf32>, vector<8x8xf32>, vector<8x8xf32>, vector<8x8xf32> -> vector<8x32xf32>
    %258 = tpu.concatenate %252, %257 in 0 : vector<8x32xf32>, vector<8x32xf32> -> vector<16x32xf32>
    %259 = arith.truncf %258 : vector<16x32xf32> to vector<16x32xbf16>
    %c1_96 = arith.constant 1 : index
    %c0_97 = arith.constant 0 : index
    %c0_98 = arith.constant 0 : index
    %260 = vector.load %arg13[%c1_96, %c0_97, %c0_98] : memref<2x32x32xbf16, #tpu.memory_space<vmem>>, vector<1x32x32xbf16>
    %261 = vector.shape_cast %260 : vector<1x32x32xbf16> to vector<32x32xbf16>
    %c1_99 = arith.constant 1 : index
    %c0_100 = arith.constant 0 : index
    %262 = vector.load %arg14[%c1_99, %c0_100] : memref<2x32xf32, #tpu.memory_space<vmem>>, vector<1x32xf32>
    %cst_101 = arith.constant dense<0.000000e+00> : vector<16x32xf32>
    %263 = tpu.matmul %259, %261, %cst_101 {dimension_numbers = #tpu.dot_dimension_numbers<[1], [0], [0], [1], [0, 0, 1, 1], [], []>} : vector<16x32xbf16>, vector<32x32xbf16>, vector<16x32xf32> -> vector<16x32xf32>
    %264 = vector.broadcast %262 : vector<1x32xf32> to vector<16x32xf32>
    %265 = arith.addf %263, %264 : vector<16x32xf32>
    %266 = arith.addf %158, %265 : vector<16x32xf32>
    %c1_102 = arith.constant 1 : index
    %c0_103 = arith.constant 0 : index
    %267 = vector.load %arg15[%c1_102, %c0_103] : memref<2x32xf32, #tpu.memory_space<vmem>>, vector<1x32xf32>
    %c1_104 = arith.constant 1 : index
    %c0_105 = arith.constant 0 : index
    %268 = vector.load %arg16[%c1_104, %c0_105] : memref<2x32xf32, #tpu.memory_space<vmem>>, vector<1x32xf32>
    %cst_106 = arith.constant dense<0.000000e+00> : vector<16xf32>
    %269 = vector.multi_reduction <add>, %266, %cst_106 [1] : vector<16x32xf32> to vector<16xf32>
    %270 = vector.shape_cast %269 : vector<16xf32> to vector<16x1xf32>
    %cst_107 = arith.constant 3.200000e+01 : f32
    %271 = vector.broadcast %cst_107 : f32 to vector<16x1xf32>
    %272 = arith.divf %270, %271 : vector<16x1xf32>
    %273 = vector.broadcast %272 : vector<16x1xf32> to vector<16x32xf32>
    %274 = arith.subf %266, %273 : vector<16x32xf32>
    %275 = arith.mulf %274, %274 : vector<16x32xf32>
    %cst_108 = arith.constant dense<0.000000e+00> : vector<16xf32>
    %276 = vector.multi_reduction <add>, %275, %cst_108 [1] : vector<16x32xf32> to vector<16xf32>
    %277 = vector.shape_cast %276 : vector<16xf32> to vector<16x1xf32>
    %cst_109 = arith.constant 3.200000e+01 : f32
    %278 = vector.broadcast %cst_109 : f32 to vector<16x1xf32>
    %279 = arith.divf %277, %278 : vector<16x1xf32>
    %280 = vector.broadcast %272 : vector<16x1xf32> to vector<16x32xf32>
    %281 = arith.subf %266, %280 : vector<16x32xf32>
    %cst_110 = arith.constant 9.99999974E-6 : f32
    %282 = vector.broadcast %cst_110 : f32 to vector<16x1xf32>
    %283 = arith.addf %279, %282 : vector<16x1xf32>
    %284 = math.rsqrt %283 : vector<16x1xf32>
    %285 = vector.broadcast %284 : vector<16x1xf32> to vector<16x32xf32>
    %286 = arith.mulf %281, %285 : vector<16x32xf32>
    %287 = vector.broadcast %267 : vector<1x32xf32> to vector<16x32xf32>
    %288 = arith.mulf %286, %287 : vector<16x32xf32>
    %289 = vector.broadcast %268 : vector<1x32xf32> to vector<16x32xf32>
    %290 = arith.addf %288, %289 : vector<16x32xf32>
    %291 = arith.truncf %290 : vector<16x32xf32> to vector<16x32xbf16>
    %c1_111 = arith.constant 1 : index
    %c0_112 = arith.constant 0 : index
    %c0_113 = arith.constant 0 : index
    %292 = vector.load %arg17[%c1_111, %c0_112, %c0_113] : memref<2x32x128xbf16, #tpu.memory_space<vmem>>, vector<1x32x128xbf16>
    %293 = vector.shape_cast %292 : vector<1x32x128xbf16> to vector<32x128xbf16>
    %c1_114 = arith.constant 1 : index
    %c0_115 = arith.constant 0 : index
    %294 = vector.load %arg18[%c1_114, %c0_115] : memref<2x128xf32, #tpu.memory_space<vmem>>, vector<1x128xf32>
    %cst_116 = arith.constant dense<0.000000e+00> : vector<16x128xf32>
    %295 = tpu.matmul %291, %293, %cst_116 {dimension_numbers = #tpu.dot_dimension_numbers<[1], [0], [0], [1], [0, 0, 1, 1], [], []>} : vector<16x32xbf16>, vector<32x128xbf16>, vector<16x128xf32> -> vector<16x128xf32>
    %296 = vector.broadcast %294 : vector<1x128xf32> to vector<16x128xf32>
    %297 = arith.addf %295, %296 : vector<16x128xf32>
    %cst_117 = arith.constant 1.702000e+00 : f32
    %298 = vector.broadcast %cst_117 : f32 to vector<16x128xf32>
    %299 = arith.mulf %298, %297 : vector<16x128xf32>
    %300 = arith.negf %299 : vector<16x128xf32>
    %301 = math.exp %300 : vector<16x128xf32>
    %cst_118 = arith.constant 1.000000e+00 : f32
    %302 = vector.broadcast %cst_118 : f32 to vector<16x128xf32>
    %303 = arith.addf %302, %301 : vector<16x128xf32>
    %304 = arith.divf %302, %303 : vector<16x128xf32>
    %305 = arith.mulf %297, %304 : vector<16x128xf32>
    %306 = arith.truncf %305 : vector<16x128xf32> to vector<16x128xbf16>
    %c1_119 = arith.constant 1 : index
    %c0_120 = arith.constant 0 : index
    %c0_121 = arith.constant 0 : index
    %307 = vector.load %arg19[%c1_119, %c0_120, %c0_121] : memref<2x128x32xbf16, #tpu.memory_space<vmem>>, vector<1x128x32xbf16>
    %308 = vector.shape_cast %307 : vector<1x128x32xbf16> to vector<128x32xbf16>
    %c1_122 = arith.constant 1 : index
    %c0_123 = arith.constant 0 : index
    %309 = vector.load %arg20[%c1_122, %c0_123] : memref<2x32xf32, #tpu.memory_space<vmem>>, vector<1x32xf32>
    %cst_124 = arith.constant dense<0.000000e+00> : vector<16x32xf32>
    %310 = tpu.matmul %306, %308, %cst_124 {dimension_numbers = #tpu.dot_dimension_numbers<[1], [0], [0], [1], [0, 0, 1, 1], [], []>} : vector<16x128xbf16>, vector<128x32xbf16>, vector<16x32xf32> -> vector<16x32xf32>
    %311 = vector.broadcast %309 : vector<1x32xf32> to vector<16x32xf32>
    %312 = arith.addf %310, %311 : vector<16x32xf32>
    %313 = arith.addf %266, %312 : vector<16x32xf32>
    %c0_125 = arith.constant 0 : index
    %c0_126 = arith.constant 0 : index
    %314 = vector.load %arg21[%c0_125, %c0_126] : memref<1x32xf32, #tpu.memory_space<vmem>>, vector<1x32xf32>
    %c0_127 = arith.constant 0 : index
    %c0_128 = arith.constant 0 : index
    %315 = vector.load %arg22[%c0_127, %c0_128] : memref<1x32xf32, #tpu.memory_space<vmem>>, vector<1x32xf32>
    %cst_129 = arith.constant dense<0.000000e+00> : vector<16xf32>
    %316 = vector.multi_reduction <add>, %313, %cst_129 [1] : vector<16x32xf32> to vector<16xf32>
    %317 = vector.shape_cast %316 : vector<16xf32> to vector<16x1xf32>
    %cst_130 = arith.constant 3.200000e+01 : f32
    %318 = vector.broadcast %cst_130 : f32 to vector<16x1xf32>
    %319 = arith.divf %317, %318 : vector<16x1xf32>
    %320 = vector.broadcast %319 : vector<16x1xf32> to vector<16x32xf32>
    %321 = arith.subf %313, %320 : vector<16x32xf32>
    %322 = arith.mulf %321, %321 : vector<16x32xf32>
    %cst_131 = arith.constant dense<0.000000e+00> : vector<16xf32>
    %323 = vector.multi_reduction <add>, %322, %cst_131 [1] : vector<16x32xf32> to vector<16xf32>
    %324 = vector.shape_cast %323 : vector<16xf32> to vector<16x1xf32>
    %cst_132 = arith.constant 3.200000e+01 : f32
    %325 = vector.broadcast %cst_132 : f32 to vector<16x1xf32>
    %326 = arith.divf %324, %325 : vector<16x1xf32>
    %327 = vector.broadcast %319 : vector<16x1xf32> to vector<16x32xf32>
    %328 = arith.subf %313, %327 : vector<16x32xf32>
    %cst_133 = arith.constant 9.99999974E-6 : f32
    %329 = vector.broadcast %cst_133 : f32 to vector<16x1xf32>
    %330 = arith.addf %326, %329 : vector<16x1xf32>
    %331 = math.rsqrt %330 : vector<16x1xf32>
    %332 = vector.broadcast %331 : vector<16x1xf32> to vector<16x32xf32>
    %333 = arith.mulf %328, %332 : vector<16x32xf32>
    %334 = vector.broadcast %314 : vector<1x32xf32> to vector<16x32xf32>
    %335 = arith.mulf %333, %334 : vector<16x32xf32>
    %336 = vector.broadcast %315 : vector<1x32xf32> to vector<16x32xf32>
    %337 = arith.addf %335, %336 : vector<16x32xf32>
    %c0_134 = arith.constant 0 : index
    %c0_135 = arith.constant 0 : index
    %338 = vector.load %arg25[%c0_134, %c0_135] : memref<16x32xf32, #tpu.memory_space<vmem>>, vector<16x32xf32>
    tpu.vector_store %arg25[%c0_134, %c0_135], %337 {strides = array<i32>} : memref<16x32xf32, #tpu.memory_space<vmem>>, vector<16x32xf32>,
    %c0_136 = arith.constant 0 : index
    %339 = memref.load %arg1[%c0_136] : memref<2xi32, #tpu.memory_space<smem>>
    %c0_i32 = arith.constant 0 : i32
    %340 = arith.addi %c0_i32, %339 : i32
    %341 = arith.index_cast %340 : i32 to index
    %c0_137 = arith.constant 0 : index
    %342 = vector.load %arg25[%341, %c0_137] : memref<16x32xf32, #tpu.memory_space<vmem>>, vector<1x32xf32>
    %c1_138 = arith.constant 1 : index
    %343 = memref.load %arg1[%c1_138] : memref<2xi32, #tpu.memory_space<smem>>
    %c8_i32 = arith.constant 8 : i32
    %344 = arith.addi %c8_i32, %343 : i32
    %345 = arith.index_cast %344 : i32 to index
    %c0_139 = arith.constant 0 : index
    %346 = vector.load %arg25[%345, %c0_139] : memref<16x32xf32, #tpu.memory_space<vmem>>, vector<1x32xf32>
    %347 = tpu.concatenate %342, %346 in 0 : vector<1x32xf32>, vector<1x32xf32> -> vector<2x32xf32>
    %348 = arith.truncf %347 : vector<2x32xf32> to vector<2x32xbf16>
    %c0_140 = arith.constant 0 : index
    %c0_141 = arith.constant 0 : index
    %349 = vector.load %arg23[%c0_140, %c0_141] : memref<32x128xbf16, #tpu.memory_space<vmem>>, vector<32x128xbf16>
    %cst_142 = arith.constant dense<0.000000e+00> : vector<2x128xf32>
    %350 = tpu.matmul %348, %349, %cst_142 {dimension_numbers = #tpu.dot_dimension_numbers<[1], [0], [0], [1], [0, 0, 1, 1], [], []>} : vector<2x32xbf16>, vector<32x128xbf16>, vector<2x128xf32> -> vector<2x128xf32>
    %c0_143 = arith.constant 0 : index
    %c0_144 = arith.constant 0 : index
    %351 = vector.load %arg24[%c0_143, %c0_144] : memref<2x128xf32, #tpu.memory_space<vmem>>, vector<2x128xf32>
    tpu.vector_store %arg24[%c0_143, %c0_144], %350 {strides = array<i32>} : memref<2x128xf32, #tpu.memory_space<vmem>>, vector<2x128xf32>,
    return
  }
  func.func @transform_0(%arg0: i32, %arg1: memref<2xi32, #tpu.memory_space<smem>>) -> (i32, i32) {
    %c0_i32 = arith.constant 0 : i32
    %c0_i32_0 = arith.constant 0 : i32
    %c0_i32_1 = arith.constant 0 : i32
    return %c0_i32, %c0_i32_0 : i32, i32
  }
  func.func @transform_1(%arg0: i32, %arg1: memref<2xi32, #tpu.memory_space<smem>>) -> (i32, i32) {
    %c0_i32 = arith.constant 0 : i32
    %c0_i32_0 = arith.constant 0 : i32
    %c0_i32_1 = arith.constant 0 : i32
    return %c0_i32, %c0_i32_0 : i32, i32
  }
  func.func @transform_2(%arg0: i32, %arg1: memref<2xi32, #tpu.memory_space<smem>>) -> (i32, i32) {
    %c0_i32 = arith.constant 0 : i32
    %c0_i32_0 = arith.constant 0 : i32
    %c0_i32_1 = arith.constant 0 : i32
    return %c0_i32, %c0_i32_0 : i32, i32
  }
  func.func @transform_3(%arg0: i32, %arg1: memref<2xi32, #tpu.memory_space<smem>>) -> (i32, i32) {
    %c0_i32 = arith.constant 0 : i32
    %c0_i32_0 = arith.constant 0 : i32
    %c0_i32_1 = arith.constant 0 : i32
    return %c0_i32, %c0_i32_0 : i32, i32
  }
  func.func @transform_4(%arg0: i32, %arg1: memref<2xi32, #tpu.memory_space<smem>>) -> (i32, i32) {
    %c0_i32 = arith.constant 0 : i32
    %c0_i32_0 = arith.constant 0 : i32
    %c0_i32_1 = arith.constant 0 : i32
    return %c0_i32, %c0_i32_0 : i32, i32
  }
  func.func @transform_5(%arg0: i32, %arg1: memref<2xi32, #tpu.memory_space<smem>>) -> (i32, i32, i32) {
    %c0_i32 = arith.constant 0 : i32
    %c0_i32_0 = arith.constant 0 : i32
    %c0_i32_1 = arith.constant 0 : i32
    %c0_i32_2 = arith.constant 0 : i32
    return %c0_i32, %c0_i32_0, %c0_i32_1 : i32, i32, i32
  }
  func.func @transform_6(%arg0: i32, %arg1: memref<2xi32, #tpu.memory_space<smem>>) -> (i32, i32, i32) {
    %c0_i32 = arith.constant 0 : i32
    %c0_i32_0 = arith.constant 0 : i32
    %c0_i32_1 = arith.constant 0 : i32
    %c0_i32_2 = arith.constant 0 : i32
    return %c0_i32, %c0_i32_0, %c0_i32_1 : i32, i32, i32
  }
  func.func @transform_7(%arg0: i32, %arg1: memref<2xi32, #tpu.memory_space<smem>>) -> (i32, i32, i32) {
    %c0_i32 = arith.constant 0 : i32
    %c0_i32_0 = arith.constant 0 : i32
    %c0_i32_1 = arith.constant 0 : i32
    %c0_i32_2 = arith.constant 0 : i32
    return %c0_i32, %c0_i32_0, %c0_i32_1 : i32, i32, i32
  }
  func.func @transform_8(%arg0: i32, %arg1: memref<2xi32, #tpu.memory_space<smem>>) -> (i32, i32) {
    %c0_i32 = arith.constant 0 : i32
    %c0_i32_0 = arith.constant 0 : i32
    %c0_i32_1 = arith.constant 0 : i32
    return %c0_i32, %c0_i32_0 : i32, i32
  }
  func.func @transform_9(%arg0: i32, %arg1: memref<2xi32, #tpu.memory_space<smem>>) -> (i32, i32) {
    %c0_i32 = arith.constant 0 : i32
    %c0_i32_0 = arith.constant 0 : i32
    %c0_i32_1 = arith.constant 0 : i32
    return %c0_i32, %c0_i32_0 : i32, i32
  }
  func.func @transform_10(%arg0: i32, %arg1: memref<2xi32, #tpu.memory_space<smem>>) -> (i32, i32) {
    %c0_i32 = arith.constant 0 : i32
    %c0_i32_0 = arith.constant 0 : i32
    %c0_i32_1 = arith.constant 0 : i32
    return %c0_i32, %c0_i32_0 : i32, i32
  }
  func.func @transform_11(%arg0: i32, %arg1: memref<2xi32, #tpu.memory_space<smem>>) -> (i32, i32, i32) {
    %c0_i32 = arith.constant 0 : i32
    %c0_i32_0 = arith.constant 0 : i32
    %c0_i32_1 = arith.constant 0 : i32
    %c0_i32_2 = arith.constant 0 : i32
    return %c0_i32, %c0_i32_0, %c0_i32_1 : i32, i32, i32
  }
  func.func @transform_12(%arg0: i32, %arg1: memref<2xi32, #tpu.memory_space<smem>>) -> (i32, i32) {
    %c0_i32 = arith.constant 0 : i32
    %c0_i32_0 = arith.constant 0 : i32
    %c0_i32_1 = arith.constant 0 : i32
    return %c0_i32, %c0_i32_0 : i32, i32
  }
  func.func @transform_13(%arg0: i32, %arg1: memref<2xi32, #tpu.memory_space<smem>>) -> (i32, i32) {
    %c0_i32 = arith.constant 0 : i32
    %c0_i32_0 = arith.constant 0 : i32
    %c0_i32_1 = arith.constant 0 : i32
    return %c0_i32, %c0_i32_0 : i32, i32
  }
  func.func @transform_14(%arg0: i32, %arg1: memref<2xi32, #tpu.memory_space<smem>>) -> (i32, i32) {
    %c0_i32 = arith.constant 0 : i32
    %c0_i32_0 = arith.constant 0 : i32
    %c0_i32_1 = arith.constant 0 : i32
    return %c0_i32, %c0_i32_0 : i32, i32
  }
  func.func @transform_15(%arg0: i32, %arg1: memref<2xi32, #tpu.memory_space<smem>>) -> (i32, i32, i32) {
    %c0_i32 = arith.constant 0 : i32
    %c0_i32_0 = arith.constant 0 : i32
    %c0_i32_1 = arith.constant 0 : i32
    %c0_i32_2 = arith.constant 0 : i32
    return %c0_i32, %c0_i32_0, %c0_i32_1 : i32, i32, i32
  }
  func.func @transform_16(%arg0: i32, %arg1: memref<2xi32, #tpu.memory_space<smem>>) -> (i32, i32) {
    %c0_i32 = arith.constant 0 : i32
    %c0_i32_0 = arith.constant 0 : i32
    %c0_i32_1 = arith.constant 0 : i32
    return %c0_i32, %c0_i32_0 : i32, i32
  }
  func.func @transform_17(%arg0: i32, %arg1: memref<2xi32, #tpu.memory_space<smem>>) -> (i32, i32, i32) {
    %c0_i32 = arith.constant 0 : i32
    %c0_i32_0 = arith.constant 0 : i32
    %c0_i32_1 = arith.constant 0 : i32
    %c0_i32_2 = arith.constant 0 : i32
    return %c0_i32, %c0_i32_0, %c0_i32_1 : i32, i32, i32
  }
  func.func @transform_18(%arg0: i32, %arg1: memref<2xi32, #tpu.memory_space<smem>>) -> (i32, i32) {
    %c0_i32 = arith.constant 0 : i32
    %c0_i32_0 = arith.constant 0 : i32
    %c0_i32_1 = arith.constant 0 : i32
    return %c0_i32, %c0_i32_0 : i32, i32
  }
  func.func @transform_19(%arg0: i32, %arg1: memref<2xi32, #tpu.memory_space<smem>>) -> (i32, i32) {
    %c0_i32 = arith.constant 0 : i32
    %c0_i32_0 = arith.constant 0 : i32
    %c0_i32_1 = arith.constant 0 : i32
    return %c0_i32, %c0_i32_0 : i32, i32
  }
  func.func @transform_20(%arg0: i32, %arg1: memref<2xi32, #tpu.memory_space<smem>>) -> (i32, i32) {
    %c0_i32 = arith.constant 0 : i32
    %c0_i32_0 = arith.constant 0 : i32
    %c0_i32_1 = arith.constant 0 : i32
    return %c0_i32, %c0_i32_0 : i32, i32
  }
  func.func @transform_21(%arg0: i32, %arg1: memref<2xi32, #tpu.memory_space<smem>>) -> (i32, i32) {
    %c0_i32 = arith.constant 0 : i32
    %c0_i32_0 = arith.constant 0 : i32
    %c0_i32_1 = arith.constant 0 : i32
    return %c0_i32, %c0_i32_0 : i32, i32
  }
  func.func @transform_22(%arg0: i32, %arg1: memref<2xi32, #tpu.memory_space<smem>>) -> (i32, i32) {
    %c0_i32 = arith.constant 0 : i32
    %c0_i32_0 = arith.constant 0 : i32
    %c0_i32_1 = arith.constant 0 : i32
    return %c0_i32, %c0_i32_0 : i32, i32
  }
}

</mosaic_0001>

<llo_original>
// kernel: tpu_custom_call.1
$region0: #{tpu_custom_call.1}
  #allocation0 [shape = 'u32[]', space=smem, size = 0x4, offset = 0x4, fixed_abs, tag = 'smem constant byte address 0x4 - core index']
  #allocation1 [shape = 'u32[144,128]{1,0:T(1,128)}', space=vmem, size = 0x12000, scoped, tag = 'internal scratch']
  #allocation2 [shape = 'f32[16,32]{1,0:T(8,128)}', space=vmem, size = 0x2000, scoped, tag = 'scratch operand']
  #allocation3 [shape = 's32[1]{0}', space=sflag, size = 0x4, scoped, tag = 'scoped memory for tpu_custom_call.1']
  #allocation4 [shape = 'u8[512]{0}', space=smem, size = 0x200, scoped, tag = 'prefetched SMEM operand 0']
  %s0 = inlined_call_operand.hbm [shape: s32[2], index: 0, kind: input, shape index: {}]
  %s1 = inlined_call_operand.hbm [shape: f32[16,32], index: 1, kind: input, shape index: {}]
  %s2 = inlined_call_operand.hbm [shape: f32[16,32], index: 2, kind: input, shape index: {}]
  %s3 = inlined_call_operand.vmem [shape: f32[64,64], index: 3, kind: input, shape index: {}]
  %s4 = inlined_call_operand.hbm [shape: f32[2,32], index: 4, kind: input, shape index: {}]
  %s5 = inlined_call_operand.hbm [shape: f32[2,32], index: 5, kind: input, shape index: {}]
  %s6 = inlined_call_operand.vmem [shape: bf16[2,32,32], index: 6, kind: input, shape index: {}]
  %s7 = inlined_call_operand.vmem [shape: bf16[2,32,32], index: 7, kind: input, shape index: {}]
  %s8 = inlined_call_operand.vmem [shape: bf16[2,32,32], index: 8, kind: input, shape index: {}]
  %s9 = inlined_call_operand.hbm [shape: f32[2,32], index: 9, kind: input, shape index: {}]
  %s10 = inlined_call_operand.hbm [shape: f32[2,32], index: 10, kind: input, shape index: {}]
  %s11 = inlined_call_operand.hbm [shape: f32[2,32], index: 11, kind: input, shape index: {}]
  %s12 = inlined_call_operand.vmem [shape: bf16[2,32,32], index: 12, kind: input, shape index: {}]
  %s13 = inlined_call_operand.hbm [shape: f32[2,32], index: 13, kind: input, shape index: {}]
  %s14 = inlined_call_operand.hbm [shape: f32[2,32], index: 14, kind: input, shape index: {}]
  %s15 = inlined_call_operand.hbm [shape: f32[2,32], index: 15, kind: input, shape index: {}]
  %s16 = inlined_call_operand.hbm [shape: bf16[2,32,128], index: 16, kind: input, shape index: {}]
  %s17 = inlined_call_operand.hbm [shape: f32[2,128], index: 17, kind: input, shape index: {}]
  %s18 = inlined_call_operand.vmem [shape: bf16[2,128,32], index: 18, kind: input, shape index: {}]
  %s19 = inlined_call_operand.vmem [shape: f32[2,32], index: 19, kind: input, shape index: {}]
  %s20 = inlined_call_operand.vmem [shape: f32[1,32], index: 20, kind: input, shape index: {}]
  %s21 = inlined_call_operand.hbm [shape: f32[1,32], index: 21, kind: input, shape index: {}]
  %s22 = inlined_call_operand.vmem [shape: bf16[32,128], index: 22, kind: input, shape index: {}]
  %s23 = inlined_call_operand.hbm [shape: f32[2,128], index: 23, kind: output, shape index: {}]
  %s24 = sld [smem:[#allocation0]]
  $region150: #{tpu_custom_call.1} parent=0
    _
  %s26 = ssub.s32 1, %s24
  %s27 = scalar_select 0, %s26, %s24
  %29 = dma.hbm_to_smem %s0, 16, [#allocation4], [#allocation3]
  %30 = dma.done [#allocation3], 16
  %31 = sfence
  $region1: #{tpu_custom_call.1} parent=0
    #allocation5 [shape = 'u8[8192]{0}', space=vmem, size = 0x2000, scoped, tag = 'input window, operand 1, single buffered']
    #allocation6 [shape = 's32[1]{0}', space=sflag, size = 0x4, scoped, tag = 'scoped memory for tpu_custom_call.1']
    #allocation7 [shape = 's32[1]{0}', space=sflag, size = 0x4, scoped, tag = 'scoped memory for tpu_custom_call.1']
    #allocation8 [shape = 'u8[8192]{0}', space=vmem, size = 0x2000, scoped, tag = 'input window, operand 2, single buffered']
    #allocation9 [shape = 's32[1]{0}', space=sflag, size = 0x4, scoped, tag = 'scoped memory for tpu_custom_call.1']
    #allocation10 [shape = 'u8[1024]{0}', space=vmem, size = 0x400, scoped, tag = 'input window, operand 4, single buffered']
    #allocation11 [shape = 'u8[1024]{0}', space=vmem, size = 0x400, scoped, tag = 'input window, operand 5, single buffered']
    #allocation12 [shape = 's32[1]{0}', space=sflag, size = 0x4, scoped, tag = 'scoped memory for tpu_custom_call.1']
    #allocation13 [shape = 'u8[1024]{0}', space=vmem, size = 0x400, scoped, tag = 'input window, operand 9, single buffered']
    #allocation14 [shape = 'u8[1024]{0}', space=vmem, size = 0x400, scoped, tag = 'input window, operand 10, single buffered']
    #allocation15 [shape = 's32[1]{0}', space=sflag, size = 0x4, scoped, tag = 'scoped memory for tpu_custom_call.1']
    #allocation16 [shape = 'u8[1024]{0}', space=vmem, size = 0x400, scoped, tag = 'input window, operand 11, single buffered']
    #allocation17 [shape = 'u8[1024]{0}', space=vmem, size = 0x400, scoped, tag = 'input window, operand 13, single buffered']
    #allocation18 [shape = 's32[1]{0}', space=sflag, size = 0x4, scoped, tag = 'scoped memory for tpu_custom_call.1']
    #allocation19 [shape = 'u8[1024]{0}', space=vmem, size = 0x400, scoped, tag = 'input window, operand 14, single buffered']
    #allocation20 [shape = 'u8[1024]{0}', space=vmem, size = 0x400, scoped, tag = 'input window, operand 15, single buffered']
    #allocation21 [shape = 's32[1]{0}', space=sflag, size = 0x4, scoped, tag = 'scoped memory for tpu_custom_call.1']
    #allocation22 [shape = 'u8[16384]{0}', space=vmem, size = 0x4000, scoped, tag = 'input window, operand 16, single buffered']
    #allocation23 [shape = 'u8[1024]{0}', space=vmem, size = 0x400, scoped, tag = 'input window, operand 17, single buffered']
    #allocation24 [shape = 's32[1]{0}', space=sflag, size = 0x4, scoped, tag = 'scoped memory for tpu_custom_call.1']
    #allocation25 [shape = 'u8[512]{0}', space=vmem, size = 0x400, scoped, tag = 'input window, operand 21, single buffered']
    #allocation26 [shape = 'u8[1024]{0}', space=vmem, size = 0x400, scoped, tag = 'output window, operand 0, single buffered']
    %32 = vsyncpa [#allocation6], 0
    %33 = vsyncpa [#allocation9], 0
    %34 = vsyncpa [#allocation12], 0
    %35 = vsyncpa [#allocation15], 0
    %36 = vsyncpa [#allocation18], 0
    %37 = vsyncpa [#allocation21], 0
    %38 = vsyncpa [#allocation24], 0
    %39 = vsyncpa [#allocation7], 0
    // Predicated region
    $region2: #{tpu_custom_call.1} parent=1 // pred_check
      _
    $region3: #{tpu_custom_call.1} parent=1 // pred_check_branch
      %41 = sbr.rel (0) target = $region5
    $region4: #{tpu_custom_call.1} parent=1 // pred_region
      %s43 = ssub.s32 256, 256
      %44 = vsyncadd [#allocation6], %s43
      %s45 = sshll.u32 [#allocation5], 4
      %s46 = int_to_ptr.vmem [resolvable:$true] %s45
      %51 = dma.hbm_to_vmem [thread:$0]  %s1, 256, %s46, [#allocation6], 128, 128, 8
    $region5: #{tpu_custom_call.1} parent=1 // pred_fallthru
      _
    // Predicated region
    $region6: #{tpu_custom_call.1} parent=1 // pred_check
      _
    $region7: #{tpu_custom_call.1} parent=1 // pred_check_branch
      %53 = sbr.rel (0) target = $region9
    $region8: #{tpu_custom_call.1} parent=1 // pred_region
      %s55 = ssub.s32 256, 256
      %56 = vsyncadd [#allocation9], %s55
      %s57 = sshll.u32 [#allocation8], 4
      %s58 = int_to_ptr.vmem [resolvable:$true] %s57
      %63 = dma.hbm_to_vmem [thread:$0]  %s2, 256, %s58, [#allocation9], 128, 128, 8
    $region9: #{tpu_custom_call.1} parent=1 // pred_fallthru
      _
    // Predicated region
    $region10: #{tpu_custom_call.1} parent=1 // pred_check
      _
    $region11: #{tpu_custom_call.1} parent=1 // pred_check_branch
      %65 = sbr.rel (0) target = $region13
    $region12: #{tpu_custom_call.1} parent=1 // pred_region
      _
    $region13: #{tpu_custom_call.1} parent=1 // pred_fallthru
      _
    // Predicated region
    $region14: #{tpu_custom_call.1} parent=1 // pred_check
      _
    $region15: #{tpu_custom_call.1} parent=1 // pred_check_branch
      %67 = sbr.rel (0) target = $region17
    $region16: #{tpu_custom_call.1} parent=1 // pred_region
      %s69 = ssub.s32 32, 32
      %70 = vsyncadd [#allocation9], %s69
      %s72 = sshll.u32 [#allocation10], 4
      %s73 = int_to_ptr.vmem [resolvable:$true] %s72
      %75 = dma.hbm_to_vmem [thread:$0]  %s4, 32, %s73, [#allocation9]
    $region17: #{tpu_custom_call.1} parent=1 // pred_fallthru
      _
    // Predicated region
    $region18: #{tpu_custom_call.1} parent=1 // pred_check
      _
    $region19: #{tpu_custom_call.1} parent=1 // pred_check_branch
      %77 = sbr.rel (0) target = $region21
    $region20: #{tpu_custom_call.1} parent=1 // pred_region
      %s79 = ssub.s32 32, 32
      %80 = vsyncadd [#allocation12], %s79
      %s82 = sshll.u32 [#allocation11], 4
      %s83 = int_to_ptr.vmem [resolvable:$true] %s82
      %85 = dma.hbm_to_vmem [thread:$0]  %s5, 32, %s83, [#allocation12]
    $region21: #{tpu_custom_call.1} parent=1 // pred_fallthru
      _
    // Predicated region
    $region22: #{tpu_custom_call.1} parent=1 // pred_check
      _
    $region23: #{tpu_custom_call.1} parent=1 // pred_check_branch
      %87 = sbr.rel (0) target = $region25
    $region24: #{tpu_custom_call.1} parent=1 // pred_region
      _
    $region25: #{tpu_custom_call.1} parent=1 // pred_fallthru
      _
    // Predicated region
    $region26: #{tpu_custom_call.1} parent=1 // pred_check
      _
    $region27: #{tpu_custom_call.1} parent=1 // pred_check_branch
      %89 = sbr.rel (0) target = $region29
    $region28: #{tpu_custom_call.1} parent=1 // pred_region
      _
    $region29: #{tpu_custom_call.1} parent=1 // pred_fallthru
      _
    // Predicated region
    $region30: #{tpu_custom_call.1} parent=1 // pred_check
      _
    $region31: #{tpu_custom_call.1} parent=1 // pred_check_branch
      %91 = sbr.rel (0) target = $region33
    $region32: #{tpu_custom_call.1} parent=1 // pred_region
      _
    $region33: #{tpu_custom_call.1} parent=1 // pred_fallthru
      _
    // Predicated region
    $region34: #{tpu_custom_call.1} parent=1 // pred_check
      _
    $region35: #{tpu_custom_call.1} parent=1 // pred_check_branch
      %93 = sbr.rel (0) target = $region37
    $region36: #{tpu_custom_call.1} parent=1 // pred_region
      %s95 = ssub.s32 32, 32
      %96 = vsyncadd [#allocation12], %s95
      %s98 = sshll.u32 [#allocation13], 4
      %s99 = int_to_ptr.vmem [resolvable:$true] %s98
      %101 = dma.hbm_to_vmem [thread:$0]  %s9, 32, %s99, [#allocation12]
    $region37: #{tpu_custom_call.1} parent=1 // pred_fallthru
      _
    // Predicated region
    $region38: #{tpu_custom_call.1} parent=1 // pred_check
      _
    $region39: #{tpu_custom_call.1} parent=1 // pred_check_branch
      %103 = sbr.rel (0) target = $region41
    $region40: #{tpu_custom_call.1} parent=1 // pred_region
      %s105 = ssub.s32 32, 32
      %106 = vsyncadd [#allocation15], %s105
      %s108 = sshll.u32 [#allocation14], 4
      %s109 = int_to_ptr.vmem [resolvable:$true] %s108
      %111 = dma.hbm_to_vmem [thread:$0]  %s10, 32, %s109, [#allocation15]
    $region41: #{tpu_custom_call.1} parent=1 // pred_fallthru
      _
    // Predicated region
    $region42: #{tpu_custom_call.1} parent=1 // pred_check
      _
    $region43: #{tpu_custom_call.1} parent=1 // pred_check_branch
      %113 = sbr.rel (0) target = $region45
    $region44: #{tpu_custom_call.1} parent=1 // pred_region
      %s115 = ssub.s32 32, 32
      %116 = vsyncadd [#allocation15], %s115
      %s118 = sshll.u32 [#allocation16], 4
      %s119 = int_to_ptr.vmem [resolvable:$true] %s118
      %121 = dma.hbm_to_vmem [thread:$0]  %s11, 32, %s119, [#allocation15]
    $region45: #{tpu_custom_call.1} parent=1 // pred_fallthru
      _
    // Predicated region
    $region46: #{tpu_custom_call.1} parent=1 // pred_check
      _
    $region47: #{tpu_custom_call.1} parent=1 // pred_check_branch
      %123 = sbr.rel (0) target = $region49
    $region48: #{tpu_custom_call.1} parent=1 // pred_region
      _
    $region49: #{tpu_custom_call.1} parent=1 // pred_fallthru
      _
    // Predicated region
    $region50: #{tpu_custom_call.1} parent=1 // pred_check
      _
    $region51: #{tpu_custom_call.1} parent=1 // pred_check_branch
      %125 = sbr.rel (0) target = $region53
    $region52: #{tpu_custom_call.1} parent=1 // pred_region
      %s127 = ssub.s32 32, 32
      %128 = vsyncadd [#allocation18], %s127
      %s130 = sshll.u32 [#allocation17], 4
      %s131 = int_to_ptr.vmem [resolvable:$true] %s130
      %133 = dma.hbm_to_vmem [thread:$0]  %s13, 32, %s131, [#allocation18]
    $region53: #{tpu_custom_call.1} parent=1 // pred_fallthru
      _
    // Predicated region
    $region54: #{tpu_custom_call.1} parent=1 // pred_check
      _
    $region55: #{tpu_custom_call.1} parent=1 // pred_check_branch
      %135 = sbr.rel (0) target = $region57
    $region56: #{tpu_custom_call.1} parent=1 // pred_region
      %s137 = ssub.s32 32, 32
      %138 = vsyncadd [#allocation18], %s137
      %s140 = sshll.u32 [#allocation19], 4
      %s141 = int_to_ptr.vmem [resolvable:$true] %s140
      %143 = dma.hbm_to_vmem [thread:$0]  %s14, 32, %s141, [#allocation18]
    $region57: #{tpu_custom_call.1} parent=1 // pred_fallthru
      _
    // Predicated region
    $region58: #{tpu_custom_call.1} parent=1 // pred_check
      _
    $region59: #{tpu_custom_call.1} parent=1 // pred_check_branch
      %145 = sbr.rel (0) target = $region61
    $region60: #{tpu_custom_call.1} parent=1 // pred_region
      %s147 = ssub.s32 32, 32
      %148 = vsyncadd [#allocation21], %s147
      %s150 = sshll.u32 [#allocation20], 4
      %s151 = int_to_ptr.vmem [resolvable:$true] %s150
      %153 = dma.hbm_to_vmem [thread:$0]  %s15, 32, %s151, [#allocation21]
    $region61: #{tpu_custom_call.1} parent=1 // pred_fallthru
      _
    // Predicated region
    $region62: #{tpu_custom_call.1} parent=1 // pred_check
      _
    $region63: #{tpu_custom_call.1} parent=1 // pred_check_branch
      %155 = sbr.rel (0) target = $region65
    $region64: #{tpu_custom_call.1} parent=1 // pred_region
      %s157 = ssub.s32 512, 512
      %158 = vsyncadd [#allocation21], %s157
      %s159 = sshll.u32 [#allocation22], 4
      %s160 = int_to_ptr.vmem [resolvable:$true] %s159
      %165 = dma.hbm_to_vmem [thread:$0]  %s16, 512, %s160, [#allocation21], 64, 64, 4
    $region65: #{tpu_custom_call.1} parent=1 // pred_fallthru
      _
    // Predicated region
    $region66: #{tpu_custom_call.1} parent=1 // pred_check
      _
    $region67: #{tpu_custom_call.1} parent=1 // pred_check_branch
      %167 = sbr.rel (0) target = $region69
    $region68: #{tpu_custom_call.1} parent=1 // pred_region
      %s169 = ssub.s32 32, 32
      %170 = vsyncadd [#allocation24], %s169
      %s172 = sshll.u32 [#allocation23], 4
      %s173 = int_to_ptr.vmem [resolvable:$true] %s172
      %175 = dma.hbm_to_vmem [thread:$0]  %s17, 32, %s173, [#allocation24]
    $region69: #{tpu_custom_call.1} parent=1 // pred_fallthru
      _
    // Predicated region
    $region70: #{tpu_custom_call.1} parent=1 // pred_check
      _
    $region71: #{tpu_custom_call.1} parent=1 // pred_check_branch
      %177 = sbr.rel (0) target = $region73
    $region72: #{tpu_custom_call.1} parent=1 // pred_region
      _
    $region73: #{tpu_custom_call.1} parent=1 // pred_fallthru
      _
    // Predicated region
    $region74: #{tpu_custom_call.1} parent=1 // pred_check
      _
    $region75: #{tpu_custom_call.1} parent=1 // pred_check_branch
      %179 = sbr.rel (0) target = $region77
    $region76: #{tpu_custom_call.1} parent=1 // pred_region
      _
    $region77: #{tpu_custom_call.1} parent=1 // pred_fallthru
      _
    // Predicated region
    $region78: #{tpu_custom_call.1} parent=1 // pred_check
      _
    $region79: #{tpu_custom_call.1} parent=1 // pred_check_branch
      %181 = sbr.rel (0) target = $region81
    $region80: #{tpu_custom_call.1} parent=1 // pred_region
      _
    $region81: #{tpu_custom_call.1} parent=1 // pred_fallthru
      _
    // Predicated region
    $region82: #{tpu_custom_call.1} parent=1 // pred_check
      _
    $region83: #{tpu_custom_call.1} parent=1 // pred_check_branch
      %183 = sbr.rel (0) target = $region85
    $region84: #{tpu_custom_call.1} parent=1 // pred_region
      %s185 = ssub.s32 16, 16
      %186 = vsyncadd [#allocation24], %s185
      %s188 = sshll.u32 [#allocation25], 4
      %s189 = int_to_ptr.vmem [resolvable:$true] %s188
      %191 = dma.hbm_to_vmem [thread:$0]  %s21, 16, %s189, [#allocation24]
    $region85: #{tpu_custom_call.1} parent=1 // pred_fallthru
      _
    // Predicated region
    $region86: #{tpu_custom_call.1} parent=1 // pred_check
      _
    $region87: #{tpu_custom_call.1} parent=1 // pred_check_branch
      %193 = sbr.rel (0) target = $region89
    $region88: #{tpu_custom_call.1} parent=1 // pred_region
      _
    $region89: #{tpu_custom_call.1} parent=1 // pred_fallthru
      _
    // Predicated region
    $region90: #{tpu_custom_call.1} parent=1 // pred_check
      _
    $region91: #{tpu_custom_call.1} parent=1 // pred_check_branch
      %195 = sbr.rel (0) target = $region93
    $region92: #{tpu_custom_call.1} parent=1 // pred_region
      %196 = dma.done [#allocation6], 256
    $region93: #{tpu_custom_call.1} parent=1 // pred_fallthru
      _
    // Predicated region
    $region94: #{tpu_custom_call.1} parent=1 // pred_check
      _
    $region95: #{tpu_custom_call.1} parent=1 // pred_check_branch
      %198 = sbr.rel (0) target = $region97
    $region96: #{tpu_custom_call.1} parent=1 // pred_region
      %199 = dma.done [#allocation9], 256
    $region97: #{tpu_custom_call.1} parent=1 // pred_fallthru
      _
    // Predicated region
    $region98: #{tpu_custom_call.1} parent=1 // pred_check
      _
    $region99: #{tpu_custom_call.1} parent=1 // pred_check_branch
      %201 = sbr.rel (0) target = $region101
    $region100: #{tpu_custom_call.1} parent=1 // pred_region
      %202 = dma.done [#allocation9], 32
    $region101: #{tpu_custom_call.1} parent=1 // pred_fallthru
      _
    // Predicated region
    $region102: #{tpu_custom_call.1} parent=1 // pred_check
      _
    $region103: #{tpu_custom_call.1} parent=1 // pred_check_branch
      %204 = sbr.rel (0) target = $region105
    $region104: #{tpu_custom_call.1} parent=1 // pred_region
      %205 = dma.done [#allocation12], 32
    $region105: #{tpu_custom_call.1} parent=1 // pred_fallthru
      _
    // Predicated region
    $region106: #{tpu_custom_call.1} parent=1 // pred_check
      _
    $region107: #{tpu_custom_call.1} parent=1 // pred_check_branch
      %207 = sbr.rel (0) target = $region109
    $region108: #{tpu_custom_call.1} parent=1 // pred_region
      %208 = dma.done [#allocation12], 32
    $region109: #{tpu_custom_call.1} parent=1 // pred_fallthru
      _
    // Predicated region
    $region110: #{tpu_custom_call.1} parent=1 // pred_check
      _
    $region111: #{tpu_custom_call.1} parent=1 // pred_check_branch
      %210 = sbr.rel (0) target = $region113
    $region112: #{tpu_custom_call.1} parent=1 // pred_region
      %211 = dma.done [#allocation15], 32
    $region113: #{tpu_custom_call.1} parent=1 // pred_fallthru
      _
    // Predicated region
    $region114: #{tpu_custom_call.1} parent=1 // pred_check
      _
    $region115: #{tpu_custom_call.1} parent=1 // pred_check_branch
      %213 = sbr.rel (0) target = $region117
    $region116: #{tpu_custom_call.1} parent=1 // pred_region
      %214 = dma.done [#allocation15], 32
    $region117: #{tpu_custom_call.1} parent=1 // pred_fallthru
      _
    // Predicated region
    $region118: #{tpu_custom_call.1} parent=1 // pred_check
      _
    $region119: #{tpu_custom_call.1} parent=1 // pred_check_branch
      %216 = sbr.rel (0) target = $region121
    $region120: #{tpu_custom_call.1} parent=1 // pred_region
      %217 = dma.done [#allocation18], 32
    $region121: #{tpu_custom_call.1} parent=1 // pred_fallthru
      _
    // Predicated region
    $region122: #{tpu_custom_call.1} parent=1 // pred_check
      _
    $region123: #{tpu_custom_call.1} parent=1 // pred_check_branch
      %219 = sbr.rel (0) target = $region125
    $region124: #{tpu_custom_call.1} parent=1 // pred_region
      %220 = dma.done [#allocation18], 32
    $region125: #{tpu_custom_call.1} parent=1 // pred_fallthru
      _
    // Predicated region
    $region126: #{tpu_custom_call.1} parent=1 // pred_check
      _
    $region127: #{tpu_custom_call.1} parent=1 // pred_check_branch
      %222 = sbr.rel (0) target = $region129
    $region128: #{tpu_custom_call.1} parent=1 // pred_region
      %223 = dma.done [#allocation21], 32
    $region129: #{tpu_custom_call.1} parent=1 // pred_fallthru
      _
    // Predicated region
    $region130: #{tpu_custom_call.1} parent=1 // pred_check
      _
    $region131: #{tpu_custom_call.1} parent=1 // pred_check_branch
      %225 = sbr.rel (0) target = $region133
    $region132: #{tpu_custom_call.1} parent=1 // pred_region
      %226 = dma.done [#allocation21], 512
    $region133: #{tpu_custom_call.1} parent=1 // pred_fallthru
      _
    // Predicated region
    $region134: #{tpu_custom_call.1} parent=1 // pred_check
      _
    $region135: #{tpu_custom_call.1} parent=1 // pred_check_branch
      %228 = sbr.rel (0) target = $region137
    $region136: #{tpu_custom_call.1} parent=1 // pred_region
      %229 = dma.done [#allocation24], 32
    $region137: #{tpu_custom_call.1} parent=1 // pred_fallthru
      _
    // Predicated region
    $region138: #{tpu_custom_call.1} parent=1 // pred_check
      _
    $region139: #{tpu_custom_call.1} parent=1 // pred_check_branch
      %231 = sbr.rel (0) target = $region141
    $region140: #{tpu_custom_call.1} parent=1 // pred_region
      %232 = dma.done [#allocation24], 16
    $region141: #{tpu_custom_call.1} parent=1 // pred_fallthru
      _
    %v234 = vld [vmem:[#allocation5] sm:$0xff]
    %v235 = vld [vmem:[#allocation5 + $0x8] sm:$0xff]
    %v236 = vld [vmem:[#allocation8] sm:$0xff]
    %v237 = vld [vmem:[#allocation8 + $0x8] sm:$0xff]
    %v238 = vadd.f32 %v234, %v236
    %v239 = vadd.f32 %v235, %v237
    %v240 = vld [vmem:[%s3] sm:$0xff]
    %v241 = vld [vmem:[%s3 + $0x8] sm:$0xff]
    %v242 = vld [vmem:[%s3 + $0x10] sm:$0xff]
    %v243 = vld [vmem:[%s3 + $0x18] sm:$0xff]
    %v244 = vld [vmem:[%s3 + $0x20] sm:$0xff]
    %v245 = vld [vmem:[%s3 + $0x28] sm:$0xff]
    %v246 = vld [vmem:[%s3 + $0x30] sm:$0xff]
    %v247 = vld [vmem:[%s3 + $0x38] sm:$0xff]
    %v248 = vld [vmem:[#allocation10] sm:$0x1]
    %v249 = vld [vmem:[#allocation11] sm:$0x1]
    %vm250 = vcmask 261120
    %v251 = vsel %vm250, %v238, 0.0
    %252 = vadd.xlane.f32.xlu0 %v251
    %v253 = vpop.xlane.xlu0 %252
    %v254 = vsel %vm250, %v239, 0.0
    %255 = vadd.xlane.f32.xlu0 %v254
    %v256 = vpop.xlane.xlu0 %255
    %v257 = vrcp.pop 32.0
    %v258 = vmul.f32 %v253, %v257
    %v259 = vmul.f32 %v256, %v257
    %v260 = vsub.f32 %v238, %v258
    %v261 = vsub.f32 %v239, %v259
    %v262 = vmul.f32 %v260, %v260
    %v263 = vmul.f32 %v261, %v261
    %v264 = vsel %vm250, %v262, 0.0
    %265 = vadd.xlane.f32.xlu0 %v264
    %v266 = vpop.xlane.xlu0 %265
    %v267 = vsel %vm250, %v263, 0.0
    %268 = vadd.xlane.f32.xlu0 %v267
    %v269 = vpop.xlane.xlu0 %268
    %v270 = vmul.f32 %v266, %v257
    %v271 = vmul.f32 %v269, %v257
    %v272 = vadd.f32 %v270, 1e-05
    %v273 = vadd.f32 %v271, 1e-05
    %v274 = vrsqrt.pop %v272
    %v275 = vrsqrt.pop %v273
    %v276 = vmul.f32 %v260, %v274
    %v277 = vmul.f32 %v261, %v275
    %v278 = vlaneseq
    %v279 = vshrl.u32 %v278, 7
    %v280 = vsub.s32 0, %v279
    %v281 = vrot.slane %v248, %v280
    %v282 = vmul.f32 %v276, %v281
    %v283 = vmul.f32 %v277, %v281
    %v284 = vlaneseq
    %v285 = vshrl.u32 %v284, 7
    %v286 = vsub.s32 0, %v285
    %v287 = vrot.slane %v249, %v286
    %v288 = vadd.f32 %v282, %v287
    %v289 = vadd.f32 %v283, %v287
    %v290 = vpack.c.bf16 %v289, %v288
    %v291 = vld [vmem:[%s6] sm:$0xf]
    %v292 = vld [vmem:[%s6 + $0x4] sm:$0xf]
    %v293 = vld [vmem:[%s6 + $0x8] sm:$0xf]
    %v294 = vld [vmem:[%s6 + $0xc] sm:$0xf]
    %v295 = vld [vmem:[#allocation13] sm:$0x1]
    %v296 = vlaneseq
    %v297 = vshrl.u32 %v296, 7
    %v298 = vsub.s32 0, %v297
    %v299 = vrot.slane %v295, %v298
    %v304 = vunpack.c.l.b16 %v291
    %v305 = vunpack.c.l.b16 %v292
    %v306 = vunpack.c.l.b16 %v293
    %v307 = vunpack.c.l.b16 %v294
    %v308 = vpack.c.b16 %v305, %v304
    %v309 = vpack.c.b16 %v307, %v306
    %v313 = vsel %vm250, %v290, 0
    %315 = vmatprep.subr.bf16.mxu0 0
    %316 = vmatpush1.bf16.msra.mxu0 %v308
    %317 = vmatprep.subr.bf16.mxu0 0
    %318 = vmatpush1.bf16.msra.mxu0 %v309
    %319 = vmatprep.subr.bf16.mxu0 0
    %320 = vmatpush1.bf16.msra.mxu0 0
    %321 = vmatprep.subr.bf16.mxu0 0
    %322 = vmatpush1.bf16.msra.mxu0 0
    %323 = vmatprep.subr.bf16.mxu0 0
    %324 = vmatpush1.bf16.msra.mxu0 0
    %325 = vmatprep.subr.bf16.mxu0 0
    %326 = vmatpush1.bf16.msra.mxu0 0
    %327 = vmatprep.subr.bf16.mxu0 0
    %328 = vmatpush1.bf16.msra.mxu0 0
    %329 = vmatprep.subr.bf16.mxu0 0
    %330 = vmatpush1.bf16.msra.mxu0 0
    %331 = vmatprep.subr.bf16.mxu0 0
    %332 = vmatpush1.bf16.msra.mxu0 0
    %333 = vmatprep.subr.bf16.mxu0 0
    %334 = vmatpush1.bf16.msra.mxu0 0
    %335 = vmatprep.subr.bf16.mxu0 0
    %336 = vmatpush1.bf16.msra.mxu0 0
    %337 = vmatprep.subr.bf16.mxu0 0
    %338 = vmatpush1.bf16.msra.mxu0 0
    %339 = vmatprep.subr.bf16.mxu0 0
    %340 = vmatpush1.bf16.msra.mxu0 0
    %341 = vmatprep.subr.bf16.mxu0 0
    %342 = vmatpush1.bf16.msra.mxu0 0
    %343 = vmatprep.subr.bf16.mxu0 0
    %344 = vmatpush1.bf16.msra.mxu0 0
    %345 = vmatprep.subr.bf16.mxu0 0
    %346 = vmatpush1.bf16.msra.mxu0 0
    %347 = vmatprep.mubr.bf16.mxu0 0
    %348 = vmatmul.mubr.bf16.gmra.mrb[0].mxu0 %v313
    %v349 = vpop.f32.mrb[0].mxu0
    %v350 = vadd.f32 %v299, %v349
    %v351 = vpop.f32.mrb[0].mxu0
    %v352 = vpop.f32.mrb[0].mxu0
    %v353 = vadd.f32 %v299, %v352
    %v354 = vpop.f32.mrb[0].mxu0
    %355 = vdwg.mxu0
    %v356 = vmul.f32 %v350, 0.35355338
    %v357 = vmul.f32 %v353, 0.35355338
    %v358 = vld [vmem:[%s7] sm:$0xf]
    %v359 = vld [vmem:[%s7 + $0x4] sm:$0xf]
    %v360 = vld [vmem:[%s7 + $0x8] sm:$0xf]
    %v361 = vld [vmem:[%s7 + $0xc] sm:$0xf]
    %v362 = vld [vmem:[#allocation14] sm:$0x1]
    %v363 = vlaneseq
    %v364 = vshrl.u32 %v363, 7
    %v365 = vsub.s32 0, %v364
    %v366 = vrot.slane %v362, %v365
    %v371 = vunpack.c.l.b16 %v358
    %v372 = vunpack.c.l.b16 %v359
    %v373 = vunpack.c.l.b16 %v360
    %v374 = vunpack.c.l.b16 %v361
    %v375 = vpack.c.b16 %v372, %v371
    %v376 = vpack.c.b16 %v374, %v373
    %379 = vmatprep.subr.bf16.mxu0 0
    %380 = vmatpush1.bf16.msra.mxu0 %v375
    %381 = vmatprep.subr.bf16.mxu0 0
    %382 = vmatpush1.bf16.msra.mxu0 %v376
    %383 = vmatprep.subr.bf16.mxu0 0
    %384 = vmatpush1.bf16.msra.mxu0 0
    %385 = vmatprep.subr.bf16.mxu0 0
    %386 = vmatpush1.bf16.msra.mxu0 0
    %387 = vmatprep.subr.bf16.mxu0 0
    %388 = vmatpush1.bf16.msra.mxu0 0
    %389 = vmatprep.subr.bf16.mxu0 0
    %390 = vmatpush1.bf16.msra.mxu0 0
    %391 = vmatprep.subr.bf16.mxu0 0
    %392 = vmatpush1.bf16.msra.mxu0 0
    %393 = vmatprep.subr.bf16.mxu0 0
    %394 = vmatpush1.bf16.msra.mxu0 0
    %395 = vmatprep.subr.bf16.mxu0 0
    %396 = vmatpush1.bf16.msra.mxu0 0
    %397 = vmatprep.subr.bf16.mxu0 0
    %398 = vmatpush1.bf16.msra.mxu0 0
    %399 = vmatprep.subr.bf16.mxu0 0
    %400 = vmatpush1.bf16.msra.mxu0 0
    %401 = vmatprep.subr.bf16.mxu0 0
    %402 = vmatpush1.bf16.msra.mxu0 0
    %403 = vmatprep.subr.bf16.mxu0 0
    %404 = vmatpush1.bf16.msra.mxu0 0
    %405 = vmatprep.subr.bf16.mxu0 0
    %406 = vmatpush1.bf16.msra.mxu0 0
    %407 = vmatprep.subr.bf16.mxu0 0
    %408 = vmatpush1.bf16.msra.mxu0 0
    %409 = vmatprep.subr.bf16.mxu0 0
    %410 = vmatpush1.bf16.msra.mxu0 0
    %411 = vmatprep.mubr.bf16.mxu0 0
    %412 = vmatmul.mubr.bf16.gmra.mrb[0].mxu0 %v313
    %v413 = vpop.f32.mrb[0].mxu0
    %v414 = vadd.f32 %v366, %v413
    %v415 = vpop.f32.mrb[0].mxu0
    %v416 = vpop.f32.mrb[0].mxu0
    %v417 = vadd.f32 %v366, %v416
    %v418 = vpop.f32.mrb[0].mxu0
    %419 = vdwg.mxu0
    %v420 = vld [vmem:[%s8] sm:$0xf]
    %v421 = vld [vmem:[%s8 + $0x4] sm:$0xf]
    %v422 = vld [vmem:[%s8 + $0x8] sm:$0xf]
    %v423 = vld [vmem:[%s8 + $0xc] sm:$0xf]
    %v424 = vld [vmem:[#allocation16] sm:$0x1]
    %v425 = vlaneseq
    %v426 = vshrl.u32 %v425, 7
    %v427 = vsub.s32 0, %v426
    %v428 = vrot.slane %v424, %v427
    %v433 = vunpack.c.l.b16 %v420
    %v434 = vunpack.c.l.b16 %v421
    %v435 = vunpack.c.l.b16 %v422
    %v436 = vunpack.c.l.b16 %v423
    %v437 = vpack.c.b16 %v434, %v433
    %v438 = vpack.c.b16 %v436, %v435
    %441 = vmatprep.subr.bf16.mxu0 0
    %442 = vmatpush1.bf16.msra.mxu0 %v437
    %443 = vmatprep.subr.bf16.mxu0 0
    %444 = vmatpush1.bf16.msra.mxu0 %v438
    %445 = vmatprep.subr.bf16.mxu0 0
    %446 = vmatpush1.bf16.msra.mxu0 0
    %447 = vmatprep.subr.bf16.mxu0 0
    %448 = vmatpush1.bf16.msra.mxu0 0
    %449 = vmatprep.subr.bf16.mxu0 0
    %450 = vmatpush1.bf16.msra.mxu0 0
    %451 = vmatprep.subr.bf16.mxu0 0
    %452 = vmatpush1.bf16.msra.mxu0 0
    %453 = vmatprep.subr.bf16.mxu0 0
    %454 = vmatpush1.bf16.msra.mxu0 0
    %455 = vmatprep.subr.bf16.mxu0 0
    %456 = vmatpush1.bf16.msra.mxu0 0
    %457 = vmatprep.subr.bf16.mxu0 0
    %458 = vmatpush1.bf16.msra.mxu0 0
    %459 = vmatprep.subr.bf16.mxu0 0
    %460 = vmatpush1.bf16.msra.mxu0 0
    %461 = vmatprep.subr.bf16.mxu0 0
    %462 = vmatpush1.bf16.msra.mxu0 0
    %463 = vmatprep.subr.bf16.mxu0 0
    %464 = vmatpush1.bf16.msra.mxu0 0
    %465 = vmatprep.subr.bf16.mxu0 0
    %466 = vmatpush1.bf16.msra.mxu0 0
    %467 = vmatprep.subr.bf16.mxu0 0
    %468 = vmatpush1.bf16.msra.mxu0 0
    %469 = vmatprep.subr.bf16.mxu0 0
    %470 = vmatpush1.bf16.msra.mxu0 0
    %471 = vmatprep.subr.bf16.mxu0 0
    %472 = vmatpush1.bf16.msra.mxu0 0
    %473 = vmatprep.mubr.bf16.mxu0 0
    %474 = vmatmul.mubr.bf16.gmra.mrb[0].mxu0 %v313
    %v475 = vpop.f32.mrb[0].mxu0
    %v476 = vadd.f32 %v428, %v475
    %v477 = vpop.f32.mrb[0].mxu0
    %v478 = vpop.f32.mrb[0].mxu0
    %v479 = vadd.f32 %v428, %v478
    %v480 = vpop.f32.mrb[0].mxu0
    %481 = vdwg.mxu0
    %483 = vrot.lane.b32.xlu0 %v356, 120
    %v484 = vpop.permute.xlu0 %483
    %486 = vrot.lane.b32.xlu0 %v356, 112
    %v487 = vpop.permute.xlu0 %486
    %489 = vrot.lane.b32.xlu0 %v356, 104
    %v490 = vpop.permute.xlu0 %489
    %493 = vrot.lane.b32.xlu0 %v357, 120
    %v494 = vpop.permute.xlu0 %493
    %496 = vrot.lane.b32.xlu0 %v357, 112
    %v497 = vpop.permute.xlu0 %496
    %499 = vrot.lane.b32.xlu0 %v357, 104
    %v500 = vpop.permute.xlu0 %499
    %v502 = vpack.c.bf16 %v484, %v356
    %v503 = vpack.c.bf16 %v490, %v487
    %v504 = vpack.c.bf16 %v494, %v357
    %v505 = vpack.c.bf16 %v500, %v497
    %507 = vrot.lane.b32.xlu0 %v414, 120
    %v508 = vpop.permute.xlu0 %507
    %510 = vrot.lane.b32.xlu0 %v414, 112
    %v511 = vpop.permute.xlu0 %510
    %513 = vrot.lane.b32.xlu0 %v414, 104
    %v514 = vpop.permute.xlu0 %513
    %517 = vrot.lane.b32.xlu0 %v417, 120
    %v518 = vpop.permute.xlu0 %517
    %520 = vrot.lane.b32.xlu0 %v417, 112
    %v521 = vpop.permute.xlu0 %520
    %523 = vrot.lane.b32.xlu0 %v417, 104
    %v524 = vpop.permute.xlu0 %523
    %v526 = vpack.c.bf16 %v508, %v414
    %v527 = vpack.c.bf16 %v514, %v511
    %v528 = vpack.c.bf16 %v518, %v417
    %v529 = vpack.c.bf16 %v524, %v521
    %531 = vrot.lane.b32.xlu0 %v476, 120
    %v532 = vpop.permute.xlu0 %531
    %534 = vrot.lane.b32.xlu0 %v476, 112
    %v535 = vpop.permute.xlu0 %534
    %537 = vrot.lane.b32.xlu0 %v476, 104
    %v538 = vpop.permute.xlu0 %537
    %541 = vrot.lane.b32.xlu0 %v479, 120
    %v542 = vpop.permute.xlu0 %541
    %544 = vrot.lane.b32.xlu0 %v479, 112
    %v545 = vpop.permute.xlu0 %544
    %547 = vrot.lane.b32.xlu0 %v479, 104
    %v548 = vpop.permute.xlu0 %547
    %v550 = vpack.c.bf16 %v532, %v476
    %v551 = vpack.c.bf16 %v538, %v535
    %v552 = vpack.c.bf16 %v542, %v479
    %v553 = vpack.c.bf16 %v548, %v545
    %vm554 = vcmask 64512
    %v556 = vsel %vm554, %v502, 0
    %v559 = vsel %vm554, %v503, 0
    %v562 = vsel %vm554, %v504, 0
    %v565 = vsel %vm554, %v505, 0
    %v568 = vsel %vm554, %v526, 0
    %v571 = vsel %vm554, %v527, 0
    %v574 = vsel %vm554, %v528, 0
    %v577 = vsel %vm554, %v529, 0
    %579 = vmatprep.subr.bf16.mxu0 0
    %580 = vmatpush1.bf16.xpose.msra.mxu0 %v568
    %581 = vmatprep.subr.bf16.mxu0 0
    %582 = vmatpush1.bf16.xpose.msra.mxu0 %v571
    %583 = vmatprep.subr.bf16.mxu0 0
    %584 = vmatpush1.bf16.xpose.msra.mxu0 %v574
    %585 = vmatprep.subr.bf16.mxu0 0
    %586 = vmatpush1.bf16.xpose.msra.mxu0 %v577
    %587 = vmatprep.subr.bf16.mxu0 0
    %588 = vmatpush1.bf16.xpose.msra.mxu0 0
    %589 = vmatprep.subr.bf16.mxu0 0
    %590 = vmatpush1.bf16.xpose.msra.mxu0 0
    %591 = vmatprep.subr.bf16.mxu0 0
    %592 = vmatpush1.bf16.xpose.msra.mxu0 0
    %593 = vmatprep.subr.bf16.mxu0 0
    %594 = vmatpush1.bf16.xpose.msra.mxu0 0
    %595 = vmatprep.subr.bf16.mxu0 0
    %596 = vmatpush1.bf16.xpose.msra.mxu0 0
    %597 = vmatprep.subr.bf16.mxu0 0
    %598 = vmatpush1.bf16.xpose.msra.mxu0 0
    %599 = vmatprep.subr.bf16.mxu0 0
    %600 = vmatpush1.bf16.xpose.msra.mxu0 0
    %601 = vmatprep.subr.bf16.mxu0 0
    %602 = vmatpush1.bf16.xpose.msra.mxu0 0
    %603 = vmatprep.subr.bf16.mxu0 0
    %604 = vmatpush1.bf16.xpose.msra.mxu0 0
    %605 = vmatprep.subr.bf16.mxu0 0
    %606 = vmatpush1.bf16.xpose.msra.mxu0 0
    %607 = vmatprep.subr.bf16.mxu0 0
    %608 = vmatpush1.bf16.xpose.msra.mxu0 0
    %609 = vmatprep.subr.bf16.mxu0 0
    %610 = vmatpush1.bf16.xpose.msra.mxu0 0
    %611 = vmatprep.mubr.bf16.mxu0 0
    %612 = vmatmul.mubr.bf16.gmra.mrb[0].mxu0 %v556
    %v613 = vpop.f32.mrb[0].mxu0
    %v614 = vadd.f32 %v240, %v613
    %v615 = vpop.f32.mrb[0].mxu0
    %v616 = vpop.f32.mrb[0].mxu0
    %v617 = vadd.f32 %v241, %v616
    %v618 = vpop.f32.mrb[0].mxu0
    %619 = vmatprep.mubr.bf16.mxu0 0
    %620 = vmatmul.mubr.bf16.gmra.mrb[0].mxu0 %v559
    %v621 = vpop.f32.mrb[0].mxu0
    %v622 = vadd.f32 %v242, %v621
    %v623 = vpop.f32.mrb[0].mxu0
    %v624 = vpop.f32.mrb[0].mxu0
    %v625 = vadd.f32 %v243, %v624
    %v626 = vpop.f32.mrb[0].mxu0
    %627 = vmatprep.mubr.bf16.mxu0 0
    %628 = vmatmul.mubr.bf16.gmra.mrb[0].mxu0 %v562
    %v629 = vpop.f32.mrb[0].mxu0
    %v630 = vadd.f32 %v244, %v629
    %v631 = vpop.f32.mrb[0].mxu0
    %v632 = vpop.f32.mrb[0].mxu0
    %v633 = vadd.f32 %v245, %v632
    %v634 = vpop.f32.mrb[0].mxu0
    %635 = vmatprep.mubr.bf16.mxu0 0
    %636 = vmatmul.mubr.bf16.gmra.mrb[0].mxu0 %v565
    %v637 = vpop.f32.mrb[0].mxu0
    %v638 = vadd.f32 %v246, %v637
    %v639 = vpop.f32.mrb[0].mxu0
    %v640 = vpop.f32.mrb[0].mxu0
    %v641 = vadd.f32 %v247, %v640
    %v642 = vpop.f32.mrb[0].mxu0
    %643 = vdwg.mxu0
    %vm644 = vcmask 523264
    %v645 = vsel %vm644, %v614, -inf
    %646 = vmax.xlane.f32.xlu0 %v645
    %v647 = vpop.xlane.xlu0 %646
    %v648 = vsel %vm644, %v617, -inf
    %649 = vmax.xlane.f32.xlu0 %v648
    %v650 = vpop.xlane.xlu0 %649
    %v651 = vsel %vm644, %v622, -inf
    %652 = vmax.xlane.f32.xlu0 %v651
    %v653 = vpop.xlane.xlu0 %652
    %v654 = vsel %vm644, %v625, -inf
    %655 = vmax.xlane.f32.xlu0 %v654
    %v656 = vpop.xlane.xlu0 %655
    %v657 = vsel %vm644, %v630, -inf
    %658 = vmax.xlane.f32.xlu0 %v657
    %v659 = vpop.xlane.xlu0 %658
    %v660 = vsel %vm644, %v633, -inf
    %661 = vmax.xlane.f32.xlu0 %v660
    %v662 = vpop.xlane.xlu0 %661
    %v663 = vsel %vm644, %v638, -inf
    %664 = vmax.xlane.f32.xlu0 %v663
    %v665 = vpop.xlane.xlu0 %664
    %v666 = vsel %vm644, %v641, -inf
    %667 = vmax.xlane.f32.xlu0 %v666
    %v668 = vpop.xlane.xlu0 %667
    %v669 = vsub.f32 %v614, %v647
    %v670 = vsub.f32 %v617, %v650
    %v671 = vsub.f32 %v622, %v653
    %v672 = vsub.f32 %v625, %v656
    %v673 = vsub.f32 %v630, %v659
    %v674 = vsub.f32 %v633, %v662
    %v675 = vsub.f32 %v638, %v665
    %v676 = vsub.f32 %v641, %v668
    %v677 = vmul.f32 %v669, 1.442695
    %v678 = vpow.pop %v677
    %v679 = vmul.f32 %v670, 1.442695
    %v680 = vpow.pop %v679
    %v681 = vmul.f32 %v671, 1.442695
    %v682 = vpow.pop %v681
    %v683 = vmul.f32 %v672, 1.442695
    %v684 = vpow.pop %v683
    %v685 = vmul.f32 %v673, 1.442695
    %v686 = vpow.pop %v685
    %v687 = vmul.f32 %v674, 1.442695
    %v688 = vpow.pop %v687
    %v689 = vmul.f32 %v675, 1.442695
    %v690 = vpow.pop %v689
    %v691 = vmul.f32 %v676, 1.442695
    %v692 = vpow.pop %v691
    %v693 = vsel %vm644, %v678, 0.0
    %694 = vadd.xlane.f32.xlu0 %v693
    %v695 = vpop.xlane.xlu0 %694
    %v696 = vsel %vm644, %v680, 0.0
    %697 = vadd.xlane.f32.xlu0 %v696
    %v698 = vpop.xlane.xlu0 %697
    %v699 = vsel %vm644, %v682, 0.0
    %700 = vadd.xlane.f32.xlu0 %v699
    %v701 = vpop.xlane.xlu0 %700
    %v702 = vsel %vm644, %v684, 0.0
    %703 = vadd.xlane.f32.xlu0 %v702
    %v704 = vpop.xlane.xlu0 %703
    %v705 = vsel %vm644, %v686, 0.0
    %706 = vadd.xlane.f32.xlu0 %v705
    %v707 = vpop.xlane.xlu0 %706
    %v708 = vsel %vm644, %v688, 0.0
    %709 = vadd.xlane.f32.xlu0 %v708
    %v710 = vpop.xlane.xlu0 %709
    %v711 = vsel %vm644, %v690, 0.0
    %712 = vadd.xlane.f32.xlu0 %v711
    %v713 = vpop.xlane.xlu0 %712
    %v714 = vsel %vm644, %v692, 0.0
    %715 = vadd.xlane.f32.xlu0 %v714
    %v716 = vpop.xlane.xlu0 %715
    %v717 = vrcp.pop %v695
    %v718 = vrcp.pop %v698
    %v719 = vrcp.pop %v701
    %v720 = vrcp.pop %v704
    %v721 = vrcp.pop %v707
    %v722 = vrcp.pop %v710
    %v723 = vrcp.pop %v713
    %v724 = vrcp.pop %v716
    %v725 = vmul.f32 %v678, %v717
    %v726 = vmul.f32 %v680, %v718
    %v727 = vmul.f32 %v682, %v719
    %v728 = vmul.f32 %v684, %v720
    %v729 = vmul.f32 %v686, %v721
    %v730 = vmul.f32 %v688, %v722
    %v731 = vmul.f32 %v690, %v723
    %v732 = vmul.f32 %v692, %v724
    %v733 = vpack.c.bf16 %v726, %v725
    %v734 = vpack.c.bf16 %v728, %v727
    %v735 = vpack.c.bf16 %v730, %v729
    %v736 = vpack.c.bf16 %v732, %v731
    %v738 = vsel %vm644, %v733, 0
    %v741 = vsel %vm644, %v734, 0
    %v744 = vsel %vm644, %v735, 0
    %v747 = vsel %vm644, %v736, 0
    %749 = vmatprep.subr.bf16.mxu0 0
    %750 = vmatpush1.bf16.msra.mxu0 %v550
    %751 = vmatprep.subr.bf16.mxu0 0
    %752 = vmatpush1.bf16.msra.mxu0 %v551
    %753 = vmatprep.subr.bf16.mxu0 0
    %754 = vmatpush1.bf16.msra.mxu0 %v552
    %755 = vmatprep.subr.bf16.mxu0 0
    %756 = vmatpush1.bf16.msra.mxu0 %v553
    %757 = vmatprep.subr.bf16.mxu0 0
    %758 = vmatpush1.bf16.msra.mxu0 0
    %759 = vmatprep.subr.bf16.mxu0 0
    %760 = vmatpush1.bf16.msra.mxu0 0
    %761 = vmatprep.subr.bf16.mxu0 0
    %762 = vmatpush1.bf16.msra.mxu0 0
    %763 = vmatprep.subr.bf16.mxu0 0
    %764 = vmatpush1.bf16.msra.mxu0 0
    %765 = vmatprep.subr.bf16.mxu0 0
    %766 = vmatpush1.bf16.msra.mxu0 0
    %767 = vmatprep.subr.bf16.mxu0 0
    %768 = vmatpush1.bf16.msra.mxu0 0
    %769 = vmatprep.subr.bf16.mxu0 0
    %770 = vmatpush1.bf16.msra.mxu0 0
    %771 = vmatprep.subr.bf16.mxu0 0
    %772 = vmatpush1.bf16.msra.mxu0 0
    %773 = vmatprep.subr.bf16.mxu0 0
    %774 = vmatpush1.bf16.msra.mxu0 0
    %775 = vmatprep.subr.bf16.mxu0 0
    %776 = vmatpush1.bf16.msra.mxu0 0
    %777 = vmatprep.subr.bf16.mxu0 0
    %778 = vmatpush1.bf16.msra.mxu0 0
    %779 = vmatprep.subr.bf16.mxu0 0
    %780 = vmatpush1.bf16.msra.mxu0 0
    %781 = vmatprep.mubr.bf16.mxu0 0
    %782 = vmatmul.mubr.bf16.gmra.mrb[0].mxu0 %v738
    %v783 = vpop.f32.mrb[0].mxu0
    %v784 = vadd.f32 0.0, %v783
    %v785 = vpop.f32.mrb[0].mxu0
    %v786 = vpop.f32.mrb[0].mxu0
    %v787 = vadd.f32 0.0, %v786
    %v788 = vpop.f32.mrb[0].mxu0
    %789 = vmatprep.mubr.bf16.mxu0 0
    %790 = vmatmul.mubr.bf16.gmra.mrb[0].mxu0 %v741
    %v791 = vpop.f32.mrb[0].mxu0
    %v792 = vadd.f32 0.0, %v791
    %v793 = vpop.f32.mrb[0].mxu0
    %v794 = vpop.f32.mrb[0].mxu0
    %v795 = vadd.f32 0.0, %v794
    %v796 = vpop.f32.mrb[0].mxu0
    %797 = vmatprep.mubr.bf16.mxu0 0
    %798 = vmatmul.mubr.bf16.gmra.mrb[0].mxu0 %v744
    %v799 = vpop.f32.mrb[0].mxu0
    %v800 = vadd.f32 0.0, %v799
    %v801 = vpop.f32.mrb[0].mxu0
    %v802 = vpop.f32.mrb[0].mxu0
    %v803 = vadd.f32 0.0, %v802
    %v804 = vpop.f32.mrb[0].mxu0
    %805 = vmatprep.mubr.bf16.mxu0 0
    %806 = vmatmul.mubr.bf16.gmra.mrb[0].mxu0 %v747
    %v807 = vpop.f32.mrb[0].mxu0
    %v808 = vadd.f32 0.0, %v807
    %v809 = vpop.f32.mrb[0].mxu0
    %v810 = vpop.f32.mrb[0].mxu0
    %v811 = vadd.f32 0.0, %v810
    %v812 = vpop.f32.mrb[0].mxu0
    %813 = vdwg.mxu0
    %815 = vrot.lane.b32.xlu0 %v787, 8
    %v816 = vpop.permute.xlu0 %815
    %819 = vrot.lane.b32.xlu0 %v792, 16
    %v820 = vpop.permute.xlu0 %819
    %823 = vrot.lane.b32.xlu0 %v795, 24
    %v824 = vpop.permute.xlu0 %823
    %v826 = vsel %vm554, %v784, %v816
    %vm827 = vcmask 130048
    %v828 = vsel %vm827, %v826, %v820
    %vm829 = vcmask 195584
    %v830 = vsel %vm829, %v828, %v824
    %832 = vrot.lane.b32.xlu0 %v803, 8
    %v833 = vpop.permute.xlu0 %832
    %836 = vrot.lane.b32.xlu0 %v808, 16
    %v837 = vpop.permute.xlu0 %836
    %840 = vrot.lane.b32.xlu0 %v811, 24
    %v841 = vpop.permute.xlu0 %840
    %v843 = vsel %vm554, %v800, %v833
    %v844 = vsel %vm827, %v843, %v837
    %v845 = vsel %vm829, %v844, %v841
    %v846 = vpack.c.bf16 %v845, %v830
    %v847 = vld [vmem:[%s12] sm:$0xf]
    %v848 = vld [vmem:[%s12 + $0x4] sm:$0xf]
    %v849 = vld [vmem:[%s12 + $0x8] sm:$0xf]
    %v850 = vld [vmem:[%s12 + $0xc] sm:$0xf]
    %v851 = vld [vmem:[#allocation17] sm:$0x1]
    %v852 = vlaneseq
    %v853 = vshrl.u32 %v852, 7
    %v854 = vsub.s32 0, %v853
    %v855 = vrot.slane %v851, %v854
    %v860 = vunpack.c.l.b16 %v847
    %v861 = vunpack.c.l.b16 %v848
    %v862 = vunpack.c.l.b16 %v849
    %v863 = vunpack.c.l.b16 %v850
    %v864 = vpack.c.b16 %v861, %v860
    %v865 = vpack.c.b16 %v863, %v862
    %v869 = vsel %vm250, %v846, 0
    %871 = vmatprep.subr.bf16.mxu0 0
    %872 = vmatpush1.bf16.msra.mxu0 %v864
    %873 = vmatprep.subr.bf16.mxu0 0
    %874 = vmatpush1.bf16.msra.mxu0 %v865
    %875 = vmatprep.subr.bf16.mxu0 0
    %876 = vmatpush1.bf16.msra.mxu0 0
    %877 = vmatprep.subr.bf16.mxu0 0
    %878 = vmatpush1.bf16.msra.mxu0 0
    %879 = vmatprep.subr.bf16.mxu0 0
    %880 = vmatpush1.bf16.msra.mxu0 0
    %881 = vmatprep.subr.bf16.mxu0 0
    %882 = vmatpush1.bf16.msra.mxu0 0
    %883 = vmatprep.subr.bf16.mxu0 0
    %884 = vmatpush1.bf16.msra.mxu0 0
    %885 = vmatprep.subr.bf16.mxu0 0
    %886 = vmatpush1.bf16.msra.mxu0 0
    %887 = vmatprep.subr.bf16.mxu0 0
    %888 = vmatpush1.bf16.msra.mxu0 0
    %889 = vmatprep.subr.bf16.mxu0 0
    %890 = vmatpush1.bf16.msra.mxu0 0
    %891 = vmatprep.subr.bf16.mxu0 0
    %892 = vmatpush1.bf16.msra.mxu0 0
    %893 = vmatprep.subr.bf16.mxu0 0
    %894 = vmatpush1.bf16.msra.mxu0 0
    %895 = vmatprep.subr.bf16.mxu0 0
    %896 = vmatpush1.bf16.msra.mxu0 0
    %897 = vmatprep.subr.bf16.mxu0 0
    %898 = vmatpush1.bf16.msra.mxu0 0
    %899 = vmatprep.subr.bf16.mxu0 0
    %900 = vmatpush1.bf16.msra.mxu0 0
    %901 = vmatprep.subr.bf16.mxu0 0
    %902 = vmatpush1.bf16.msra.mxu0 0
    %903 = vmatprep.mubr.bf16.mxu0 0
    %904 = vmatmul.mubr.bf16.gmra.mrb[0].mxu0 %v869
    %v905 = vpop.f32.mrb[0].mxu0
    %v906 = vadd.f32 %v855, %v905
    %v907 = vpop.f32.mrb[0].mxu0
    %v908 = vpop.f32.mrb[0].mxu0
    %v909 = vadd.f32 %v855, %v908
    %v910 = vpop.f32.mrb[0].mxu0
    %911 = vdwg.mxu0
    %v912 = vadd.f32 %v238, %v906
    %v913 = vadd.f32 %v239, %v909
    %v914 = vld [vmem:[#allocation19] sm:$0x1]
    %v915 = vld [vmem:[#allocation20] sm:$0x1]
    %v916 = vsel %vm250, %v912, 0.0
    %917 = vadd.xlane.f32.xlu0 %v916
    %v918 = vpop.xlane.xlu0 %917
    %v919 = vsel %vm250, %v913, 0.0
    %920 = vadd.xlane.f32.xlu0 %v919
    %v921 = vpop.xlane.xlu0 %920
    %v922 = vmul.f32 %v918, %v257
    %v923 = vmul.f32 %v921, %v257
    %v924 = vsub.f32 %v912, %v922
    %v925 = vsub.f32 %v913, %v923
    %v926 = vmul.f32 %v924, %v924
    %v927 = vmul.f32 %v925, %v925
    %v928 = vsel %vm250, %v926, 0.0
    %929 = vadd.xlane.f32.xlu0 %v928
    %v930 = vpop.xlane.xlu0 %929
    %v931 = vsel %vm250, %v927, 0.0
    %932 = vadd.xlane.f32.xlu0 %v931
    %v933 = vpop.xlane.xlu0 %932
    %v934 = vmul.f32 %v930, %v257
    %v935 = vmul.f32 %v933, %v257
    %v936 = vadd.f32 %v934, 1e-05
    %v937 = vadd.f32 %v935, 1e-05
    %v938 = vrsqrt.pop %v936
    %v939 = vrsqrt.pop %v937
    %v940 = vmul.f32 %v924, %v938
    %v941 = vmul.f32 %v925, %v939
    %v942 = vlaneseq
    %v943 = vshrl.u32 %v942, 7
    %v944 = vsub.s32 0, %v943
    %v945 = vrot.slane %v914, %v944
    %v946 = vmul.f32 %v940, %v945
    %v947 = vmul.f32 %v941, %v945
    %v948 = vlaneseq
    %v949 = vshrl.u32 %v948, 7
    %v950 = vsub.s32 0, %v949
    %v951 = vrot.slane %v915, %v950
    %v952 = vadd.f32 %v946, %v951
    %v953 = vadd.f32 %v947, %v951
    %v954 = vpack.c.bf16 %v953, %v952
    %v955 = vld [vmem:[#allocation22] sm:$0xf]
    %v956 = vld [vmem:[#allocation22 + $0x4] sm:$0xf]
    %v957 = vld [vmem:[#allocation22 + $0x8] sm:$0xf]
    %v958 = vld [vmem:[#allocation22 + $0xc] sm:$0xf]
    %v959 = vld [vmem:[#allocation23] sm:$0x1]
    %v960 = vlaneseq
    %v961 = vshrl.u32 %v960, 7
    %v962 = vsub.s32 0, %v961
    %v963 = vrot.slane %v959, %v962
    %v968 = vunpack.c.l.b16 %v955
    %v969 = vunpack.c.l.b16 %v956
    %v970 = vunpack.c.l.b16 %v957
    %v971 = vunpack.c.l.b16 %v958
    %v972 = vpack.c.b16 %v969, %v968
    %v973 = vpack.c.b16 %v971, %v970
    %v977 = vsel %vm250, %v954, 0
    %979 = vmatprep.subr.bf16.mxu0 0
    %980 = vmatpush1.bf16.msra.mxu0 %v972
    %981 = vmatprep.subr.bf16.mxu0 0
    %982 = vmatpush1.bf16.msra.mxu0 %v973
    %983 = vmatprep.subr.bf16.mxu0 0
    %984 = vmatpush1.bf16.msra.mxu0 0
    %985 = vmatprep.subr.bf16.mxu0 0
    %986 = vmatpush1.bf16.msra.mxu0 0
    %987 = vmatprep.subr.bf16.mxu0 0
    %988 = vmatpush1.bf16.msra.mxu0 0
    %989 = vmatprep.subr.bf16.mxu0 0
    %990 = vmatpush1.bf16.msra.mxu0 0
    %991 = vmatprep.subr.bf16.mxu0 0
    %992 = vmatpush1.bf16.msra.mxu0 0
    %993 = vmatprep.subr.bf16.mxu0 0
    %994 = vmatpush1.bf16.msra.mxu0 0
    %995 = vmatprep.subr.bf16.mxu0 0
    %996 = vmatpush1.bf16.msra.mxu0 0
    %997 = vmatprep.subr.bf16.mxu0 0
    %998 = vmatpush1.bf16.msra.mxu0 0
    %999 = vmatprep.subr.bf16.mxu0 0
    %1000 = vmatpush1.bf16.msra.mxu0 0
    %1001 = vmatprep.subr.bf16.mxu0 0
    %1002 = vmatpush1.bf16.msra.mxu0 0
    %1003 = vmatprep.subr.bf16.mxu0 0
    %1004 = vmatpush1.bf16.msra.mxu0 0
    %1005 = vmatprep.subr.bf16.mxu0 0
    %1006 = vmatpush1.bf16.msra.mxu0 0
    %1007 = vmatprep.subr.bf16.mxu0 0
    %1008 = vmatpush1.bf16.msra.mxu0 0
    %1009 = vmatprep.subr.bf16.mxu0 0
    %1010 = vmatpush1.bf16.msra.mxu0 0
    %1011 = vmatprep.mubr.bf16.mxu0 0
    %1012 = vmatmul.mubr.bf16.gmra.mrb[0].mxu0 %v977
    %v1013 = vpop.f32.mrb[0].mxu0
    %v1014 = vadd.f32 %v963, %v1013
    %v1015 = vpop.f32.mrb[0].mxu0
    %v1016 = vpop.f32.mrb[0].mxu0
    %v1017 = vadd.f32 %v963, %v1016
    %v1018 = vpop.f32.mrb[0].mxu0
    %1019 = vdwg.mxu0
    %v1020 = vmul.f32 %v1014, 1.702
    %v1021 = vmul.f32 %v1017, 1.702
    %v1022 = vxor.u32 %v1020, 2147483648
    %v1023 = vxor.u32 %v1021, 2147483648
    %v1024 = vmul.f32 %v1022, 1.442695
    %v1025 = vpow.pop %v1024
    %v1026 = vmul.f32 %v1023, 1.442695
    %v1027 = vpow.pop %v1026
    %v1028 = vadd.f32 %v1025, 1.0
    %v1029 = vadd.f32 %v1027, 1.0
    %v1030 = vrcp.pop %v1028
    %v1031 = vmul.f32 1.0, %v1030
    %v1032 = vrcp.pop %v1029
    %v1033 = vmul.f32 1.0, %v1032
    %v1034 = vmul.f32 %v1014, %v1031
    %v1035 = vmul.f32 %v1017, %v1033
    %v1036 = vpack.c.bf16 %v1035, %v1034
    %v1037 = vld [vmem:[%s18] sm:$0xf]
    %v1038 = vld [vmem:[%s18 + $0x4] sm:$0xf]
    %v1039 = vld [vmem:[%s18 + $0x8] sm:$0xf]
    %v1040 = vld [vmem:[%s18 + $0xc] sm:$0xf]
    %v1041 = vld [vmem:[%s18 + $0x10] sm:$0xf]
    %v1042 = vld [vmem:[%s18 + $0x14] sm:$0xf]
    %v1043 = vld [vmem:[%s18 + $0x18] sm:$0xf]
    %v1044 = vld [vmem:[%s18 + $0x1c] sm:$0xf]
    %v1045 = vld [vmem:[%s18 + $0x20] sm:$0xf]
    %v1046 = vld [vmem:[%s18 + $0x24] sm:$0xf]
    %v1047 = vld [vmem:[%s18 + $0x28] sm:$0xf]
    %v1048 = vld [vmem:[%s18 + $0x2c] sm:$0xf]
    %v1049 = vld [vmem:[%s18 + $0x30] sm:$0xf]
    %v1050 = vld [vmem:[%s18 + $0x34] sm:$0xf]
    %v1051 = vld [vmem:[%s18 + $0x38] sm:$0xf]
    %v1052 = vld [vmem:[%s18 + $0x3c] sm:$0xf]
    %v1053 = vld [vmem:[%s19] sm:$0x1]
    %v1054 = vlaneseq
    %v1055 = vshrl.u32 %v1054, 7
    %v1056 = vsub.s32 0, %v1055
    %v1057 = vrot.slane %v1053, %v1056
    %v1074 = vunpack.c.l.b16 %v1037
    %v1075 = vunpack.c.l.b16 %v1038
    %v1076 = vunpack.c.l.b16 %v1039
    %v1077 = vunpack.c.l.b16 %v1040
    %v1078 = vunpack.c.l.b16 %v1041
    %v1079 = vunpack.c.l.b16 %v1042
    %v1080 = vunpack.c.l.b16 %v1043
    %v1081 = vunpack.c.l.b16 %v1044
    %v1082 = vunpack.c.l.b16 %v1045
    %v1083 = vunpack.c.l.b16 %v1046
    %v1084 = vunpack.c.l.b16 %v1047
    %v1085 = vunpack.c.l.b16 %v1048
    %v1086 = vunpack.c.l.b16 %v1049
    %v1087 = vunpack.c.l.b16 %v1050
    %v1088 = vunpack.c.l.b16 %v1051
    %v1089 = vunpack.c.l.b16 %v1052
    %v1090 = vpack.c.b16 %v1075, %v1074
    %v1091 = vpack.c.b16 %v1077, %v1076
    %v1092 = vpack.c.b16 %v1079, %v1078
    %v1093 = vpack.c.b16 %v1081, %v1080
    %v1094 = vpack.c.b16 %v1083, %v1082
    %v1095 = vpack.c.b16 %v1085, %v1084
    %v1096 = vpack.c.b16 %v1087, %v1086
    %v1097 = vpack.c.b16 %v1089, %v1088
    %1106 = vmatprep.subr.bf16.mxu0 0
    %1107 = vmatpush1.bf16.msra.mxu0 %v1090
    %1108 = vmatprep.subr.bf16.mxu0 0
    %1109 = vmatpush1.bf16.msra.mxu0 %v1091
    %1110 = vmatprep.subr.bf16.mxu0 0
    %1111 = vmatpush1.bf16.msra.mxu0 %v1092
    %1112 = vmatprep.subr.bf16.mxu0 0
    %1113 = vmatpush1.bf16.msra.mxu0 %v1093
    %1114 = vmatprep.subr.bf16.mxu0 0
    %1115 = vmatpush1.bf16.msra.mxu0 %v1094
    %1116 = vmatprep.subr.bf16.mxu0 0
    %1117 = vmatpush1.bf16.msra.mxu0 %v1095
    %1118 = vmatprep.subr.bf16.mxu0 0
    %1119 = vmatpush1.bf16.msra.mxu0 %v1096
    %1120 = vmatprep.subr.bf16.mxu0 0
    %1121 = vmatpush1.bf16.msra.mxu0 %v1097
    %1122 = vmatprep.subr.bf16.mxu0 0
    %1123 = vmatpush1.bf16.msra.mxu0 0
    %1124 = vmatprep.subr.bf16.mxu0 0
    %1125 = vmatpush1.bf16.msra.mxu0 0
    %1126 = vmatprep.subr.bf16.mxu0 0
    %1127 = vmatpush1.bf16.msra.mxu0 0
    %1128 = vmatprep.subr.bf16.mxu0 0
    %1129 = vmatpush1.bf16.msra.mxu0 0
    %1130 = vmatprep.subr.bf16.mxu0 0
    %1131 = vmatpush1.bf16.msra.mxu0 0
    %1132 = vmatprep.subr.bf16.mxu0 0
    %1133 = vmatpush1.bf16.msra.mxu0 0
    %1134 = vmatprep.subr.bf16.mxu0 0
    %1135 = vmatpush1.bf16.msra.mxu0 0
    %1136 = vmatprep.subr.bf16.mxu0 0
    %1137 = vmatpush1.bf16.msra.mxu0 0
    %1138 = vmatprep.mubr.bf16.mxu0 0
    %1139 = vmatmul.mubr.bf16.gmra.mrb[0].mxu0 %v1036
    %v1140 = vpop.f32.mrb[0].mxu0
    %v1141 = vadd.f32 %v1057, %v1140
    %v1142 = vpop.f32.mrb[0].mxu0
    %v1143 = vpop.f32.mrb[0].mxu0
    %v1144 = vadd.f32 %v1057, %v1143
    %v1145 = vpop.f32.mrb[0].mxu0
    %1146 = vdwg.mxu0
    %v1147 = vadd.f32 %v912, %v1141
    %v1148 = vadd.f32 %v913, %v1144
    %v1149 = vld [vmem:[#allocation10 + $0x1] sm:$0x1]
    %v1150 = vld [vmem:[#allocation11 + $0x1] sm:$0x1]
    %v1151 = vsel %vm250, %v1147, 0.0
    %1152 = vadd.xlane.f32.xlu0 %v1151
    %v1153 = vpop.xlane.xlu0 %1152
    %v1154 = vsel %vm250, %v1148, 0.0
    %1155 = vadd.xlane.f32.xlu0 %v1154
    %v1156 = vpop.xlane.xlu0 %1155
    %v1157 = vmul.f32 %v1153, %v257
    %v1158 = vmul.f32 %v1156, %v257
    %v1159 = vsub.f32 %v1147, %v1157
    %v1160 = vsub.f32 %v1148, %v1158
    %v1161 = vmul.f32 %v1159, %v1159
    %v1162 = vmul.f32 %v1160, %v1160
    %v1163 = vsel %vm250, %v1161, 0.0
    %1164 = vadd.xlane.f32.xlu0 %v1163
    %v1165 = vpop.xlane.xlu0 %1164
    %v1166 = vsel %vm250, %v1162, 0.0
    %1167 = vadd.xlane.f32.xlu0 %v1166
    %v1168 = vpop.xlane.xlu0 %1167
    %v1169 = vmul.f32 %v1165, %v257
    %v1170 = vmul.f32 %v1168, %v257
    %v1171 = vadd.f32 %v1169, 1e-05
    %v1172 = vadd.f32 %v1170, 1e-05
    %v1173 = vrsqrt.pop %v1171
    %v1174 = vrsqrt.pop %v1172
    %v1175 = vmul.f32 %v1159, %v1173
    %v1176 = vmul.f32 %v1160, %v1174
    %v1177 = vlaneseq
    %v1178 = vshrl.u32 %v1177, 7
    %v1179 = vsub.s32 0, %v1178
    %v1180 = vrot.slane %v1149, %v1179
    %v1181 = vmul.f32 %v1175, %v1180
    %v1182 = vmul.f32 %v1176, %v1180
    %v1183 = vlaneseq
    %v1184 = vshrl.u32 %v1183, 7
    %v1185 = vsub.s32 0, %v1184
    %v1186 = vrot.slane %v1150, %v1185
    %v1187 = vadd.f32 %v1181, %v1186
    %v1188 = vadd.f32 %v1182, %v1186
    %v1189 = vpack.c.bf16 %v1188, %v1187
    %s1190 = scalar_lea.vmem %s6, 16
    %v1191 = vld [vmem:[%s1190] sm:$0xf]
    %v1192 = vld [vmem:[%s1190 + $0x4] sm:$0xf]
    %v1193 = vld [vmem:[%s1190 + $0x8] sm:$0xf]
    %v1194 = vld [vmem:[%s1190 + $0xc] sm:$0xf]
    %v1195 = vld [vmem:[#allocation13 + $0x1] sm:$0x1]
    %v1196 = vlaneseq
    %v1197 = vshrl.u32 %v1196, 7
    %v1198 = vsub.s32 0, %v1197
    %v1199 = vrot.slane %v1195, %v1198
    %v1204 = vunpack.c.l.b16 %v1191
    %v1205 = vunpack.c.l.b16 %v1192
    %v1206 = vunpack.c.l.b16 %v1193
    %v1207 = vunpack.c.l.b16 %v1194
    %v1208 = vpack.c.b16 %v1205, %v1204
    %v1209 = vpack.c.b16 %v1207, %v1206
    %v1213 = vsel %vm250, %v1189, 0
    %1215 = vmatprep.subr.bf16.mxu0 0
    %1216 = vmatpush1.bf16.msra.mxu0 %v1208
    %1217 = vmatprep.subr.bf16.mxu0 0
    %1218 = vmatpush1.bf16.msra.mxu0 %v1209
    %1219 = vmatprep.subr.bf16.mxu0 0
    %1220 = vmatpush1.bf16.msra.mxu0 0
    %1221 = vmatprep.subr.bf16.mxu0 0
    %1222 = vmatpush1.bf16.msra.mxu0 0
    %1223 = vmatprep.subr.bf16.mxu0 0
    %1224 = vmatpush1.bf16.msra.mxu0 0
    %1225 = vmatprep.subr.bf16.mxu0 0
    %1226 = vmatpush1.bf16.msra.mxu0 0
    %1227 = vmatprep.subr.bf16.mxu0 0
    %1228 = vmatpush1.bf16.msra.mxu0 0
    %1229 = vmatprep.subr.bf16.mxu0 0
    %1230 = vmatpush1.bf16.msra.mxu0 0
    %1231 = vmatprep.subr.bf16.mxu0 0
    %1232 = vmatpush1.bf16.msra.mxu0 0
    %1233 = vmatprep.subr.bf16.mxu0 0
    %1234 = vmatpush1.bf16.msra.mxu0 0
    %1235 = vmatprep.subr.bf16.mxu0 0
    %1236 = vmatpush1.bf16.msra.mxu0 0
    %1237 = vmatprep.subr.bf16.mxu0 0
    %1238 = vmatpush1.bf16.msra.mxu0 0
    %1239 = vmatprep.subr.bf16.mxu0 0
    %1240 = vmatpush1.bf16.msra.mxu0 0
    %1241 = vmatprep.subr.bf16.mxu0 0
    %1242 = vmatpush1.bf16.msra.mxu0 0
    %1243 = vmatprep.subr.bf16.mxu0 0
    %1244 = vmatpush1.bf16.msra.mxu0 0
    %1245 = vmatprep.subr.bf16.mxu0 0
    %1246 = vmatpush1.bf16.msra.mxu0 0
    %1247 = vmatprep.mubr.bf16.mxu0 0
    %1248 = vmatmul.mubr.bf16.gmra.mrb[0].mxu0 %v1213
    %v1249 = vpop.f32.mrb[0].mxu0
    %v1250 = vadd.f32 %v1199, %v1249
    %v1251 = vpop.f32.mrb[0].mxu0
    %v1252 = vpop.f32.mrb[0].mxu0
    %v1253 = vadd.f32 %v1199, %v1252
    %v1254 = vpop.f32.mrb[0].mxu0
    %1255 = vdwg.mxu0
    %v1256 = vmul.f32 %v1250, 0.35355338
    %v1257 = vmul.f32 %v1253, 0.35355338
    %s1258 = scalar_lea.vmem %s7, 16
    %v1259 = vld [vmem:[%s1258] sm:$0xf]
    %v1260 = vld [vmem:[%s1258 + $0x4] sm:$0xf]
    %v1261 = vld [vmem:[%s1258 + $0x8] sm:$0xf]
    %v1262 = vld [vmem:[%s1258 + $0xc] sm:$0xf]
    %v1263 = vld [vmem:[#allocation14 + $0x1] sm:$0x1]
    %v1264 = vlaneseq
    %v1265 = vshrl.u32 %v1264, 7
    %v1266 = vsub.s32 0, %v1265
    %v1267 = vrot.slane %v1263, %v1266
    %v1272 = vunpack.c.l.b16 %v1259
    %v1273 = vunpack.c.l.b16 %v1260
    %v1274 = vunpack.c.l.b16 %v1261
    %v1275 = vunpack.c.l.b16 %v1262
    %v1276 = vpack.c.b16 %v1273, %v1272
    %v1277 = vpack.c.b16 %v1275, %v1274
    %1280 = vmatprep.subr.bf16.mxu0 0
    %1281 = vmatpush1.bf16.msra.mxu0 %v1276
    %1282 = vmatprep.subr.bf16.mxu0 0
    %1283 = vmatpush1.bf16.msra.mxu0 %v1277
    %1284 = vmatprep.subr.bf16.mxu0 0
    %1285 = vmatpush1.bf16.msra.mxu0 0
    %1286 = vmatprep.subr.bf16.mxu0 0
    %1287 = vmatpush1.bf16.msra.mxu0 0
    %1288 = vmatprep.subr.bf16.mxu0 0
    %1289 = vmatpush1.bf16.msra.mxu0 0
    %1290 = vmatprep.subr.bf16.mxu0 0
    %1291 = vmatpush1.bf16.msra.mxu0 0
    %1292 = vmatprep.subr.bf16.mxu0 0
    %1293 = vmatpush1.bf16.msra.mxu0 0
    %1294 = vmatprep.subr.bf16.mxu0 0
    %1295 = vmatpush1.bf16.msra.mxu0 0
    %1296 = vmatprep.subr.bf16.mxu0 0
    %1297 = vmatpush1.bf16.msra.mxu0 0
    %1298 = vmatprep.subr.bf16.mxu0 0
    %1299 = vmatpush1.bf16.msra.mxu0 0
    %1300 = vmatprep.subr.bf16.mxu0 0
    %1301 = vmatpush1.bf16.msra.mxu0 0
    %1302 = vmatprep.subr.bf16.mxu0 0
    %1303 = vmatpush1.bf16.msra.mxu0 0
    %1304 = vmatprep.subr.bf16.mxu0 0
    %1305 = vmatpush1.bf16.msra.mxu0 0
    %1306 = vmatprep.subr.bf16.mxu0 0
    %1307 = vmatpush1.bf16.msra.mxu0 0
    %1308 = vmatprep.subr.bf16.mxu0 0
    %1309 = vmatpush1.bf16.msra.mxu0 0
    %1310 = vmatprep.subr.bf16.mxu0 0
    %1311 = vmatpush1.bf16.msra.mxu0 0
    %1312 = vmatprep.mubr.bf16.mxu0 0
    %1313 = vmatmul.mubr.bf16.gmra.mrb[0].mxu0 %v1213
    %v1314 = vpop.f32.mrb[0].mxu0
    %v1315 = vadd.f32 %v1267, %v1314
    %v1316 = vpop.f32.mrb[0].mxu0
    %v1317 = vpop.f32.mrb[0].mxu0
    %v1318 = vadd.f32 %v1267, %v1317
    %v1319 = vpop.f32.mrb[0].mxu0
    %1320 = vdwg.mxu0
    %s1321 = scalar_lea.vmem %s8, 16
    %v1322 = vld [vmem:[%s1321] sm:$0xf]
    %v1323 = vld [vmem:[%s1321 + $0x4] sm:$0xf]
    %v1324 = vld [vmem:[%s1321 + $0x8] sm:$0xf]
    %v1325 = vld [vmem:[%s1321 + $0xc] sm:$0xf]
    %v1326 = vld [vmem:[#allocation16 + $0x1] sm:$0x1]
    %v1327 = vlaneseq
    %v1328 = vshrl.u32 %v1327, 7
    %v1329 = vsub.s32 0, %v1328
    %v1330 = vrot.slane %v1326, %v1329
    %v1335 = vunpack.c.l.b16 %v1322
    %v1336 = vunpack.c.l.b16 %v1323
    %v1337 = vunpack.c.l.b16 %v1324
    %v1338 = vunpack.c.l.b16 %v1325
    %v1339 = vpack.c.b16 %v1336, %v1335
    %v1340 = vpack.c.b16 %v1338, %v1337
    %1343 = vmatprep.subr.bf16.mxu0 0
    %1344 = vmatpush1.bf16.msra.mxu0 %v1339
    %1345 = vmatprep.subr.bf16.mxu0 0
    %1346 = vmatpush1.bf16.msra.mxu0 %v1340
    %1347 = vmatprep.subr.bf16.mxu0 0
    %1348 = vmatpush1.bf16.msra.mxu0 0
    %1349 = vmatprep.subr.bf16.mxu0 0
    %1350 = vmatpush1.bf16.msra.mxu0 0
    %1351 = vmatprep.subr.bf16.mxu0 0
    %1352 = vmatpush1.bf16.msra.mxu0 0
    %1353 = vmatprep.subr.bf16.mxu0 0
    %1354 = vmatpush1.bf16.msra.mxu0 0
    %1355 = vmatprep.subr.bf16.mxu0 0
    %1356 = vmatpush1.bf16.msra.mxu0 0
    %1357 = vmatprep.subr.bf16.mxu0 0
    %1358 = vmatpush1.bf16.msra.mxu0 0
    %1359 = vmatprep.subr.bf16.mxu0 0
    %1360 = vmatpush1.bf16.msra.mxu0 0
    %1361 = vmatprep.subr.bf16.mxu0 0
    %1362 = vmatpush1.bf16.msra.mxu0 0
    %1363 = vmatprep.subr.bf16.mxu0 0
    %1364 = vmatpush1.bf16.msra.mxu0 0
    %1365 = vmatprep.subr.bf16.mxu0 0
    %1366 = vmatpush1.bf16.msra.mxu0 0
    %1367 = vmatprep.subr.bf16.mxu0 0
    %1368 = vmatpush1.bf16.msra.mxu0 0
    %1369 = vmatprep.subr.bf16.mxu0 0
    %1370 = vmatpush1.bf16.msra.mxu0 0
    %1371 = vmatprep.subr.bf16.mxu0 0
    %1372 = vmatpush1.bf16.msra.mxu0 0
    %1373 = vmatprep.subr.bf16.mxu0 0
    %1374 = vmatpush1.bf16.msra.mxu0 0
    %1375 = vmatprep.mubr.bf16.mxu0 0
    %1376 = vmatmul.mubr.bf16.gmra.mrb[0].mxu0 %v1213
    %v1377 = vpop.f32.mrb[0].mxu0
    %v1378 = vadd.f32 %v1330, %v1377
    %v1379 = vpop.f32.mrb[0].mxu0
    %v1380 = vpop.f32.mrb[0].mxu0
    %v1381 = vadd.f32 %v1330, %v1380
    %v1382 = vpop.f32.mrb[0].mxu0
    %1383 = vdwg.mxu0
    %1385 = vrot.lane.b32.xlu0 %v1256, 120
    %v1386 = vpop.permute.xlu0 %1385
    %1388 = vrot.lane.b32.xlu0 %v1256, 112
    %v1389 = vpop.permute.xlu0 %1388
    %1391 = vrot.lane.b32.xlu0 %v1256, 104
    %v1392 = vpop.permute.xlu0 %1391
    %1395 = vrot.lane.b32.xlu0 %v1257, 120
    %v1396 = vpop.permute.xlu0 %1395
    %1398 = vrot.lane.b32.xlu0 %v1257, 112
    %v1399 = vpop.permute.xlu0 %1398
    %1401 = vrot.lane.b32.xlu0 %v1257, 104
    %v1402 = vpop.permute.xlu0 %1401
    %v1404 = vpack.c.bf16 %v1386, %v1256
    %v1405 = vpack.c.bf16 %v1392, %v1389
    %v1406 = vpack.c.bf16 %v1396, %v1257
    %v1407 = vpack.c.bf16 %v1402, %v1399
    %1409 = vrot.lane.b32.xlu0 %v1315, 120
    %v1410 = vpop.permute.xlu0 %1409
    %1412 = vrot.lane.b32.xlu0 %v1315, 112
    %v1413 = vpop.permute.xlu0 %1412
    %1415 = vrot.lane.b32.xlu0 %v1315, 104
    %v1416 = vpop.permute.xlu0 %1415
    %1419 = vrot.lane.b32.xlu0 %v1318, 120
    %v1420 = vpop.permute.xlu0 %1419
    %1422 = vrot.lane.b32.xlu0 %v1318, 112
    %v1423 = vpop.permute.xlu0 %1422
    %1425 = vrot.lane.b32.xlu0 %v1318, 104
    %v1426 = vpop.permute.xlu0 %1425
    %v1428 = vpack.c.bf16 %v1410, %v1315
    %v1429 = vpack.c.bf16 %v1416, %v1413
    %v1430 = vpack.c.bf16 %v1420, %v1318
    %v1431 = vpack.c.bf16 %v1426, %v1423
    %1433 = vrot.lane.b32.xlu0 %v1378, 120
    %v1434 = vpop.permute.xlu0 %1433
    %1436 = vrot.lane.b32.xlu0 %v1378, 112
    %v1437 = vpop.permute.xlu0 %1436
    %1439 = vrot.lane.b32.xlu0 %v1378, 104
    %v1440 = vpop.permute.xlu0 %1439
    %1443 = vrot.lane.b32.xlu0 %v1381, 120
    %v1444 = vpop.permute.xlu0 %1443
    %1446 = vrot.lane.b32.xlu0 %v1381, 112
    %v1447 = vpop.permute.xlu0 %1446
    %1449 = vrot.lane.b32.xlu0 %v1381, 104
    %v1450 = vpop.permute.xlu0 %1449
    %v1452 = vpack.c.bf16 %v1434, %v1378
    %v1453 = vpack.c.bf16 %v1440, %v1437
    %v1454 = vpack.c.bf16 %v1444, %v1381
    %v1455 = vpack.c.bf16 %v1450, %v1447
    %v1457 = vsel %vm554, %v1404, 0
    %v1460 = vsel %vm554, %v1405, 0
    %v1463 = vsel %vm554, %v1406, 0
    %v1466 = vsel %vm554, %v1407, 0
    %v1469 = vsel %vm554, %v1428, 0
    %v1472 = vsel %vm554, %v1429, 0
    %v1475 = vsel %vm554, %v1430, 0
    %v1478 = vsel %vm554, %v1431, 0
    %1480 = vmatprep.subr.bf16.mxu0 0
    %1481 = vmatpush1.bf16.xpose.msra.mxu0 %v1469
    %1482 = vmatprep.subr.bf16.mxu0 0
    %1483 = vmatpush1.bf16.xpose.msra.mxu0 %v1472
    %1484 = vmatprep.subr.bf16.mxu0 0
    %1485 = vmatpush1.bf16.xpose.msra.mxu0 %v1475
    %1486 = vmatprep.subr.bf16.mxu0 0
    %1487 = vmatpush1.bf16.xpose.msra.mxu0 %v1478
    %1488 = vmatprep.subr.bf16.mxu0 0
    %1489 = vmatpush1.bf16.xpose.msra.mxu0 0
    %1490 = vmatprep.subr.bf16.mxu0 0
    %1491 = vmatpush1.bf16.xpose.msra.mxu0 0
    %1492 = vmatprep.subr.bf16.mxu0 0
    %1493 = vmatpush1.bf16.xpose.msra.mxu0 0
    %1494 = vmatprep.subr.bf16.mxu0 0
    %1495 = vmatpush1.bf16.xpose.msra.mxu0 0
    %1496 = vmatprep.subr.bf16.mxu0 0
    %1497 = vmatpush1.bf16.xpose.msra.mxu0 0
    %1498 = vmatprep.subr.bf16.mxu0 0
    %1499 = vmatpush1.bf16.xpose.msra.mxu0 0
    %1500 = vmatprep.subr.bf16.mxu0 0
    %1501 = vmatpush1.bf16.xpose.msra.mxu0 0
    %1502 = vmatprep.subr.bf16.mxu0 0
    %1503 = vmatpush1.bf16.xpose.msra.mxu0 0
    %1504 = vmatprep.subr.bf16.mxu0 0
    %1505 = vmatpush1.bf16.xpose.msra.mxu0 0
    %1506 = vmatprep.subr.bf16.mxu0 0
    %1507 = vmatpush1.bf16.xpose.msra.mxu0 0
    %1508 = vmatprep.subr.bf16.mxu0 0
    %1509 = vmatpush1.bf16.xpose.msra.mxu0 0
    %1510 = vmatprep.subr.bf16.mxu0 0
    %1511 = vmatpush1.bf16.xpose.msra.mxu0 0
    %1512 = vmatprep.mubr.bf16.mxu0 0
    %1513 = vmatmul.mubr.bf16.gmra.mrb[0].mxu0 %v1457
    %v1514 = vpop.f32.mrb[0].mxu0
    %v1515 = vadd.f32 %v240, %v1514
    %v1516 = vpop.f32.mrb[0].mxu0
    %v1517 = vpop.f32.mrb[0].mxu0
    %v1518 = vadd.f32 %v241, %v1517
    %v1519 = vpop.f32.mrb[0].mxu0
    %1520 = vmatprep.mubr.bf16.mxu0 0
    %1521 = vmatmul.mubr.bf16.gmra.mrb[0].mxu0 %v1460
    %v1522 = vpop.f32.mrb[0].mxu0
    %v1523 = vadd.f32 %v242, %v1522
    %v1524 = vpop.f32.mrb[0].mxu0
    %v1525 = vpop.f32.mrb[0].mxu0
    %v1526 = vadd.f32 %v243, %v1525
    %v1527 = vpop.f32.mrb[0].mxu0
    %1528 = vmatprep.mubr.bf16.mxu0 0
    %1529 = vmatmul.mubr.bf16.gmra.mrb[0].mxu0 %v1463
    %v1530 = vpop.f32.mrb[0].mxu0
    %v1531 = vadd.f32 %v244, %v1530
    %v1532 = vpop.f32.mrb[0].mxu0
    %v1533 = vpop.f32.mrb[0].mxu0
    %v1534 = vadd.f32 %v245, %v1533
    %v1535 = vpop.f32.mrb[0].mxu0
    %1536 = vmatprep.mubr.bf16.mxu0 0
    %1537 = vmatmul.mubr.bf16.gmra.mrb[0].mxu0 %v1466
    %v1538 = vpop.f32.mrb[0].mxu0
    %v1539 = vadd.f32 %v246, %v1538
    %v1540 = vpop.f32.mrb[0].mxu0
    %v1541 = vpop.f32.mrb[0].mxu0
    %v1542 = vadd.f32 %v247, %v1541
    %v1543 = vpop.f32.mrb[0].mxu0
    %1544 = vdwg.mxu0
    %v1545 = vsel %vm644, %v1515, -inf
    %1546 = vmax.xlane.f32.xlu0 %v1545
    %v1547 = vpop.xlane.xlu0 %1546
    %v1548 = vsel %vm644, %v1518, -inf
    %1549 = vmax.xlane.f32.xlu0 %v1548
    %v1550 = vpop.xlane.xlu0 %1549
    %v1551 = vsel %vm644, %v1523, -inf
    %1552 = vmax.xlane.f32.xlu0 %v1551
    %v1553 = vpop.xlane.xlu0 %1552
    %v1554 = vsel %vm644, %v1526, -inf
    %1555 = vmax.xlane.f32.xlu0 %v1554
    %v1556 = vpop.xlane.xlu0 %1555
    %v1557 = vsel %vm644, %v1531, -inf
    %1558 = vmax.xlane.f32.xlu0 %v1557
    %v1559 = vpop.xlane.xlu0 %1558
    %v1560 = vsel %vm644, %v1534, -inf
    %1561 = vmax.xlane.f32.xlu0 %v1560
    %v1562 = vpop.xlane.xlu0 %1561
    %v1563 = vsel %vm644, %v1539, -inf
    %1564 = vmax.xlane.f32.xlu0 %v1563
    %v1565 = vpop.xlane.xlu0 %1564
    %v1566 = vsel %vm644, %v1542, -inf
    %1567 = vmax.xlane.f32.xlu0 %v1566
    %v1568 = vpop.xlane.xlu0 %1567
    %v1569 = vsub.f32 %v1515, %v1547
    %v1570 = vsub.f32 %v1518, %v1550
    %v1571 = vsub.f32 %v1523, %v1553
    %v1572 = vsub.f32 %v1526, %v1556
    %v1573 = vsub.f32 %v1531, %v1559
    %v1574 = vsub.f32 %v1534, %v1562
    %v1575 = vsub.f32 %v1539, %v1565
    %v1576 = vsub.f32 %v1542, %v1568
    %v1577 = vmul.f32 %v1569, 1.442695
    %v1578 = vpow.pop %v1577
    %v1579 = vmul.f32 %v1570, 1.442695
    %v1580 = vpow.pop %v1579
    %v1581 = vmul.f32 %v1571, 1.442695
    %v1582 = vpow.pop %v1581
    %v1583 = vmul.f32 %v1572, 1.442695
    %v1584 = vpow.pop %v1583
    %v1585 = vmul.f32 %v1573, 1.442695
    %v1586 = vpow.pop %v1585
    %v1587 = vmul.f32 %v1574, 1.442695
    %v1588 = vpow.pop %v1587
    %v1589 = vmul.f32 %v1575, 1.442695
    %v1590 = vpow.pop %v1589
    %v1591 = vmul.f32 %v1576, 1.442695
    %v1592 = vpow.pop %v1591
    %v1593 = vsel %vm644, %v1578, 0.0
    %1594 = vadd.xlane.f32.xlu0 %v1593
    %v1595 = vpop.xlane.xlu0 %1594
    %v1596 = vsel %vm644, %v1580, 0.0
    %1597 = vadd.xlane.f32.xlu0 %v1596
    %v1598 = vpop.xlane.xlu0 %1597
    %v1599 = vsel %vm644, %v1582, 0.0
    %1600 = vadd.xlane.f32.xlu0 %v1599
    %v1601 = vpop.xlane.xlu0 %1600
    %v1602 = vsel %vm644, %v1584, 0.0
    %1603 = vadd.xlane.f32.xlu0 %v1602
    %v1604 = vpop.xlane.xlu0 %1603
    %v1605 = vsel %vm644, %v1586, 0.0
    %1606 = vadd.xlane.f32.xlu0 %v1605
    %v1607 = vpop.xlane.xlu0 %1606
    %v1608 = vsel %vm644, %v1588, 0.0
    %1609 = vadd.xlane.f32.xlu0 %v1608
    %v1610 = vpop.xlane.xlu0 %1609
    %v1611 = vsel %vm644, %v1590, 0.0
    %1612 = vadd.xlane.f32.xlu0 %v1611
    %v1613 = vpop.xlane.xlu0 %1612
    %v1614 = vsel %vm644, %v1592, 0.0
    %1615 = vadd.xlane.f32.xlu0 %v1614
    %v1616 = vpop.xlane.xlu0 %1615
    %v1617 = vrcp.pop %v1595
    %v1618 = vrcp.pop %v1598
    %v1619 = vrcp.pop %v1601
    %v1620 = vrcp.pop %v1604
    %v1621 = vrcp.pop %v1607
    %v1622 = vrcp.pop %v1610
    %v1623 = vrcp.pop %v1613
    %v1624 = vrcp.pop %v1616
    %v1625 = vmul.f32 %v1578, %v1617
    %v1626 = vmul.f32 %v1580, %v1618
    %v1627 = vmul.f32 %v1582, %v1619
    %v1628 = vmul.f32 %v1584, %v1620
    %v1629 = vmul.f32 %v1586, %v1621
    %v1630 = vmul.f32 %v1588, %v1622
    %v1631 = vmul.f32 %v1590, %v1623
    %v1632 = vmul.f32 %v1592, %v1624
    %v1633 = vpack.c.bf16 %v1626, %v1625
    %v1634 = vpack.c.bf16 %v1628, %v1627
    %v1635 = vpack.c.bf16 %v1630, %v1629
    %v1636 = vpack.c.bf16 %v1632, %v1631
    %v1638 = vsel %vm644, %v1633, 0
    %v1641 = vsel %vm644, %v1634, 0
    %v1644 = vsel %vm644, %v1635, 0
    %v1647 = vsel %vm644, %v1636, 0
    %1649 = vmatprep.subr.bf16.mxu0 0
    %1650 = vmatpush1.bf16.msra.mxu0 %v1452
    %1651 = vmatprep.subr.bf16.mxu0 0
    %1652 = vmatpush1.bf16.msra.mxu0 %v1453
    %1653 = vmatprep.subr.bf16.mxu0 0
    %1654 = vmatpush1.bf16.msra.mxu0 %v1454
    %1655 = vmatprep.subr.bf16.mxu0 0
    %1656 = vmatpush1.bf16.msra.mxu0 %v1455
    %1657 = vmatprep.subr.bf16.mxu0 0
    %1658 = vmatpush1.bf16.msra.mxu0 0
    %1659 = vmatprep.subr.bf16.mxu0 0
    %1660 = vmatpush1.bf16.msra.mxu0 0
    %1661 = vmatprep.subr.bf16.mxu0 0
    %1662 = vmatpush1.bf16.msra.mxu0 0
    %1663 = vmatprep.subr.bf16.mxu0 0
    %1664 = vmatpush1.bf16.msra.mxu0 0
    %1665 = vmatprep.subr.bf16.mxu0 0
    %1666 = vmatpush1.bf16.msra.mxu0 0
    %1667 = vmatprep.subr.bf16.mxu0 0
    %1668 = vmatpush1.bf16.msra.mxu0 0
    %1669 = vmatprep.subr.bf16.mxu0 0
    %1670 = vmatpush1.bf16.msra.mxu0 0
    %1671 = vmatprep.subr.bf16.mxu0 0
    %1672 = vmatpush1.bf16.msra.mxu0 0
    %1673 = vmatprep.subr.bf16.mxu0 0
    %1674 = vmatpush1.bf16.msra.mxu0 0
    %1675 = vmatprep.subr.bf16.mxu0 0
    %1676 = vmatpush1.bf16.msra.mxu0 0
    %1677 = vmatprep.subr.bf16.mxu0 0
    %1678 = vmatpush1.bf16.msra.mxu0 0
    %1679 = vmatprep.subr.bf16.mxu0 0
    %1680 = vmatpush1.bf16.msra.mxu0 0
    %1681 = vmatprep.mubr.bf16.mxu0 0
    %1682 = vmatmul.mubr.bf16.gmra.mrb[0].mxu0 %v1638
    %v1683 = vpop.f32.mrb[0].mxu0
    %v1684 = vadd.f32 0.0, %v1683
    %v1685 = vpop.f32.mrb[0].mxu0
    %v1686 = vpop.f32.mrb[0].mxu0
    %v1687 = vadd.f32 0.0, %v1686
    %v1688 = vpop.f32.mrb[0].mxu0
    %1689 = vmatprep.mubr.bf16.mxu0 0
    %1690 = vmatmul.mubr.bf16.gmra.mrb[0].mxu0 %v1641
    %v1691 = vpop.f32.mrb[0].mxu0
    %v1692 = vadd.f32 0.0, %v1691
    %v1693 = vpop.f32.mrb[0].mxu0
    %v1694 = vpop.f32.mrb[0].mxu0
    %v1695 = vadd.f32 0.0, %v1694
    %v1696 = vpop.f32.mrb[0].mxu0
    %1697 = vmatprep.mubr.bf16.mxu0 0
    %1698 = vmatmul.mubr.bf16.gmra.mrb[0].mxu0 %v1644
    %v1699 = vpop.f32.mrb[0].mxu0
    %v1700 = vadd.f32 0.0, %v1699
    %v1701 = vpop.f32.mrb[0].mxu0
    %v1702 = vpop.f32.mrb[0].mxu0
    %v1703 = vadd.f32 0.0, %v1702
    %v1704 = vpop.f32.mrb[0].mxu0
    %1705 = vmatprep.mubr.bf16.mxu0 0
    %1706 = vmatmul.mubr.bf16.gmra.mrb[0].mxu0 %v1647
    %v1707 = vpop.f32.mrb[0].mxu0
    %v1708 = vadd.f32 0.0, %v1707
    %v1709 = vpop.f32.mrb[0].mxu0
    %v1710 = vpop.f32.mrb[0].mxu0
    %v1711 = vadd.f32 0.0, %v1710
    %v1712 = vpop.f32.mrb[0].mxu0
    %1713 = vdwg.mxu0
    %1715 = vrot.lane.b32.xlu0 %v1687, 8
    %v1716 = vpop.permute.xlu0 %1715
    %1719 = vrot.lane.b32.xlu0 %v1692, 16
    %v1720 = vpop.permute.xlu0 %1719
    %1723 = vrot.lane.b32.xlu0 %v1695, 24
    %v1724 = vpop.permute.xlu0 %1723
    %v1726 = vsel %vm554, %v1684, %v1716
    %v1727 = vsel %vm827, %v1726, %v1720
    %v1728 = vsel %vm829, %v1727, %v1724
    %1730 = vrot.lane.b32.xlu0 %v1703, 8
    %v1731 = vpop.permute.xlu0 %1730
    %1734 = vrot.lane.b32.xlu0 %v1708, 16
    %v1735 = vpop.permute.xlu0 %1734
    %1738 = vrot.lane.b32.xlu0 %v1711, 24
    %v1739 = vpop.permute.xlu0 %1738
    %v1741 = vsel %vm554, %v1700, %v1731
    %v1742 = vsel %vm827, %v1741, %v1735
    %v1743 = vsel %vm829, %v1742, %v1739
    %v1744 = vpack.c.bf16 %v1743, %v1728
    %s1745 = scalar_lea.vmem %s12, 16
    %v1746 = vld [vmem:[%s1745] sm:$0xf]
    %v1747 = vld [vmem:[%s1745 + $0x4] sm:$0xf]
    %v1748 = vld [vmem:[%s1745 + $0x8] sm:$0xf]
    %v1749 = vld [vmem:[%s1745 + $0xc] sm:$0xf]
    %v1750 = vld [vmem:[#allocation17 + $0x1] sm:$0x1]
    %v1751 = vlaneseq
    %v1752 = vshrl.u32 %v1751, 7
    %v1753 = vsub.s32 0, %v1752
    %v1754 = vrot.slane %v1750, %v1753
    %v1759 = vunpack.c.l.b16 %v1746
    %v1760 = vunpack.c.l.b16 %v1747
    %v1761 = vunpack.c.l.b16 %v1748
    %v1762 = vunpack.c.l.b16 %v1749
    %v1763 = vpack.c.b16 %v1760, %v1759
    %v1764 = vpack.c.b16 %v1762, %v1761
    %v1768 = vsel %vm250, %v1744, 0
    %1770 = vmatprep.subr.bf16.mxu0 0
    %1771 = vmatpush1.bf16.msra.mxu0 %v1763
    %1772 = vmatprep.subr.bf16.mxu0 0
    %1773 = vmatpush1.bf16.msra.mxu0 %v1764
    %1774 = vmatprep.subr.bf16.mxu0 0
    %1775 = vmatpush1.bf16.msra.mxu0 0
    %1776 = vmatprep.subr.bf16.mxu0 0
    %1777 = vmatpush1.bf16.msra.mxu0 0
    %1778 = vmatprep.subr.bf16.mxu0 0
    %1779 = vmatpush1.bf16.msra.mxu0 0
    %1780 = vmatprep.subr.bf16.mxu0 0
    %1781 = vmatpush1.bf16.msra.mxu0 0
    %1782 = vmatprep.subr.bf16.mxu0 0
    %1783 = vmatpush1.bf16.msra.mxu0 0
    %1784 = vmatprep.subr.bf16.mxu0 0
    %1785 = vmatpush1.bf16.msra.mxu0 0
    %1786 = vmatprep.subr.bf16.mxu0 0
    %1787 = vmatpush1.bf16.msra.mxu0 0
    %1788 = vmatprep.subr.bf16.mxu0 0
    %1789 = vmatpush1.bf16.msra.mxu0 0
    %1790 = vmatprep.subr.bf16.mxu0 0
    %1791 = vmatpush1.bf16.msra.mxu0 0
    %1792 = vmatprep.subr.bf16.mxu0 0
    %1793 = vmatpush1.bf16.msra.mxu0 0
    %1794 = vmatprep.subr.bf16.mxu0 0
    %1795 = vmatpush1.bf16.msra.mxu0 0
    %1796 = vmatprep.subr.bf16.mxu0 0
    %1797 = vmatpush1.bf16.msra.mxu0 0
    %1798 = vmatprep.subr.bf16.mxu0 0
    %1799 = vmatpush1.bf16.msra.mxu0 0
    %1800 = vmatprep.subr.bf16.mxu0 0
    %1801 = vmatpush1.bf16.msra.mxu0 0
    %1802 = vmatprep.mubr.bf16.mxu0 0
    %1803 = vmatmul.mubr.bf16.gmra.mrb[0].mxu0 %v1768
    %v1804 = vpop.f32.mrb[0].mxu0
    %v1805 = vadd.f32 %v1754, %v1804
    %v1806 = vpop.f32.mrb[0].mxu0
    %v1807 = vpop.f32.mrb[0].mxu0
    %v1808 = vadd.f32 %v1754, %v1807
    %v1809 = vpop.f32.mrb[0].mxu0
    %1810 = vdwg.mxu0
    %v1811 = vadd.f32 %v1147, %v1805
    %v1812 = vadd.f32 %v1148, %v1808
    %v1813 = vld [vmem:[#allocation19 + $0x1] sm:$0x1]
    %v1814 = vld [vmem:[#allocation20 + $0x1] sm:$0x1]
    %v1815 = vsel %vm250, %v1811, 0.0
    %1816 = vadd.xlane.f32.xlu0 %v1815
    %v1817 = vpop.xlane.xlu0 %1816
    %v1818 = vsel %vm250, %v1812, 0.0
    %1819 = vadd.xlane.f32.xlu0 %v1818
    %v1820 = vpop.xlane.xlu0 %1819
    %v1821 = vmul.f32 %v1817, %v257
    %v1822 = vmul.f32 %v1820, %v257
    %v1823 = vsub.f32 %v1811, %v1821
    %v1824 = vsub.f32 %v1812, %v1822
    %v1825 = vmul.f32 %v1823, %v1823
    %v1826 = vmul.f32 %v1824, %v1824
    %v1827 = vsel %vm250, %v1825, 0.0
    %1828 = vadd.xlane.f32.xlu0 %v1827
    %v1829 = vpop.xlane.xlu0 %1828
    %v1830 = vsel %vm250, %v1826, 0.0
    %1831 = vadd.xlane.f32.xlu0 %v1830
    %v1832 = vpop.xlane.xlu0 %1831
    %v1833 = vmul.f32 %v1829, %v257
    %v1834 = vmul.f32 %v1832, %v257
    %v1835 = vadd.f32 %v1833, 1e-05
    %v1836 = vadd.f32 %v1834, 1e-05
    %v1837 = vrsqrt.pop %v1835
    %v1838 = vrsqrt.pop %v1836
    %v1839 = vmul.f32 %v1823, %v1837
    %v1840 = vmul.f32 %v1824, %v1838
    %v1841 = vlaneseq
    %v1842 = vshrl.u32 %v1841, 7
    %v1843 = vsub.s32 0, %v1842
    %v1844 = vrot.slane %v1813, %v1843
    %v1845 = vmul.f32 %v1839, %v1844
    %v1846 = vmul.f32 %v1840, %v1844
    %v1847 = vlaneseq
    %v1848 = vshrl.u32 %v1847, 7
    %v1849 = vsub.s32 0, %v1848
    %v1850 = vrot.slane %v1814, %v1849
    %v1851 = vadd.f32 %v1845, %v1850
    %v1852 = vadd.f32 %v1846, %v1850
    %v1853 = vpack.c.bf16 %v1852, %v1851
    %s1854 = scalar_lea.vmem [#allocation22], 16
    %v1855 = vld [vmem:[%s1854] sm:$0xf]
    %v1856 = vld [vmem:[%s1854 + $0x4] sm:$0xf]
    %v1857 = vld [vmem:[%s1854 + $0x8] sm:$0xf]
    %v1858 = vld [vmem:[%s1854 + $0xc] sm:$0xf]
    %v1859 = vld [vmem:[#allocation23 + $0x1] sm:$0x1]
    %v1860 = vlaneseq
    %v1861 = vshrl.u32 %v1860, 7
    %v1862 = vsub.s32 0, %v1861
    %v1863 = vrot.slane %v1859, %v1862
    %v1868 = vunpack.c.l.b16 %v1855
    %v1869 = vunpack.c.l.b16 %v1856
    %v1870 = vunpack.c.l.b16 %v1857
    %v1871 = vunpack.c.l.b16 %v1858
    %v1872 = vpack.c.b16 %v1869, %v1868
    %v1873 = vpack.c.b16 %v1871, %v1870
    %v1877 = vsel %vm250, %v1853, 0
    %1879 = vmatprep.subr.bf16.mxu0 0
    %1880 = vmatpush1.bf16.msra.mxu0 %v1872
    %1881 = vmatprep.subr.bf16.mxu0 0
    %1882 = vmatpush1.bf16.msra.mxu0 %v1873
    %1883 = vmatprep.subr.bf16.mxu0 0
    %1884 = vmatpush1.bf16.msra.mxu0 0
    %1885 = vmatprep.subr.bf16.mxu0 0
    %1886 = vmatpush1.bf16.msra.mxu0 0
    %1887 = vmatprep.subr.bf16.mxu0 0
    %1888 = vmatpush1.bf16.msra.mxu0 0
    %1889 = vmatprep.subr.bf16.mxu0 0
    %1890 = vmatpush1.bf16.msra.mxu0 0
    %1891 = vmatprep.subr.bf16.mxu0 0
    %1892 = vmatpush1.bf16.msra.mxu0 0
    %1893 = vmatprep.subr.bf16.mxu0 0
    %1894 = vmatpush1.bf16.msra.mxu0 0
    %1895 = vmatprep.subr.bf16.mxu0 0
    %1896 = vmatpush1.bf16.msra.mxu0 0
    %1897 = vmatprep.subr.bf16.mxu0 0
    %1898 = vmatpush1.bf16.msra.mxu0 0
    %1899 = vmatprep.subr.bf16.mxu0 0
    %1900 = vmatpush1.bf16.msra.mxu0 0
    %1901 = vmatprep.subr.bf16.mxu0 0
    %1902 = vmatpush1.bf16.msra.mxu0 0
    %1903 = vmatprep.subr.bf16.mxu0 0
    %1904 = vmatpush1.bf16.msra.mxu0 0
    %1905 = vmatprep.subr.bf16.mxu0 0
    %1906 = vmatpush1.bf16.msra.mxu0 0
    %1907 = vmatprep.subr.bf16.mxu0 0
    %1908 = vmatpush1.bf16.msra.mxu0 0
    %1909 = vmatprep.subr.bf16.mxu0 0
    %1910 = vmatpush1.bf16.msra.mxu0 0
    %1911 = vmatprep.mubr.bf16.mxu0 0
    %1912 = vmatmul.mubr.bf16.gmra.mrb[0].mxu0 %v1877
    %v1913 = vpop.f32.mrb[0].mxu0
    %v1914 = vadd.f32 %v1863, %v1913
    %v1915 = vpop.f32.mrb[0].mxu0
    %v1916 = vpop.f32.mrb[0].mxu0
    %v1917 = vadd.f32 %v1863, %v1916
    %v1918 = vpop.f32.mrb[0].mxu0
    %1919 = vdwg.mxu0
    %v1920 = vmul.f32 %v1914, 1.702
    %v1921 = vmul.f32 %v1917, 1.702
    %v1922 = vxor.u32 %v1920, 2147483648
    %v1923 = vxor.u32 %v1921, 2147483648
    %v1924 = vmul.f32 %v1922, 1.442695
    %v1925 = vpow.pop %v1924
    %v1926 = vmul.f32 %v1923, 1.442695
    %v1927 = vpow.pop %v1926
    %v1928 = vadd.f32 %v1925, 1.0
    %v1929 = vadd.f32 %v1927, 1.0
    %v1930 = vrcp.pop %v1928
    %v1931 = vmul.f32 1.0, %v1930
    %v1932 = vrcp.pop %v1929
    %v1933 = vmul.f32 1.0, %v1932
    %v1934 = vmul.f32 %v1914, %v1931
    %v1935 = vmul.f32 %v1917, %v1933
    %v1936 = vpack.c.bf16 %v1935, %v1934
    %s1937 = scalar_lea.vmem %s18, 64
    %v1938 = vld [vmem:[%s1937] sm:$0xf]
    %v1939 = vld [vmem:[%s1937 + $0x4] sm:$0xf]
    %v1940 = vld [vmem:[%s1937 + $0x8] sm:$0xf]
    %v1941 = vld [vmem:[%s1937 + $0xc] sm:$0xf]
    %v1942 = vld [vmem:[%s1937 + $0x10] sm:$0xf]
    %v1943 = vld [vmem:[%s1937 + $0x14] sm:$0xf]
    %v1944 = vld [vmem:[%s1937 + $0x18] sm:$0xf]
    %v1945 = vld [vmem:[%s1937 + $0x1c] sm:$0xf]
    %v1946 = vld [vmem:[%s1937 + $0x20] sm:$0xf]
    %v1947 = vld [vmem:[%s1937 + $0x24] sm:$0xf]
    %v1948 = vld [vmem:[%s1937 + $0x28] sm:$0xf]
    %v1949 = vld [vmem:[%s1937 + $0x2c] sm:$0xf]
    %v1950 = vld [vmem:[%s1937 + $0x30] sm:$0xf]
    %v1951 = vld [vmem:[%s1937 + $0x34] sm:$0xf]
    %v1952 = vld [vmem:[%s1937 + $0x38] sm:$0xf]
    %v1953 = vld [vmem:[%s1937 + $0x3c] sm:$0xf]
    %v1954 = vld [vmem:[%s19 + $0x1] sm:$0x1]
    %v1955 = vlaneseq
    %v1956 = vshrl.u32 %v1955, 7
    %v1957 = vsub.s32 0, %v1956
    %v1958 = vrot.slane %v1954, %v1957
    %v1975 = vunpack.c.l.b16 %v1938
    %v1976 = vunpack.c.l.b16 %v1939
    %v1977 = vunpack.c.l.b16 %v1940
    %v1978 = vunpack.c.l.b16 %v1941
    %v1979 = vunpack.c.l.b16 %v1942
    %v1980 = vunpack.c.l.b16 %v1943
    %v1981 = vunpack.c.l.b16 %v1944
    %v1982 = vunpack.c.l.b16 %v1945
    %v1983 = vunpack.c.l.b16 %v1946
    %v1984 = vunpack.c.l.b16 %v1947
    %v1985 = vunpack.c.l.b16 %v1948
    %v1986 = vunpack.c.l.b16 %v1949
    %v1987 = vunpack.c.l.b16 %v1950
    %v1988 = vunpack.c.l.b16 %v1951
    %v1989 = vunpack.c.l.b16 %v1952
    %v1990 = vunpack.c.l.b16 %v1953
    %v1991 = vpack.c.b16 %v1976, %v1975
    %v1992 = vpack.c.b16 %v1978, %v1977
    %v1993 = vpack.c.b16 %v1980, %v1979
    %v1994 = vpack.c.b16 %v1982, %v1981
    %v1995 = vpack.c.b16 %v1984, %v1983
    %v1996 = vpack.c.b16 %v1986, %v1985
    %v1997 = vpack.c.b16 %v1988, %v1987
    %v1998 = vpack.c.b16 %v1990, %v1989
    %2007 = vmatprep.subr.bf16.mxu0 0
    %2008 = vmatpush1.bf16.msra.mxu0 %v1991
    %2009 = vmatprep.subr.bf16.mxu0 0
    %2010 = vmatpush1.bf16.msra.mxu0 %v1992
    %2011 = vmatprep.subr.bf16.mxu0 0
    %2012 = vmatpush1.bf16.msra.mxu0 %v1993
    %2013 = vmatprep.subr.bf16.mxu0 0
    %2014 = vmatpush1.bf16.msra.mxu0 %v1994
    %2015 = vmatprep.subr.bf16.mxu0 0
    %2016 = vmatpush1.bf16.msra.mxu0 %v1995
    %2017 = vmatprep.subr.bf16.mxu0 0
    %2018 = vmatpush1.bf16.msra.mxu0 %v1996
    %2019 = vmatprep.subr.bf16.mxu0 0
    %2020 = vmatpush1.bf16.msra.mxu0 %v1997
    %2021 = vmatprep.subr.bf16.mxu0 0
    %2022 = vmatpush1.bf16.msra.mxu0 %v1998
    %2023 = vmatprep.subr.bf16.mxu0 0
    %2024 = vmatpush1.bf16.msra.mxu0 0
    %2025 = vmatprep.subr.bf16.mxu0 0
    %2026 = vmatpush1.bf16.msra.mxu0 0
    %2027 = vmatprep.subr.bf16.mxu0 0
    %2028 = vmatpush1.bf16.msra.mxu0 0
    %2029 = vmatprep.subr.bf16.mxu0 0
    %2030 = vmatpush1.bf16.msra.mxu0 0
    %2031 = vmatprep.subr.bf16.mxu0 0
    %2032 = vmatpush1.bf16.msra.mxu0 0
    %2033 = vmatprep.subr.bf16.mxu0 0
    %2034 = vmatpush1.bf16.msra.mxu0 0
    %2035 = vmatprep.subr.bf16.mxu0 0
    %2036 = vmatpush1.bf16.msra.mxu0 0
    %2037 = vmatprep.subr.bf16.mxu0 0
    %2038 = vmatpush1.bf16.msra.mxu0 0
    %2039 = vmatprep.mubr.bf16.mxu0 0
    %2040 = vmatmul.mubr.bf16.gmra.mrb[0].mxu0 %v1936
    %v2041 = vpop.f32.mrb[0].mxu0
    %v2042 = vadd.f32 %v1958, %v2041
    %v2043 = vpop.f32.mrb[0].mxu0
    %v2044 = vpop.f32.mrb[0].mxu0
    %v2045 = vadd.f32 %v1958, %v2044
    %v2046 = vpop.f32.mrb[0].mxu0
    %2047 = vdwg.mxu0
    %v2048 = vadd.f32 %v1811, %v2042
    %v2049 = vadd.f32 %v1812, %v2045
    %v2050 = vld [vmem:[%s20] sm:$0x1]
    %v2051 = vld [vmem:[#allocation25] sm:$0x1]
    %v2052 = vsel %vm250, %v2048, 0.0
    %2053 = vadd.xlane.f32.xlu0 %v2052
    %v2054 = vpop.xlane.xlu0 %2053
    %v2055 = vsel %vm250, %v2049, 0.0
    %2056 = vadd.xlane.f32.xlu0 %v2055
    %v2057 = vpop.xlane.xlu0 %2056
    %v2058 = vmul.f32 %v2054, %v257
    %v2059 = vmul.f32 %v2057, %v257
    %v2060 = vsub.f32 %v2048, %v2058
    %v2061 = vsub.f32 %v2049, %v2059
    %v2062 = vmul.f32 %v2060, %v2060
    %v2063 = vmul.f32 %v2061, %v2061
    %v2064 = vsel %vm250, %v2062, 0.0
    %2065 = vadd.xlane.f32.xlu0 %v2064
    %v2066 = vpop.xlane.xlu0 %2065
    %v2067 = vsel %vm250, %v2063, 0.0
    %2068 = vadd.xlane.f32.xlu0 %v2067
    %v2069 = vpop.xlane.xlu0 %2068
    %v2070 = vmul.f32 %v2066, %v257
    %v2071 = vmul.f32 %v2069, %v257
    %v2072 = vadd.f32 %v2070, 1e-05
    %v2073 = vadd.f32 %v2071, 1e-05
    %v2074 = vrsqrt.pop %v2072
    %v2075 = vrsqrt.pop %v2073
    %v2076 = vmul.f32 %v2060, %v2074
    %v2077 = vmul.f32 %v2061, %v2075
    %v2079 = vlaneseq
    %v2080 = vshrl.u32 %v2079, 7
    %v2081 = vsub.s32 0, %v2080
    %v2082 = vrot.slane %v2050, %v2081
    %v2084 = vmul.f32 %v2076, %v2082
    %v2085 = vmul.f32 %v2077, %v2082
    %v2087 = vlaneseq
    %v2088 = vshrl.u32 %v2087, 7
    %v2089 = vsub.s32 0, %v2088
    %v2090 = vrot.slane %v2051, %v2089
    %v2092 = vadd.f32 %v2084, %v2090
    %v2093 = vadd.f32 %v2085, %v2090
    %2094 = vst.msk [vmem:[#allocation2] sm:$0xff] %vm250, %v2092
    %2095 = vst.msk [vmem:[#allocation2 + $0x8] sm:$0xff] %vm250, %v2093
    %s2096 = sld [smem:[#allocation4]]
    %s2097 = scalar_lea.vmem [#allocation2], %s2096
    %v2098 = vld [vmem:[%s2097] sm:$0x1]
    %s2099 = sld [smem:[#allocation4 + $0x1]]
    %s2100 = sadd.s32 %s2099, 8
    %s2101 = scalar_lea.vmem [#allocation2], %s2100
    %v2102 = vld [vmem:[%s2101] sm:$0x1]
    %v2104 = vrot.slane %v2102, 7
    %vm2106 = vcmask 1040384
    %v2107 = vsel %vm2106, %v2098, %v2104
    %v2108 = vpack.c.bf16 %v2107, %v2107
    %v2109 = vld [vmem:[%s22] sm:$0xf]
    %v2110 = vld [vmem:[%s22 + $0x4] sm:$0xf]
    %v2111 = vld [vmem:[%s22 + $0x8] sm:$0xf]
    %v2112 = vld [vmem:[%s22 + $0xc] sm:$0xf]
    %v2117 = vunpack.c.l.b16 %v2109
    %v2118 = vunpack.c.l.b16 %v2110
    %v2119 = vunpack.c.l.b16 %v2111
    %v2120 = vunpack.c.l.b16 %v2112
    %v2121 = vpack.c.b16 %v2118, %v2117
    %v2122 = vpack.c.b16 %v2120, %v2119
    %v2126 = vsel %vm250, %v2108, 0
    %2128 = vmatprep.subr.bf16.mxu0 0
    %2129 = vmatpush1.bf16.msra.mxu0 %v2121
    %2130 = vmatprep.subr.bf16.mxu0 0
    %2131 = vmatpush1.bf16.msra.mxu0 %v2122
    %2132 = vmatprep.subr.bf16.mxu0 0
    %2133 = vmatpush1.bf16.msra.mxu0 0
    %2134 = vmatprep.subr.bf16.mxu0 0
    %2135 = vmatpush1.bf16.msra.mxu0 0
    %2136 = vmatprep.subr.bf16.mxu0 0
    %2137 = vmatpush1.bf16.msra.mxu0 0
    %2138 = vmatprep.subr.bf16.mxu0 0
    %2139 = vmatpush1.bf16.msra.mxu0 0
    %2140 = vmatprep.subr.bf16.mxu0 0
    %2141 = vmatpush1.bf16.msra.mxu0 0
    %2142 = vmatprep.subr.bf16.mxu0 0
    %2143 = vmatpush1.bf16.msra.mxu0 0
    %2144 = vmatprep.subr.bf16.mxu0 0
    %2145 = vmatpush1.bf16.msra.mxu0 0
    %2146 = vmatprep.subr.bf16.mxu0 0
    %2147 = vmatpush1.bf16.msra.mxu0 0
    %2148 = vmatprep.subr.bf16.mxu0 0
    %2149 = vmatpush1.bf16.msra.mxu0 0
    %2150 = vmatprep.subr.bf16.mxu0 0
    %2151 = vmatpush1.bf16.msra.mxu0 0
    %2152 = vmatprep.subr.bf16.mxu0 0
    %2153 = vmatpush1.bf16.msra.mxu0 0
    %2154 = vmatprep.subr.bf16.mxu0 0
    %2155 = vmatpush1.bf16.msra.mxu0 0
    %2156 = vmatprep.subr.bf16.mxu0 0
    %2157 = vmatpush1.bf16.msra.mxu0 0
    %2158 = vmatprep.subr.bf16.mxu0 0
    %2159 = vmatpush1.bf16.msra.mxu0 0
    %2160 = vmatprep.mubr.bf16.mxu0 0
    %2161 = vmatmul.mubr.bf16.gmra.mrb[0].mxu0 %v2126
    %v2162 = vpop.f32.mrb[0].mxu0
    %v2163 = vadd.f32 0.0, %v2162
    %v2164 = vpop.f32.mrb[0].mxu0
    %v2165 = vpop.f32.mrb[0].mxu0
    %v2166 = vpop.f32.mrb[0].mxu0
    %2167 = vdwg.mxu0
    %2168 = vst [vmem:[#allocation26] sm:$0x3] %v2163
    // Predicated region
    $region142: #{tpu_custom_call.1} parent=1 // pred_check
      _
    $region143: #{tpu_custom_call.1} parent=1 // pred_check_branch
      %2170 = sbr.rel (0) target = $region145
    $region144: #{tpu_custom_call.1} parent=1 // pred_region
      %s2172 = ssub.s32 32, 32
      %2173 = vsyncadd [#allocation7], %s2172
      %s2175 = sshll.u32 [#allocation26], 4
      %s2176 = int_to_ptr.vmem [resolvable:$true] %s2175
      %2178 = dma.vmem_to_hbm [thread:$0]  %s2176, 32, %s23, [#allocation7]
    $region145: #{tpu_custom_call.1} parent=1 // pred_fallthru
      _
    // Predicated region
    $region146: #{tpu_custom_call.1} parent=1 // pred_check
      _
    $region147: #{tpu_custom_call.1} parent=1 // pred_check_branch
      %2180 = sbr.rel (0) target = $region149
    $region148: #{tpu_custom_call.1} parent=1 // pred_region
      %2181 = dma.done [#allocation7], 32
    $region149: #{tpu_custom_call.1} parent=1 // pred_fallthru
      _
    %2182 = vsyncpa [#allocation6], 1
    %2183 = vsyncpa [#allocation9], 1
    %2184 = vsyncpa [#allocation12], 1
    %2185 = vsyncpa [#allocation15], 1
    %2186 = vsyncpa [#allocation18], 1
    %2187 = vsyncpa [#allocation21], 1
    %2188 = vsyncpa [#allocation24], 1
    %2189 = vsyncpa [#allocation7], 1

</llo_original>
